<compile_context>
chip_gen: v7x
topology: tpu7x:2x2x1
jax: 0.10.0
libtpu: 0.0.40
codegen_flags: <defaults>
</compile_context>

<pallas_src>
import functools
import numpy as np

import jax
import jax.numpy as jnp
from jax.experimental import pallas as pl
from jax.experimental.pallas import tpu as pltpu


def _ceil_to(x, m):
    return ((x + m - 1) // m) * m


def _pick_tile(m, target):
    """Largest multiple of 8 <= target that divides m (falls back to padding)."""
    cap = max(8, min(_ceil_to(target, 8), _ceil_to(m, 8)))
    t = (cap // 8) * 8
    while t >= 8:
        if m % t == 0:
            return t
        t -= 8
    return cap


# ----------------------------------------------------------------------------
# Pallas kernels
# ----------------------------------------------------------------------------

def _linear_kernel(x_ref, w_ref, b_ref, o_ref, *, act):
    y = jnp.dot(x_ref[...], w_ref[...], preferred_element_type=jnp.float32)
    y = y + b_ref[...]
    if act == "gelu":
        c = 0.7978845608028654
        y = 0.5 * y * (1.0 + jnp.tanh(c * (y + 0.044715 * y * y * y)))
    elif act == "lrelu":
        y = jnp.where(y >= 0, y, 0.01 * y)
    o_ref[...] = y.astype(o_ref.dtype)


def fused_linear(x2, w_kn, bias=None, act=None, out_dtype=jnp.bfloat16):
    """y = act(x2 @ w_kn + bias). x2: (M, K); w_kn: (K, N). bf16 in, f32 acc."""
    x2 = x2.astype(jnp.bfloat16)
    w_kn = jnp.asarray(w_kn).astype(jnp.bfloat16)
    M, K = x2.shape
    N = w_kn.shape[1]
    b = (jnp.zeros((1, N), jnp.float32) if bias is None
         else bias.reshape(1, N).astype(jnp.float32))
    target = max(128, min(2048, (4 * 1024 * 1024) // max(1, 2 * (K + N))))
    tm = _pick_tile(M, target)
    Mp = _ceil_to(M, tm)
    xw = jnp.pad(x2, ((0, Mp - M), (0, 0))) if Mp != M else x2
    out = pl.pallas_call(
        functools.partial(_linear_kernel, act=act),
        out_shape=jax.ShapeDtypeStruct((Mp, N), out_dtype),
        grid=(Mp // tm,),
        in_specs=[pl.BlockSpec((tm, K), lambda i: (i, 0)),
                  pl.BlockSpec((K, N), lambda i: (0, 0)),
                  pl.BlockSpec((1, N), lambda i: (0, 0))],
        out_specs=pl.BlockSpec((tm, N), lambda i: (i, 0)),
        compiler_params=pltpu.CompilerParams(
            dimension_semantics=("parallel",)),
    )(xw, w_kn, b)
    return out[:M] if Mp != M else out


def _layernorm_kernel(x_ref, g_ref, b_ref, o_ref, *, eps):
    x = x_ref[...].astype(jnp.float32)
    mu = jnp.mean(x, axis=-1, keepdims=True)
    var = jnp.mean((x - mu) ** 2, axis=-1, keepdims=True)
    y = (x - mu) * jax.lax.rsqrt(var + eps) * g_ref[...] + b_ref[...]
    o_ref[...] = y.astype(o_ref.dtype)


def layernorm(x, gamma, beta, eps=1e-5):
    """LayerNorm over the last axis (channels); bf16 activations, f32 math."""
    shape = x.shape
    C = shape[-1]
    x2 = x.reshape(-1, C).astype(jnp.bfloat16)
    M = x2.shape[0]
    target = max(256, min(4096, (4 * 1024 * 1024) // max(1, 8 * C)))
    tm = _pick_tile(M, target)
    Mp = _ceil_to(M, tm)
    if Mp != M:
        x2 = jnp.pad(x2, ((0, Mp - M), (0, 0)))
    out = pl.pallas_call(
        functools.partial(_layernorm_kernel, eps=eps),
        out_shape=jax.ShapeDtypeStruct((Mp, C), jnp.bfloat16),
        grid=(Mp // tm,),
        in_specs=[pl.BlockSpec((tm, C), lambda i: (i, 0)),
                  pl.BlockSpec((1, C), lambda i: (0, 0)),
                  pl.BlockSpec((1, C), lambda i: (0, 0))],
        out_specs=pl.BlockSpec((tm, C), lambda i: (i, 0)),
        compiler_params=pltpu.CompilerParams(
            dimension_semantics=("parallel",)),
    )(x2, gamma.reshape(1, C).astype(jnp.float32),
      beta.reshape(1, C).astype(jnp.float32))
    out = out[:M] if Mp != M else out
    return out.reshape(shape)


def _in_stats_kernel(x_ref, s1_ref, s2_ref):
    @pl.when(pl.program_id(1) == 0)
    def _():
        s1_ref[...] = jnp.zeros_like(s1_ref)
        s2_ref[...] = jnp.zeros_like(s2_ref)
    x = x_ref[...].astype(jnp.float32)
    s1_ref[...] += jnp.sum(x, axis=1, keepdims=True)
    s2_ref[...] += jnp.sum(x * x, axis=1, keepdims=True)


def _in_apply_kernel(x_ref, mu_ref, inv_ref, *rest, act, add_res):
    o_ref = rest[-1]
    y = (x_ref[...].astype(jnp.float32) - mu_ref[...]) * inv_ref[...]
    if add_res:
        y = y + rest[0][...].astype(jnp.float32)
    if act:
        y = jnp.where(y >= 0, y, 0.01 * y)
    o_ref[...] = y.astype(o_ref.dtype)


def _finalize_stats(s1, s2, count, eps=1e-5):
    mean = s1 / count
    var = jnp.maximum(s2 / count - mean * mean, 0.0)
    return mean, jax.lax.rsqrt(var + eps)


def instance_norm_stats(x, eps=1e-5):
    """Per-(batch,channel) mean / rsqrt(var) for NDHWC x (fallback path)."""
    B, D, H, W, C = x.shape
    S = D * H * W
    x2 = x.reshape(B, S, C)
    ts = _pick_tile(S, 4096)
    Sp = _ceil_to(S, ts)
    if Sp != S:
        x2 = jnp.pad(x2, ((0, 0), (0, Sp - S), (0, 0)))
    s1, s2 = pl.pallas_call(
        _in_stats_kernel,
        out_shape=(jax.ShapeDtypeStruct((B, 1, C), jnp.float32),
                   jax.ShapeDtypeStruct((B, 1, C), jnp.float32)),
        grid=(B, Sp // ts),
        in_specs=[pl.BlockSpec((1, ts, C), lambda b, s: (b, s, 0))],
        out_specs=(pl.BlockSpec((1, 1, C), lambda b, s: (b, 0, 0)),
                   pl.BlockSpec((1, 1, C), lambda b, s: (b, 0, 0))),
        compiler_params=pltpu.CompilerParams(
            dimension_semantics=("parallel", "arbitrary")),
    )(x2)
    return _finalize_stats(s1, s2, S, eps)


def instance_norm_apply(x, mean, inv, act, residual=None):
    """Normalize + optional residual add + LeakyReLU(0.01), fused, bf16 I/O."""
    B, D, H, W, C = x.shape
    S = D * H * W
    x2 = x.reshape(B, S, C).astype(jnp.bfloat16)
    target = max(256, min(4096, (4 * 1024 * 1024) // max(1, 8 * C)))
    ts = _pick_tile(S, target)
    Sp = _ceil_to(S, ts)
    if Sp != S:
        x2 = jnp.pad(x2, ((0, 0), (0, Sp - S), (0, 0)))
    ins = [x2, mean.astype(jnp.float32), inv.astype(jnp.float32)]
    in_specs = [pl.BlockSpec((1, ts, C), lambda b, s: (b, s, 0)),
                pl.BlockSpec((1, 1, C), lambda b, s: (b, 0, 0)),
                pl.BlockSpec((1, 1, C), lambda b, s: (b, 0, 0))]
    add_res = residual is not None
    if add_res:
        r2 = residual.reshape(B, S, C).astype(jnp.bfloat16)
        if Sp != S:
            r2 = jnp.pad(r2, ((0, 0), (0, Sp - S), (0, 0)))
        ins.append(r2)
        in_specs.append(pl.BlockSpec((1, ts, C), lambda b, s: (b, s, 0)))
    out = pl.pallas_call(
        functools.partial(_in_apply_kernel, act=act, add_res=add_res),
        out_shape=jax.ShapeDtypeStruct((B, Sp, C), jnp.bfloat16),
        grid=(B, Sp // ts),
        in_specs=in_specs,
        out_specs=pl.BlockSpec((1, ts, C), lambda b, s: (b, s, 0)),
        compiler_params=pltpu.CompilerParams(
            dimension_semantics=("parallel", "parallel")),
    )(*ins)
    out = out[:, :S] if Sp != S else out
    return out.reshape(B, D, H, W, C)


def _conv3d_kernel(x0_ref, x1_ref, x2_ref, w_ref, o_ref, s1_ref, s2_ref,
                   *, H, W, Cin, Cout):
    d = pl.program_id(1)
    w = w_ref[...]                                     # (3, 9*Cin, Cout) bf16
    acc = jnp.zeros((H * W, Cout), jnp.float32)
    for kd, xr in enumerate((x0_ref, x1_ref, x2_ref)):
        xs = xr[...][0, 0]                             # (H+2, W+2, Cin) bf16
        taps = [xs[kh:kh + H, kw:kw + W, :].reshape(H * W, Cin)
                for kh in range(3) for kw in range(3)]
        col = jnp.concatenate(taps, axis=-1)           # (H*W, 9*Cin)
        acc = acc + jnp.dot(col, w[kd], preferred_element_type=jnp.float32)
    o_ref[...] = acc.reshape(1, 1, H * W, Cout).astype(o_ref.dtype)
    # Fused InstanceNorm statistics (accumulated over the depth grid axis).
    @pl.when(d == 0)
    def _():
        s1_ref[...] = jnp.zeros_like(s1_ref)
        s2_ref[...] = jnp.zeros_like(s2_ref)
    s1_ref[...] += jnp.sum(acc, axis=0).reshape(1, 1, Cout)
    s2_ref[...] += jnp.sum(acc * acc, axis=0).reshape(1, 1, Cout)


def _conv3d_im2col(x, w):
    """Fallback for tiny resolutions / single-channel input."""
    Cout, Cin, k = w.shape[0], w.shape[1], w.shape[2]
    w2 = jnp.transpose(w, (2, 3, 4, 1, 0)).reshape(k * k * k * Cin, Cout)
    pad = k // 2
    B, D, H, W, _ = x.shape
    xp = jnp.pad(x.astype(jnp.bfloat16),
                 ((0, 0), (pad, pad), (pad, pad), (pad, pad), (0, 0)))
    cols = [xp[:, kd:kd + D, kh:kh + H, kw:kw + W, :]
            for kd in range(k) for kh in range(k) for kw in range(k)]
    col = jnp.concatenate(cols, axis=-1)
    y = fused_linear(col.reshape(-1, k * k * k * Cin), w2)
    return y.reshape(B, D, H, W, Cout)


def conv3d_3x3(x, w):
    """3x3x3 'same' conv, stride 1, NDHWC.  Returns (y, (sum, sumsq) | None)."""
    B, D, H, W, Cin = x.shape
    Cout = w.shape[0]
    if (H % 8 != 0) or (W % 8 != 0) or (Cin < 8):
        return _conv3d_im2col(x, w), None
    w2 = jnp.transpose(w, (2, 3, 4, 1, 0)).reshape(3, 9 * Cin, Cout)
    w2 = w2.astype(jnp.bfloat16)
    xp = jnp.pad(x.astype(jnp.bfloat16),
                 ((0, 0), (1, 1), (1, 1), (1, 1), (0, 0)))

    def mk_in_spec(off):
        return pl.BlockSpec((1, 1, H + 2, W + 2, Cin),
                            lambda b, d, off=off: (b, d + off, 0, 0, 0))

    y, s1, s2 = pl.pallas_call(
        functools.partial(_conv3d_kernel, H=H, W=W, Cin=Cin, Cout=Cout),
        out_shape=(jax.ShapeDtypeStruct((B, D, H * W, Cout), jnp.bfloat16),
                   jax.ShapeDtypeStruct((B, 1, Cout), jnp.float32),
                   jax.ShapeDtypeStruct((B, 1, Cout), jnp.float32)),
        grid=(B, D),
        in_specs=[mk_in_spec(0), mk_in_spec(1), mk_in_spec(2),
                  pl.BlockSpec((3, 9 * Cin, Cout), lambda b, d: (0, 0, 0))],
        out_specs=(pl.BlockSpec((1, 1, H * W, Cout), lambda b, d: (b, d, 0, 0)),
                   pl.BlockSpec((1, 1, Cout), lambda b, d: (b, 0, 0)),
                   pl.BlockSpec((1, 1, Cout), lambda b, d: (b, 0, 0))),
        compiler_params=pltpu.CompilerParams(
            dimension_semantics=("parallel", "arbitrary")),
    )(xp, xp, xp, w2)
    return y.reshape(B, D, H, W, Cout), (s1, s2)


def conv3d(x, w):
    if w.shape[2] == 1:
        B, D, H, W, Cin = x.shape
        Cout = w.shape[0]
        y = fused_linear(x.reshape(-1, Cin), w.reshape(Cout, Cin).T)
        return y.reshape(B, D, H, W, Cout), None
    return conv3d_3x3(x, w)


def _window_attn_kernel(q_ref, k_ref, v_ref, rpb_ref, mask_ref, o_ref, *, scale):
    wb, nH, N, dh = q_ref.shape
    q = q_ref[...].reshape(wb * nH, N, dh)
    k = k_ref[...].reshape(wb * nH, N, dh)
    v = v_ref[...].reshape(wb * nH, N, dh)
    s = jnp.einsum("gnd,gmd->gnm", q, k,
                   preferred_element_type=jnp.float32) * scale
    s = s.reshape(wb, nH, N, N) + rpb_ref[...][None] + mask_ref[...][:, None]
    s = s - jnp.max(s, axis=-1, keepdims=True)
    p = jnp.exp(s)
    p = p * pl.reciprocal(jnp.sum(p, axis=-1, keepdims=True), approx=True)
    p = p.reshape(wb * nH, N, N).astype(v.dtype)
    o = jnp.einsum("gnm,gmd->gnd", p, v, preferred_element_type=jnp.float32)
    o_ref[...] = o.reshape(wb, nH, N, dh).astype(o_ref.dtype)


def window_attention_core(q, k, v, rpb, mask, scale):
    """q,k,v: (BW, nH, N, dh); rpb: (nH,N,N); mask: (nW,N,N) or None."""
    BW, nH, N, dh = q.shape
    if mask is None:
        mask = jnp.zeros((1, N, N), jnp.float32)
        nW = BW
    else:
        mask = mask.astype(jnp.float32)
        nW = mask.shape[0]
    cap = max(1, min(16, (2 * 1024 * 1024) // max(1, nH * N * N * 4)))
    wb = 1
    for cand in range(min(cap, max(nW, 1)), 0, -1):
        if nW % cand == 0 and BW % cand == 0:
            wb = cand
            break
    if mask.shape[0] == 1:
        m_spec = pl.BlockSpec((1, N, N), lambda i: (0, 0, 0))
    else:
        nmb = mask.shape[0] // wb
        m_spec = pl.BlockSpec((wb, N, N), lambda i, nmb=nmb: (i % nmb, 0, 0))
    qkv_spec = pl.BlockSpec((wb, nH, N, dh), lambda i: (i, 0, 0, 0))
    return pl.pallas_call(
        functools.partial(_window_attn_kernel, scale=scale),
        out_shape=jax.ShapeDtypeStruct((BW, nH, N, dh), jnp.bfloat16),
        grid=(BW // wb,),
        in_specs=[qkv_spec, qkv_spec, qkv_spec,
                  pl.BlockSpec((nH, N, N), lambda i: (0, 0, 0)),
                  m_spec],
        out_specs=pl.BlockSpec((wb, nH, N, dh), lambda i: (i, 0, 0, 0)),
        compiler_params=pltpu.CompilerParams(
            dimension_semantics=("parallel",)),
    )(q.astype(jnp.bfloat16), k.astype(jnp.bfloat16),
      v.astype(jnp.bfloat16), rpb.astype(jnp.float32), mask)


# ----------------------------------------------------------------------------
# Building blocks (glue around the Pallas kernels)
# ----------------------------------------------------------------------------

def linear(x, w, b=None, act=None):
    """x: (..., Cin); w torch-layout (Cout, Cin). Bias/act fused in-kernel."""
    shape = x.shape
    y = fused_linear(x.reshape(-1, shape[-1]), jnp.transpose(w), b, act)
    return y.reshape(shape[:-1] + (w.shape[0],))


def conv_transpose2x(x, w):
    """ConvTranspose3d, kernel=stride=2, no bias. w torch (Cin, Cout, 2, 2, 2)."""
    B, D, H, W, Cin = x.shape
    Cout = w.shape[1]
    y = fused_linear(x.reshape(-1, Cin), w.reshape(Cin, Cout * 8))
    y = y.reshape(B, D, H, W, Cout, 2, 2, 2)
    y = jnp.transpose(y, (0, 1, 5, 2, 6, 3, 7, 4))
    return y.reshape(B, 2 * D, 2 * H, 2 * W, Cout)


def window_partition(x, ws):
    B, D, H, W, C = x.shape
    x = x.reshape(B, D // ws[0], ws[0], H // ws[1], ws[1], W // ws[2], ws[2], C)
    x = jnp.transpose(x, (0, 1, 3, 5, 2, 4, 6, 7))
    return x.reshape(-1, ws[0] * ws[1] * ws[2], C)


def window_reverse(windows, ws, dims):
    B, D, H, W = dims
    x = windows.reshape(B, D // ws[0], H // ws[1], W // ws[2],
                        ws[0], ws[1], ws[2], -1)
    x = jnp.transpose(x, (0, 1, 4, 2, 5, 3, 6, 7))
    return x.reshape(B, D, H, W, -1)


def get_window_size(x_size, window_size, shift_size=None):
    use_ws = list(window_size)
    use_ss = list(shift_size) if shift_size is not None else None
    for i in range(len(x_size)):
        if x_size[i] <= window_size[i]:
            use_ws[i] = x_size[i]
            if use_ss is not None:
                use_ss[i] = 0
    if use_ss is None:
        return tuple(use_ws)
    return tuple(use_ws), tuple(use_ss)


def compute_mask(dims, ws, ss):
    """Shifted-window attention mask, computed statically in numpy."""
    d, h, w = dims
    img_mask = np.zeros((1, d, h, w, 1), dtype=np.float32)
    cnt = 0
    for ds_ in (slice(-ws[0]), slice(-ws[0], -ss[0]), slice(-ss[0], None)):
        for hs_ in (slice(-ws[1]), slice(-ws[1], -ss[1]), slice(-ss[1], None)):
            for ws_ in (slice(-ws[2]), slice(-ws[2], -ss[2]), slice(-ss[2], None)):
                img_mask[:, ds_, hs_, ws_, :] = cnt
                cnt += 1
    m = img_mask.reshape(1, d // ws[0], ws[0], h // ws[1], ws[1],
                         w // ws[2], ws[2], 1)
    m = m.transpose(0, 1, 3, 5, 2, 4, 6, 7).reshape(-1, ws[0] * ws[1] * ws[2])
    attn_mask = m[:, None, :] - m[:, :, None]
    attn_mask = np.where(attn_mask != 0, -100.0, 0.0).astype(np.float32)
    return jnp.asarray(attn_mask)                             # (nW, N, N)


def rel_pos_index(ws):
    coords = np.stack(np.meshgrid(np.arange(ws[0]), np.arange(ws[1]),
                                  np.arange(ws[2]), indexing="ij"))
    flat = coords.reshape(3, -1)
    rel = flat[:, :, None] - flat[:, None, :]
    rel = rel.transpose(1, 2, 0).astype(np.int64)
    rel[:, :, 0] += ws[0] - 1
    rel[:, :, 1] += ws[1] - 1
    rel[:, :, 2] += ws[2] - 1
    rel[:, :, 0] *= (2 * ws[1] - 1) * (2 * ws[2] - 1)
    rel[:, :, 1] *= (2 * ws[2] - 1)
    return rel.sum(-1).astype(np.int32)                       # (Nw, Nw)


# ----------------------------------------------------------------------------
# Swin transformer pieces
# ----------------------------------------------------------------------------

def window_attention(x_windows, p, num_heads, rp_index, mask):
    BW, N, C = x_windows.shape
    dh = C // num_heads
    qkv = linear(x_windows, p["qkv_w"], p["qkv_b"])            # (BW, N, 3C)
    qkv = qkv.reshape(BW, N, 3, num_heads, dh)
    qkv = jnp.transpose(qkv, (2, 0, 3, 1, 4))                  # (3, BW, nH, N, dh)
    q, k, v = qkv[0], qkv[1], qkv[2]

    idx = np.asarray(rp_index[:N, :N]).reshape(-1)
    rpb = p["rpb_table"][jnp.asarray(idx)].reshape(N, N, num_heads)
    rpb = jnp.transpose(rpb, (2, 0, 1)).astype(jnp.float32)    # (nH, N, N)

    out = window_attention_core(q, k, v, rpb, mask, dh ** -0.5)  # (BW,nH,N,dh)
    out = jnp.transpose(out, (0, 2, 1, 3)).reshape(BW, N, C)
    return linear(out, p["proj_w"], p["proj_b"])


def swin_block(x, p, num_heads, window_cfg, shift_cfg, rp_index, mask_matrix):
    B, D, H, W, C = x.shape
    ws, ss = get_window_size((D, H, W), window_cfg, shift_cfg)

    shortcut = x
    h = layernorm(x, p["norm1_w"], p["norm1_b"])
    if any(s > 0 for s in ss):
        shifted = jnp.roll(h, shift=(-ss[0], -ss[1], -ss[2]), axis=(1, 2, 3))
        attn_mask = mask_matrix
    else:
        shifted, attn_mask = h, None
    xw = window_partition(shifted, ws)
    aw = window_attention(xw, p["attn"], num_heads, rp_index, attn_mask)
    shifted = window_reverse(aw, ws, (B, D, H, W))
    if any(s > 0 for s in ss):
        h = jnp.roll(shifted, shift=(ss[0], ss[1], ss[2]), axis=(1, 2, 3))
    else:
        h = shifted
    x = shortcut + h

    h = layernorm(x, p["norm2_w"], p["norm2_b"])
    h = linear(h, p["mlp_w1"], p["mlp_b1"], act="gelu")
    h = linear(h, p["mlp_w2"], p["mlp_b2"])
    return x + h


def patch_merging(x, p):
    # Concat order is a fixed permutation; equivalent up to weight permutation.
    parts = [x[:, i::2, j::2, k::2, :]
             for i in (0, 1) for j in (0, 1) for k in (0, 1)]
    xc = jnp.concatenate(parts, axis=-1)
    xc = layernorm(xc, p["norm_w"], p["norm_b"])
    return linear(xc, p["red_w"])                              # no bias


def basic_layer(x, p, num_heads, window_cfg, depth=2):
    B, D, H, W, C = x.shape
    half = tuple(w // 2 for w in window_cfg)
    ws, ss = get_window_size((D, H, W), window_cfg, half)
    mask = compute_mask((D, H, W), ws, ss) if any(s > 0 for s in ss) else None
    for j in range(depth):
        shift = (0, 0, 0) if j % 2 == 0 else half
        x = swin_block(x, p["blocks"][j], num_heads, window_cfg, shift,
                       p["rp_index"], mask)
    if p["downsample"] is not None:
        x = patch_merging(x, p["downsample"])
    return x


def swin_vit(x, p, feature_size, window_cfg):
    """x: (B, D, H, W, Cin) channels-last. Returns 5 normalized hidden states."""
    B, D, H, W, Cin = x.shape
    # patch embed: conv k=2, s=2  ==  non-overlapping-patch matmul
    xr = x.reshape(B, D // 2, 2, H // 2, 2, W // 2, 2, Cin)
    xr = jnp.transpose(xr, (0, 1, 3, 5, 2, 4, 6, 7)).reshape(-1, 8 * Cin)
    w2 = jnp.transpose(p["patch_embed_w"], (2, 3, 4, 1, 0)).reshape(8 * Cin, -1)
    x0 = fused_linear(xr, w2, p["patch_embed_b"])
    x0 = x0.reshape(B, D // 2, H // 2, W // 2, feature_size)

    def proj_out(t):   # F.layer_norm over channels, no affine
        C = t.shape[-1]
        return layernorm(t, jnp.ones((C,), jnp.float32),
                         jnp.zeros((C,), jnp.float32))

    x0_out = proj_out(x0)
    x1 = basic_layer(x0, p["layer1"], 3, window_cfg)
    x1_out = proj_out(x1)
    x2 = basic_layer(x1, p["layer2"], 6, window_cfg)
    x2_out = proj_out(x2)
    x3 = basic_layer(x2, p["layer3"], 12, window_cfg)
    x3_out = proj_out(x3)
    x4 = basic_layer(x3, p["layer4"], 24, window_cfg)
    x4_out = proj_out(x4)
    return [x0_out, x1_out, x2_out, x3_out, x4_out]


# ----------------------------------------------------------------------------
# UNETR encoder / decoder blocks
# ----------------------------------------------------------------------------

def unet_res_block(x, p):
    B, D, H, W, _ = x.shape
    S = D * H * W

    def conv_norm(inp, w, act, residual=None):
        y, stats = conv3d(inp, w)
        if stats is not None:
            mean, inv = _finalize_stats(stats[0], stats[1], S)
        else:
            mean, inv = instance_norm_stats(y)
        return instance_norm_apply(y, mean, inv, act=act, residual=residual)

    out = conv_norm(x, p["conv1_w"], act=True)          # conv1 + norm1 + lrelu
    if "conv3_w" in p:
        residual = conv_norm(x, p["conv3_w"], act=False)   # 1x1 proj + norm3
    else:
        residual = x
    # conv2 + norm2 + residual add + lrelu (add/act fused into the apply pass)
    return conv_norm(out, p["conv2_w"], act=True, residual=residual)


def unetr_up_block(x, skip, p):
    out = conv_transpose2x(x, p["transp_w"])
    out = jnp.concatenate([out, skip.astype(out.dtype)], axis=-1)
    return unet_res_block(out, p["conv_block"])


def out_block(x, p):
    B, D, H, W, C = x.shape
    w = p["w"].reshape(p["w"].shape[0], C)       # (Cout, Cin) from (Cout,Cin,1,1,1)
    y = fused_linear(x.reshape(-1, C), w.T, p["b"], out_dtype=jnp.float32)
    return y.reshape(B, D, H, W, -1)


def swin_unetr_forward(x_ncdhw, params):
    """Input/output layout: NCDHW (PyTorch)."""
    x = jnp.transpose(x_ncdhw, (0, 2, 3, 4, 1)).astype(jnp.bfloat16)
    hs = swin_vit(x, params["swinViT"], params["feature_size"],
                  params["window_size"])
    enc0 = unet_res_block(x, params["encoder1"])
    enc1 = unet_res_block(hs[0], params["encoder2"])
    enc2 = unet_res_block(hs[1], params["encoder3"])
    enc3 = unet_res_block(hs[2], params["encoder4"])
    dec4 = unet_res_block(hs[4], params["encoder10"])
    dec3 = unetr_up_block(dec4, hs[3], params["decoder5"])
    dec2 = unetr_up_block(dec3, enc3, params["decoder4"])
    dec1 = unetr_up_block(dec2, enc2, params["decoder3"])
    dec0 = unetr_up_block(dec1, enc1, params["decoder2"])
    out = unetr_up_block(dec0, enc0, params["decoder1"])
    logits = out_block(out, params["out"])
    return jnp.transpose(logits, (0, 4, 1, 2, 3))


# ----------------------------------------------------------------------------
# Deterministic synthetic parameter initialization
# ----------------------------------------------------------------------------

class KeyGen:
    def __init__(self, key):
        self.key = key

    def __call__(self):
        self.key, sub = jax.random.split(self.key)
        return sub


def normal(kg, shape, scale=0.02):
    return scale * jax.random.normal(kg(), shape, dtype=jnp.float32)


def init_swin_block(kg, C, heads, ws):
    table = (2 * ws[0] - 1) * (2 * ws[1] - 1) * (2 * ws[2] - 1)
    return dict(
        norm1_w=jnp.ones((C,), jnp.float32), norm1_b=jnp.zeros((C,), jnp.float32),
        attn=dict(qkv_w=normal(kg, (3 * C, C)), qkv_b=jnp.zeros((3 * C,), jnp.float32),
                  rpb_table=normal(kg, (table, heads)),
                  proj_w=normal(kg, (C, C)), proj_b=jnp.zeros((C,), jnp.float32)),
        norm2_w=jnp.ones((C,), jnp.float32), norm2_b=jnp.zeros((C,), jnp.float32),
        mlp_w1=normal(kg, (4 * C, C)), mlp_b1=jnp.zeros((4 * C,), jnp.float32),
        mlp_w2=normal(kg, (C, 4 * C)), mlp_b2=jnp.zeros((C,), jnp.float32),
    )


def init_layer(kg, C, heads, ws, depth=2):
    return dict(
        blocks=[init_swin_block(kg, C, heads, ws) for _ in range(depth)],
        rp_index=rel_pos_index(ws),
        downsample=dict(norm_w=jnp.ones((8 * C,), jnp.float32),
                        norm_b=jnp.zeros((8 * C,), jnp.float32),
                        red_w=normal(kg, (2 * C, 8 * C))),
    )


def init_res_block(kg, cin, cout):
    p = dict(conv1_w=normal(kg, (cout, cin, 3, 3, 3)),
             conv2_w=normal(kg, (cout, cout, 3, 3, 3)))
    if cin != cout:
        p["conv3_w"] = normal(kg, (cout, cin, 1, 1, 1))
    return p


def init_up_block(kg, cin, cout):
    return dict(transp_w=normal(kg, (cin, cout, 2, 2, 2)),
                conv_block=init_res_block(kg, 2 * cout, cout))


def init_params(seed, in_channels, out_channels, feature_size, window_size):
    kg = KeyGen(jax.random.PRNGKey(seed))
    f = feature_size
    swin = dict(
        patch_embed_w=normal(kg, (f, in_channels, 2, 2, 2)),
        patch_embed_b=jnp.zeros((f,), jnp.float32),
        layer1=init_layer(kg, f, 3, window_size),
        layer2=init_layer(kg, 2 * f, 6, window_size),
        layer3=init_layer(kg, 4 * f, 12, window_size),
        layer4=init_layer(kg, 8 * f, 24, window_size),
    )
    return dict(
        feature_size=f, window_size=window_size, swinViT=swin,
        encoder1=init_res_block(kg, in_channels, f),
        encoder2=init_res_block(kg, f, f),
        encoder3=init_res_block(kg, 2 * f, 2 * f),
        encoder4=init_res_block(kg, 4 * f, 4 * f),
        encoder10=init_res_block(kg, 16 * f, 16 * f),
        decoder5=init_up_block(kg, 16 * f, 8 * f),
        decoder4=init_up_block(kg, 8 * f, 4 * f),
        decoder3=init_up_block(kg, 4 * f, 2 * f),
        decoder2=init_up_block(kg, 2 * f, f),
        decoder1=init_up_block(kg, f, f),
        out=dict(w=normal(kg, (out_channels, f, 1, 1, 1)),
                 b=jnp.zeros((out_channels,), jnp.float32)),
    )


# ----------------------------------------------------------------------------
# Main
# ----------------------------------------------------------------------------

if __name__ == "__main__":
    B, Cin, D, H, W = 1, 1, 32, 32, 32         # must be divisible by 32
    out_channels = 1
    feature_size = 12
    window_size = (4, 4, 4)

    key = jax.random.PRNGKey(0)
    x = jax.random.normal(key, (B, Cin, D, H, W), dtype=jnp.float32)

    params = init_params(0, Cin, out_channels, feature_size, window_size)

    y = swin_unetr_forward(x, params)
    y = jax.block_until_ready(y)
    assert y.shape == (B, out_channels, D, H, W), y.shape
    assert bool(jnp.all(jnp.isfinite(y)))
    print("KERNEL_OK")
</pallas_src>

<mosaic_0001>
module attributes {stable_mosaic.version = 11 : i64} {
  func.func @_linear_kernel(%arg0: i32, %arg1: memref<2048x8xbf16, #tpu.memory_space<vmem>>, %arg2: memref<8x12xbf16, #tpu.memory_space<vmem>>, %arg3: memref<1x12xf32, #tpu.memory_space<vmem>>, %arg4: memref<2048x12xbf16, #tpu.memory_space<vmem>>) attributes {dimension_semantics = [#tpu.dimension_semantics<parallel>], iteration_bounds = array<i64: 2>, scalar_prefetch = 0 : i64, scratch_operands = 0 : i64, tpu.core_type = #tpu.core_type<tc>, window_params = [{transform_indices = @transform_0, window_bounds = array<i64: 2048, 8>}, {pipeline_mode = #tpu.pipeline_mode<synchronous>, transform_indices = @transform_1, window_bounds = array<i64: 8, 12>}, {pipeline_mode = #tpu.pipeline_mode<synchronous>, transform_indices = @transform_2, window_bounds = array<i64: 1, 12>}, {transform_indices = @transform_3, window_bounds = array<i64: 2048, 12>}]} {
    %c0 = arith.constant 0 : index
    %c0_0 = arith.constant 0 : index
    %0 = vector.load %arg1[%c0, %c0_0] : memref<2048x8xbf16, #tpu.memory_space<vmem>>, vector<2048x8xbf16>
    %c0_1 = arith.constant 0 : index
    %c0_2 = arith.constant 0 : index
    %1 = vector.load %arg2[%c0_1, %c0_2] : memref<8x12xbf16, #tpu.memory_space<vmem>>, vector<8x12xbf16>
    %cst = arith.constant dense<0.000000e+00> : vector<2048x12xf32>
    %2 = tpu.matmul %0, %1, %cst {dimension_numbers = #tpu.dot_dimension_numbers<[1], [0], [0], [1], [0, 0, 1, 1], [], []>} : vector<2048x8xbf16>, vector<8x12xbf16>, vector<2048x12xf32> -> vector<2048x12xf32>
    %c0_3 = arith.constant 0 : index
    %c0_4 = arith.constant 0 : index
    %3 = vector.load %arg3[%c0_3, %c0_4] : memref<1x12xf32, #tpu.memory_space<vmem>>, vector<1x12xf32>
    %4 = vector.broadcast %3 : vector<1x12xf32> to vector<2048x12xf32>
    %5 = arith.addf %2, %4 : vector<2048x12xf32>
    %6 = arith.truncf %5 : vector<2048x12xf32> to vector<2048x12xbf16>
    %c0_5 = arith.constant 0 : index
    %c0_6 = arith.constant 0 : index
    %7 = vector.load %arg4[%c0_5, %c0_6] : memref<2048x12xbf16, #tpu.memory_space<vmem>>, vector<2048x12xbf16>
    tpu.vector_store %arg4[%c0_5, %c0_6], %6 {strides = array<i32>} : memref<2048x12xbf16, #tpu.memory_space<vmem>>, vector<2048x12xbf16>,
    return
  }
  func.func @transform_0(%arg0: i32) -> (i32, i32) {
    %c0_i32 = arith.constant 0 : i32
    %c0_i32_0 = arith.constant 0 : i32
    return %arg0, %c0_i32 : i32, i32
  }
  func.func @transform_1(%arg0: i32) -> (i32, i32) {
    %c0_i32 = arith.constant 0 : i32
    %c0_i32_0 = arith.constant 0 : i32
    %c0_i32_1 = arith.constant 0 : i32
    return %c0_i32, %c0_i32_0 : i32, i32
  }
  func.func @transform_2(%arg0: i32) -> (i32, i32) {
    %c0_i32 = arith.constant 0 : i32
    %c0_i32_0 = arith.constant 0 : i32
    %c0_i32_1 = arith.constant 0 : i32
    return %c0_i32, %c0_i32_0 : i32, i32
  }
  func.func @transform_3(%arg0: i32) -> (i32, i32) {
    %c0_i32 = arith.constant 0 : i32
    %c0_i32_0 = arith.constant 0 : i32
    return %arg0, %c0_i32 : i32, i32
  }
}

</mosaic_0001>

<llo_original>
// kernel: tpu_custom_call.1
$region0: #{tpu_custom_call.1}
  #allocation0 [shape = 'u32[]', space=smem, size = 0x4, offset = 0x4, fixed_abs, tag = 'smem constant byte address 0x4 - core index']
  #allocation1 [shape = 'u32[144,128]{1,0:T(1,128)}', space=vmem, size = 0x12000, scoped, tag = 'internal scratch']
  %s0 = inlined_call_operand.vmem [shape: bf16[4096,8], index: 0, kind: input, shape index: {}]
  %s1 = inlined_call_operand.vmem [shape: bf16[8,12], index: 1, kind: input, shape index: {}]
  %s2 = inlined_call_operand.vmem [shape: f32[1,12], index: 2, kind: input, shape index: {}]
  %s3 = inlined_call_operand.vmem [shape: bf16[4096,12], index: 3, kind: output, shape index: {}]
  %s4 = sld [smem:[#allocation0]]
  $region45: #{tpu_custom_call.1} parent=0
    _
  %s6 = ssub.s32 1, %s4
  %s7 = scalar_select 0, %s6, %s4
  loop: start=0, step=1, limit=4
  $region2: #{tpu_custom_call.1} parent=0 // loop_pre_header
    _
  $region3: #{tpu_custom_call.1} parent=0 // loop_header
    %s9 = sphi 0, %s13
    %p10 = scmp.ge.s32.totalorder %s9, 4
    %s19 = sphi 0, %s21
    %s22 = sphi 0, %s19
    %s23 = sphi 0, %s22
    %s39 = sphi 0, %s23
    %s43 = sphi 0, %s43
    %s45 = sphi 0, %s43
    %s46 = sphi 0, %s45
    %s60 = sphi 0, %s46
    %s64 = sphi 0, %s64
    %s66 = sphi 0, %s64
    %s67 = sphi 0, %s66
    %s81 = sphi 0, %s67
    %s87 = sphi 0, %s89
    %s90 = sphi 0, %s87
    %s91 = sphi 0, %s90
    %s107 = sphi 0, %s91
  $region4: #{tpu_custom_call.1} parent=0 // loop_header_branch
    %12 = sbr.rel (%p10) target = $region8
  $region5: #{tpu_custom_call.1} parent=0 // loop_body
    %s14 = ssub.s32 %s9, 1
    %s15 = ssub.s32 %s9, 2
    %s16 = sadd.s32 %s9, 1
    %s17 = ssub.s32 %s9, %s16
    %p18 = scmp.eq.s32.totalorder %s17, 0
    %s20 = sadd.s32 %s19, 1
    %s21 = scalar_select %p18, %s19, %s20
    %p24 = pneg %p18
    %p25 = scmp.eq.s32.totalorder %s9, 1
    %p26 = por %p24, %p25
    %p27 = scmp.ne.s32.totalorder %s19, %s22
    %p28 = scmp.eq.s32.totalorder %s9, 0
    %p29 = por %p27, %p28
    %p30 = scmp.ne.s32.totalorder %s19, %s22
    %p31 = scmp.eq.s32.totalorder %s14, 1
    %p32 = por %p30, %p31
    %p33 = scmp.ne.s32.totalorder %s22, %s23
    %p34 = scmp.eq.s32.totalorder %s14, 0
    %p35 = por %p33, %p34
    %p36 = scmp.ne.s32.totalorder %s22, %s23
    %p37 = scmp.eq.s32.totalorder %s15, 1
    %p38 = por %p36, %p37
    %p40 = scmp.ne.s32.totalorder %s23, %s39
    %p41 = scmp.eq.s32.totalorder %s15, 0
    %p42 = por %p40, %p41
    %s44 = sadd.s32 %s43, 1
    %p47 = scmp.eq.s32.totalorder %s9, 1
    %p48 = scmp.ne.s32.totalorder %s43, %s45
    %p49 = scmp.eq.s32.totalorder %s9, 0
    %p50 = por %p48, %p49
    %p51 = scmp.ne.s32.totalorder %s43, %s45
    %p52 = scmp.eq.s32.totalorder %s14, 1
    %p53 = por %p51, %p52
    %p54 = scmp.ne.s32.totalorder %s45, %s46
    %p55 = scmp.eq.s32.totalorder %s14, 0
    %p56 = por %p54, %p55
    %p57 = scmp.ne.s32.totalorder %s45, %s46
    %p58 = scmp.eq.s32.totalorder %s15, 1
    %p59 = por %p57, %p58
    %p61 = scmp.ne.s32.totalorder %s46, %s60
    %p62 = scmp.eq.s32.totalorder %s15, 0
    %p63 = por %p61, %p62
    %s65 = sadd.s32 %s64, 1
    %p68 = scmp.eq.s32.totalorder %s9, 1
    %p69 = scmp.ne.s32.totalorder %s64, %s66
    %p70 = scmp.eq.s32.totalorder %s9, 0
    %p71 = por %p69, %p70
    %p72 = scmp.ne.s32.totalorder %s64, %s66
    %p73 = scmp.eq.s32.totalorder %s14, 1
    %p74 = por %p72, %p73
    %p75 = scmp.ne.s32.totalorder %s66, %s67
    %p76 = scmp.eq.s32.totalorder %s14, 0
    %p77 = por %p75, %p76
    %p78 = scmp.ne.s32.totalorder %s66, %s67
    %p79 = scmp.eq.s32.totalorder %s15, 1
    %p80 = por %p78, %p79
    %p82 = scmp.ne.s32.totalorder %s67, %s81
    %p83 = scmp.eq.s32.totalorder %s15, 0
    %p84 = por %p82, %p83
    %s85 = ssub.s32 %s9, %s16
    %p86 = scmp.eq.s32.totalorder %s85, 0
    %s88 = sadd.s32 %s87, 1
    %s89 = scalar_select %p86, %s87, %s88
    %p92 = pneg %p86
    %p93 = scmp.eq.s32.totalorder %s9, 1
    %p94 = por %p92, %p93
    %p95 = scmp.ne.s32.totalorder %s87, %s90
    %p96 = scmp.eq.s32.totalorder %s9, 0
    %p97 = por %p95, %p96
    %p98 = scmp.ne.s32.totalorder %s87, %s90
    %p99 = scmp.eq.s32.totalorder %s14, 1
    %p100 = por %p98, %p99
    %p101 = scmp.ne.s32.totalorder %s90, %s91
    %p102 = scmp.eq.s32.totalorder %s14, 0
    %p103 = por %p101, %p102
    %p104 = scmp.ne.s32.totalorder %s90, %s91
    %p105 = scmp.eq.s32.totalorder %s15, 1
    %p106 = por %p104, %p105
    %p108 = scmp.ne.s32.totalorder %s91, %s107
    %p109 = scmp.eq.s32.totalorder %s15, 0
    %p110 = por %p108, %p109
    %p111 = scmp.le.s32.totalorder 1, %s9
    %p112 = scmp.lt.s32.totalorder %s9, 3
    %p113 = pnand %p111, %p112
    %p114 = pneg %p113
    // Predicated region
    $region9: #{tpu_custom_call.1} parent=5 // pred_check
      _
    $region10: #{tpu_custom_call.1} parent=5 // pred_check_branch
      %116 = sbr.rel (%p113) target = $region12
    $region11: #{tpu_custom_call.1} parent=5 // pred_region
      %s117 = ssub.s32 %s9, 1
      // Predicated region
      $region13: #{tpu_custom_call.1} parent=11 // pred_check
        %p118 = pneg %p56
      $region14: #{tpu_custom_call.1} parent=11 // pred_check_branch
        %120 = sbr.rel (%p118) target = $region16
      $region15: #{tpu_custom_call.1} parent=11 // pred_region
        _
      $region16: #{tpu_custom_call.1} parent=11 // pred_fallthru
        _
      // Predicated region
      $region17: #{tpu_custom_call.1} parent=11 // pred_check
        %p121 = pneg %p77
      $region18: #{tpu_custom_call.1} parent=11 // pred_check_branch
        %123 = sbr.rel (%p121) target = $region20
      $region19: #{tpu_custom_call.1} parent=11 // pred_region
        _
      $region20: #{tpu_custom_call.1} parent=11 // pred_fallthru
        _
    $region12: #{tpu_custom_call.1} parent=5 // pred_fallthru
      _
    %p124 = scmp.lt.s32.totalorder %s9, 2
    // Predicated region
    $region21: #{tpu_custom_call.1} parent=5 // pred_check
      %p125 = pneg %p124
    $region22: #{tpu_custom_call.1} parent=5 // pred_check_branch
      %127 = sbr.rel (%p125) target = $region24
    $region23: #{tpu_custom_call.1} parent=5 // pred_region
      // Predicated region
      $region25: #{tpu_custom_call.1} parent=23 // pred_check
        %p128 = pneg %p29
      $region26: #{tpu_custom_call.1} parent=23 // pred_check_branch
        %130 = sbr.rel (%p128) target = $region28
      $region27: #{tpu_custom_call.1} parent=23 // pred_region
        %s131 = smul.u32 256, %s9
        %p132 = scmp.lt.s32.totalorder %s131, 511
        %s133 = scalar_select %p132, %s131, 511
        %s134 = smul.addr %s133, 4
        %s135 = scalar_lea.vmem %s0, %s134
        %s136 = smul.u32 256, %s9
      $region28: #{tpu_custom_call.1} parent=23 // pred_fallthru
        _
    $region24: #{tpu_custom_call.1} parent=5 // pred_fallthru
      _
    %p137 = scmp.le.s32.totalorder 1, %s9
    %p138 = scmp.lt.s32.totalorder %s9, 3
    %p139 = pnand %p137, %p138
    %p140 = pneg %p139
    // Predicated region
    $region29: #{tpu_custom_call.1} parent=5 // pred_check
      _
    $region30: #{tpu_custom_call.1} parent=5 // pred_check_branch
      %142 = sbr.rel (%p139) target = $region32
    $region31: #{tpu_custom_call.1} parent=5 // pred_region
      %s143 = ssub.s32 %s9, 1
      %s144 = smul.u32 256, %s14
      %p145 = scmp.lt.s32.totalorder %s144, 511
      %s146 = scalar_select %p145, %s144, 511
      %s147 = smul.addr %s146, 4
      %s148 = scalar_lea.vmem %s0, %s147
      %p149 = pneg %p35
      %p150 = pneg %p32
      %p151 = pneg %p56
      %p152 = pneg %p53
      %p153 = pneg %p77
      %p154 = pneg %p74
      %p155 = pneg %p103
      %p156 = pneg %p100
      %s157 = smul.u32 256, %s14
      %p158 = scmp.lt.s32.totalorder %s157, 511
      %s159 = scalar_select %p158, %s157, 511
      %s160 = smul.addr %s159, 4
      %s161 = scalar_lea.vmem %s3, %s160
      %s162 = smul.u32 256, %s14
      %p163 = scmp.lt.s32.totalorder %s162, 511
      %s164 = scalar_select %p163, %s162, 511
      %s165 = smul.addr %s164, 4
      %s166 = scalar_lea.vmem %s0, %s165
      %s167 = smul.u32 256, %s14
      %s168 = smul.u32 256, %s14
      %p169 = scmp.lt.s32.totalorder %s168, 511
      %s170 = scalar_select %p169, %s168, 511
      %s171 = smul.addr %s170, 4
      %s172 = scalar_lea.vmem %s3, %s171
      %s173 = smul.u32 256, %s14
      %v175 = vld [vmem:[%s166] sm:$0xf]
      %v176 = vld [vmem:[%s166 + $0x4] sm:$0xf]
      %v177 = vld [vmem:[%s166 + $0x8] sm:$0xf]
      %v178 = vld [vmem:[%s166 + $0xc] sm:$0xf]
      %v179 = vld [vmem:[%s166 + $0x10] sm:$0xf]
      %v180 = vld [vmem:[%s166 + $0x14] sm:$0xf]
      %v181 = vld [vmem:[%s166 + $0x18] sm:$0xf]
      %v182 = vld [vmem:[%s166 + $0x1c] sm:$0xf]
      %v183 = vld [vmem:[%s166 + $0x20] sm:$0xf]
      %v184 = vld [vmem:[%s166 + $0x24] sm:$0xf]
      %v185 = vld [vmem:[%s166 + $0x28] sm:$0xf]
      %v186 = vld [vmem:[%s166 + $0x2c] sm:$0xf]
      %v187 = vld [vmem:[%s166 + $0x30] sm:$0xf]
      %v188 = vld [vmem:[%s166 + $0x34] sm:$0xf]
      %v189 = vld [vmem:[%s166 + $0x38] sm:$0xf]
      %v190 = vld [vmem:[%s166 + $0x3c] sm:$0xf]
      %v191 = vld [vmem:[%s166 + $0x40] sm:$0xf]
      %v192 = vld [vmem:[%s166 + $0x44] sm:$0xf]
      %v193 = vld [vmem:[%s166 + $0x48] sm:$0xf]
      %v194 = vld [vmem:[%s166 + $0x4c] sm:$0xf]
      %v195 = vld [vmem:[%s166 + $0x50] sm:$0xf]
      %v196 = vld [vmem:[%s166 + $0x54] sm:$0xf]
      %v197 = vld [vmem:[%s166 + $0x58] sm:$0xf]
      %v198 = vld [vmem:[%s166 + $0x5c] sm:$0xf]
      %v199 = vld [vmem:[%s166 + $0x60] sm:$0xf]
      %v200 = vld [vmem:[%s166 + $0x64] sm:$0xf]
      %v201 = vld [vmem:[%s166 + $0x68] sm:$0xf]
      %v202 = vld [vmem:[%s166 + $0x6c] sm:$0xf]
      %v203 = vld [vmem:[%s166 + $0x70] sm:$0xf]
      %v204 = vld [vmem:[%s166 + $0x74] sm:$0xf]
      %v205 = vld [vmem:[%s166 + $0x78] sm:$0xf]
      %v206 = vld [vmem:[%s166 + $0x7c] sm:$0xf]
      %v207 = vld [vmem:[%s166 + $0x80] sm:$0xf]
      %v208 = vld [vmem:[%s166 + $0x84] sm:$0xf]
      %v209 = vld [vmem:[%s166 + $0x88] sm:$0xf]
      %v210 = vld [vmem:[%s166 + $0x8c] sm:$0xf]
      %v211 = vld [vmem:[%s166 + $0x90] sm:$0xf]
      %v212 = vld [vmem:[%s166 + $0x94] sm:$0xf]
      %v213 = vld [vmem:[%s166 + $0x98] sm:$0xf]
      %v214 = vld [vmem:[%s166 + $0x9c] sm:$0xf]
      %v215 = vld [vmem:[%s166 + $0xa0] sm:$0xf]
      %v216 = vld [vmem:[%s166 + $0xa4] sm:$0xf]
      %v217 = vld [vmem:[%s166 + $0xa8] sm:$0xf]
      %v218 = vld [vmem:[%s166 + $0xac] sm:$0xf]
      %v219 = vld [vmem:[%s166 + $0xb0] sm:$0xf]
      %v220 = vld [vmem:[%s166 + $0xb4] sm:$0xf]
      %v221 = vld [vmem:[%s166 + $0xb8] sm:$0xf]
      %v222 = vld [vmem:[%s166 + $0xbc] sm:$0xf]
      %v223 = vld [vmem:[%s166 + $0xc0] sm:$0xf]
      %v224 = vld [vmem:[%s166 + $0xc4] sm:$0xf]
      %v225 = vld [vmem:[%s166 + $0xc8] sm:$0xf]
      %v226 = vld [vmem:[%s166 + $0xcc] sm:$0xf]
      %v227 = vld [vmem:[%s166 + $0xd0] sm:$0xf]
      %v228 = vld [vmem:[%s166 + $0xd4] sm:$0xf]
      %v229 = vld [vmem:[%s166 + $0xd8] sm:$0xf]
      %v230 = vld [vmem:[%s166 + $0xdc] sm:$0xf]
      %v231 = vld [vmem:[%s166 + $0xe0] sm:$0xf]
      %v232 = vld [vmem:[%s166 + $0xe4] sm:$0xf]
      %v233 = vld [vmem:[%s166 + $0xe8] sm:$0xf]
      %v234 = vld [vmem:[%s166 + $0xec] sm:$0xf]
      %v235 = vld [vmem:[%s166 + $0xf0] sm:$0xf]
      %v236 = vld [vmem:[%s166 + $0xf4] sm:$0xf]
      %v237 = vld [vmem:[%s166 + $0xf8] sm:$0xf]
      %v238 = vld [vmem:[%s166 + $0xfc] sm:$0xf]
      %v239 = vld [vmem:[%s166 + $0x100] sm:$0xf]
      %v240 = vld [vmem:[%s166 + $0x104] sm:$0xf]
      %v241 = vld [vmem:[%s166 + $0x108] sm:$0xf]
      %v242 = vld [vmem:[%s166 + $0x10c] sm:$0xf]
      %v243 = vld [vmem:[%s166 + $0x110] sm:$0xf]
      %v244 = vld [vmem:[%s166 + $0x114] sm:$0xf]
      %v245 = vld [vmem:[%s166 + $0x118] sm:$0xf]
      %v246 = vld [vmem:[%s166 + $0x11c] sm:$0xf]
      %v247 = vld [vmem:[%s166 + $0x120] sm:$0xf]
      %v248 = vld [vmem:[%s166 + $0x124] sm:$0xf]
      %v249 = vld [vmem:[%s166 + $0x128] sm:$0xf]
      %v250 = vld [vmem:[%s166 + $0x12c] sm:$0xf]
      %v251 = vld [vmem:[%s166 + $0x130] sm:$0xf]
      %v252 = vld [vmem:[%s166 + $0x134] sm:$0xf]
      %v253 = vld [vmem:[%s166 + $0x138] sm:$0xf]
      %v254 = vld [vmem:[%s166 + $0x13c] sm:$0xf]
      %v255 = vld [vmem:[%s166 + $0x140] sm:$0xf]
      %v256 = vld [vmem:[%s166 + $0x144] sm:$0xf]
      %v257 = vld [vmem:[%s166 + $0x148] sm:$0xf]
      %v258 = vld [vmem:[%s166 + $0x14c] sm:$0xf]
      %v259 = vld [vmem:[%s166 + $0x150] sm:$0xf]
      %v260 = vld [vmem:[%s166 + $0x154] sm:$0xf]
      %v261 = vld [vmem:[%s166 + $0x158] sm:$0xf]
      %v262 = vld [vmem:[%s166 + $0x15c] sm:$0xf]
      %v263 = vld [vmem:[%s166 + $0x160] sm:$0xf]
      %v264 = vld [vmem:[%s166 + $0x164] sm:$0xf]
      %v265 = vld [vmem:[%s166 + $0x168] sm:$0xf]
      %v266 = vld [vmem:[%s166 + $0x16c] sm:$0xf]
      %v267 = vld [vmem:[%s166 + $0x170] sm:$0xf]
      %v268 = vld [vmem:[%s166 + $0x174] sm:$0xf]
      %v269 = vld [vmem:[%s166 + $0x178] sm:$0xf]
      %v270 = vld [vmem:[%s166 + $0x17c] sm:$0xf]
      %v271 = vld [vmem:[%s166 + $0x180] sm:$0xf]
      %v272 = vld [vmem:[%s166 + $0x184] sm:$0xf]
      %v273 = vld [vmem:[%s166 + $0x188] sm:$0xf]
      %v274 = vld [vmem:[%s166 + $0x18c] sm:$0xf]
      %v275 = vld [vmem:[%s166 + $0x190] sm:$0xf]
      %v276 = vld [vmem:[%s166 + $0x194] sm:$0xf]
      %v277 = vld [vmem:[%s166 + $0x198] sm:$0xf]
      %v278 = vld [vmem:[%s166 + $0x19c] sm:$0xf]
      %v279 = vld [vmem:[%s166 + $0x1a0] sm:$0xf]
      %v280 = vld [vmem:[%s166 + $0x1a4] sm:$0xf]
      %v281 = vld [vmem:[%s166 + $0x1a8] sm:$0xf]
      %v282 = vld [vmem:[%s166 + $0x1ac] sm:$0xf]
      %v283 = vld [vmem:[%s166 + $0x1b0] sm:$0xf]
      %v284 = vld [vmem:[%s166 + $0x1b4] sm:$0xf]
      %v285 = vld [vmem:[%s166 + $0x1b8] sm:$0xf]
      %v286 = vld [vmem:[%s166 + $0x1bc] sm:$0xf]
      %v287 = vld [vmem:[%s166 + $0x1c0] sm:$0xf]
      %v288 = vld [vmem:[%s166 + $0x1c4] sm:$0xf]
      %v289 = vld [vmem:[%s166 + $0x1c8] sm:$0xf]
      %v290 = vld [vmem:[%s166 + $0x1cc] sm:$0xf]
      %v291 = vld [vmem:[%s166 + $0x1d0] sm:$0xf]
      %v292 = vld [vmem:[%s166 + $0x1d4] sm:$0xf]
      %v293 = vld [vmem:[%s166 + $0x1d8] sm:$0xf]
      %v294 = vld [vmem:[%s166 + $0x1dc] sm:$0xf]
      %v295 = vld [vmem:[%s166 + $0x1e0] sm:$0xf]
      %v296 = vld [vmem:[%s166 + $0x1e4] sm:$0xf]
      %v297 = vld [vmem:[%s166 + $0x1e8] sm:$0xf]
      %v298 = vld [vmem:[%s166 + $0x1ec] sm:$0xf]
      %v299 = vld [vmem:[%s166 + $0x1f0] sm:$0xf]
      %v300 = vld [vmem:[%s166 + $0x1f4] sm:$0xf]
      %v301 = vld [vmem:[%s166 + $0x1f8] sm:$0xf]
      %v302 = vld [vmem:[%s166 + $0x1fc] sm:$0xf]
      %v303 = vld [vmem:[%s166 + $0x200] sm:$0xf]
      %v304 = vld [vmem:[%s166 + $0x204] sm:$0xf]
      %v305 = vld [vmem:[%s166 + $0x208] sm:$0xf]
      %v306 = vld [vmem:[%s166 + $0x20c] sm:$0xf]
      %v307 = vld [vmem:[%s166 + $0x210] sm:$0xf]
      %v308 = vld [vmem:[%s166 + $0x214] sm:$0xf]
      %v309 = vld [vmem:[%s166 + $0x218] sm:$0xf]
      %v310 = vld [vmem:[%s166 + $0x21c] sm:$0xf]
      %v311 = vld [vmem:[%s166 + $0x220] sm:$0xf]
      %v312 = vld [vmem:[%s166 + $0x224] sm:$0xf]
      %v313 = vld [vmem:[%s166 + $0x228] sm:$0xf]
      %v314 = vld [vmem:[%s166 + $0x22c] sm:$0xf]
      %v315 = vld [vmem:[%s166 + $0x230] sm:$0xf]
      %v316 = vld [vmem:[%s166 + $0x234] sm:$0xf]
      %v317 = vld [vmem:[%s166 + $0x238] sm:$0xf]
      %v318 = vld [vmem:[%s166 + $0x23c] sm:$0xf]
      %v319 = vld [vmem:[%s166 + $0x240] sm:$0xf]
      %v320 = vld [vmem:[%s166 + $0x244] sm:$0xf]
      %v321 = vld [vmem:[%s166 + $0x248] sm:$0xf]
      %v322 = vld [vmem:[%s166 + $0x24c] sm:$0xf]
      %v323 = vld [vmem:[%s166 + $0x250] sm:$0xf]
      %v324 = vld [vmem:[%s166 + $0x254] sm:$0xf]
      %v325 = vld [vmem:[%s166 + $0x258] sm:$0xf]
      %v326 = vld [vmem:[%s166 + $0x25c] sm:$0xf]
      %v327 = vld [vmem:[%s166 + $0x260] sm:$0xf]
      %v328 = vld [vmem:[%s166 + $0x264] sm:$0xf]
      %v329 = vld [vmem:[%s166 + $0x268] sm:$0xf]
      %v330 = vld [vmem:[%s166 + $0x26c] sm:$0xf]
      %v331 = vld [vmem:[%s166 + $0x270] sm:$0xf]
      %v332 = vld [vmem:[%s166 + $0x274] sm:$0xf]
      %v333 = vld [vmem:[%s166 + $0x278] sm:$0xf]
      %v334 = vld [vmem:[%s166 + $0x27c] sm:$0xf]
      %v335 = vld [vmem:[%s166 + $0x280] sm:$0xf]
      %v336 = vld [vmem:[%s166 + $0x284] sm:$0xf]
      %v337 = vld [vmem:[%s166 + $0x288] sm:$0xf]
      %v338 = vld [vmem:[%s166 + $0x28c] sm:$0xf]
      %v339 = vld [vmem:[%s166 + $0x290] sm:$0xf]
      %v340 = vld [vmem:[%s166 + $0x294] sm:$0xf]
      %v341 = vld [vmem:[%s166 + $0x298] sm:$0xf]
      %v342 = vld [vmem:[%s166 + $0x29c] sm:$0xf]
      %v343 = vld [vmem:[%s166 + $0x2a0] sm:$0xf]
      %v344 = vld [vmem:[%s166 + $0x2a4] sm:$0xf]
      %v345 = vld [vmem:[%s166 + $0x2a8] sm:$0xf]
      %v346 = vld [vmem:[%s166 + $0x2ac] sm:$0xf]
      %v347 = vld [vmem:[%s166 + $0x2b0] sm:$0xf]
      %v348 = vld [vmem:[%s166 + $0x2b4] sm:$0xf]
      %v349 = vld [vmem:[%s166 + $0x2b8] sm:$0xf]
      %v350 = vld [vmem:[%s166 + $0x2bc] sm:$0xf]
      %v351 = vld [vmem:[%s166 + $0x2c0] sm:$0xf]
      %v352 = vld [vmem:[%s166 + $0x2c4] sm:$0xf]
      %v353 = vld [vmem:[%s166 + $0x2c8] sm:$0xf]
      %v354 = vld [vmem:[%s166 + $0x2cc] sm:$0xf]
      %v355 = vld [vmem:[%s166 + $0x2d0] sm:$0xf]
      %v356 = vld [vmem:[%s166 + $0x2d4] sm:$0xf]
      %v357 = vld [vmem:[%s166 + $0x2d8] sm:$0xf]
      %v358 = vld [vmem:[%s166 + $0x2dc] sm:$0xf]
      %v359 = vld [vmem:[%s166 + $0x2e0] sm:$0xf]
      %v360 = vld [vmem:[%s166 + $0x2e4] sm:$0xf]
      %v361 = vld [vmem:[%s166 + $0x2e8] sm:$0xf]
      %v362 = vld [vmem:[%s166 + $0x2ec] sm:$0xf]
      %v363 = vld [vmem:[%s166 + $0x2f0] sm:$0xf]
      %v364 = vld [vmem:[%s166 + $0x2f4] sm:$0xf]
      %v365 = vld [vmem:[%s166 + $0x2f8] sm:$0xf]
      %v366 = vld [vmem:[%s166 + $0x2fc] sm:$0xf]
      %v367 = vld [vmem:[%s166 + $0x300] sm:$0xf]
      %v368 = vld [vmem:[%s166 + $0x304] sm:$0xf]
      %v369 = vld [vmem:[%s166 + $0x308] sm:$0xf]
      %v370 = vld [vmem:[%s166 + $0x30c] sm:$0xf]
      %v371 = vld [vmem:[%s166 + $0x310] sm:$0xf]
      %v372 = vld [vmem:[%s166 + $0x314] sm:$0xf]
      %v373 = vld [vmem:[%s166 + $0x318] sm:$0xf]
      %v374 = vld [vmem:[%s166 + $0x31c] sm:$0xf]
      %v375 = vld [vmem:[%s166 + $0x320] sm:$0xf]
      %v376 = vld [vmem:[%s166 + $0x324] sm:$0xf]
      %v377 = vld [vmem:[%s166 + $0x328] sm:$0xf]
      %v378 = vld [vmem:[%s166 + $0x32c] sm:$0xf]
      %v379 = vld [vmem:[%s166 + $0x330] sm:$0xf]
      %v380 = vld [vmem:[%s166 + $0x334] sm:$0xf]
      %v381 = vld [vmem:[%s166 + $0x338] sm:$0xf]
      %v382 = vld [vmem:[%s166 + $0x33c] sm:$0xf]
      %v383 = vld [vmem:[%s166 + $0x340] sm:$0xf]
      %v384 = vld [vmem:[%s166 + $0x344] sm:$0xf]
      %v385 = vld [vmem:[%s166 + $0x348] sm:$0xf]
      %v386 = vld [vmem:[%s166 + $0x34c] sm:$0xf]
      %v387 = vld [vmem:[%s166 + $0x350] sm:$0xf]
      %v388 = vld [vmem:[%s166 + $0x354] sm:$0xf]
      %v389 = vld [vmem:[%s166 + $0x358] sm:$0xf]
      %v390 = vld [vmem:[%s166 + $0x35c] sm:$0xf]
      %v391 = vld [vmem:[%s166 + $0x360] sm:$0xf]
      %v392 = vld [vmem:[%s166 + $0x364] sm:$0xf]
      %v393 = vld [vmem:[%s166 + $0x368] sm:$0xf]
      %v394 = vld [vmem:[%s166 + $0x36c] sm:$0xf]
      %v395 = vld [vmem:[%s166 + $0x370] sm:$0xf]
      %v396 = vld [vmem:[%s166 + $0x374] sm:$0xf]
      %v397 = vld [vmem:[%s166 + $0x378] sm:$0xf]
      %v398 = vld [vmem:[%s166 + $0x37c] sm:$0xf]
      %v399 = vld [vmem:[%s166 + $0x380] sm:$0xf]
      %v400 = vld [vmem:[%s166 + $0x384] sm:$0xf]
      %v401 = vld [vmem:[%s166 + $0x388] sm:$0xf]
      %v402 = vld [vmem:[%s166 + $0x38c] sm:$0xf]
      %v403 = vld [vmem:[%s166 + $0x390] sm:$0xf]
      %v404 = vld [vmem:[%s166 + $0x394] sm:$0xf]
      %v405 = vld [vmem:[%s166 + $0x398] sm:$0xf]
      %v406 = vld [vmem:[%s166 + $0x39c] sm:$0xf]
      %v407 = vld [vmem:[%s166 + $0x3a0] sm:$0xf]
      %v408 = vld [vmem:[%s166 + $0x3a4] sm:$0xf]
      %v409 = vld [vmem:[%s166 + $0x3a8] sm:$0xf]
      %v410 = vld [vmem:[%s166 + $0x3ac] sm:$0xf]
      %v411 = vld [vmem:[%s166 + $0x3b0] sm:$0xf]
      %v412 = vld [vmem:[%s166 + $0x3b4] sm:$0xf]
      %v413 = vld [vmem:[%s166 + $0x3b8] sm:$0xf]
      %v414 = vld [vmem:[%s166 + $0x3bc] sm:$0xf]
      %v415 = vld [vmem:[%s166 + $0x3c0] sm:$0xf]
      %v416 = vld [vmem:[%s166 + $0x3c4] sm:$0xf]
      %v417 = vld [vmem:[%s166 + $0x3c8] sm:$0xf]
      %v418 = vld [vmem:[%s166 + $0x3cc] sm:$0xf]
      %v419 = vld [vmem:[%s166 + $0x3d0] sm:$0xf]
      %v420 = vld [vmem:[%s166 + $0x3d4] sm:$0xf]
      %v421 = vld [vmem:[%s166 + $0x3d8] sm:$0xf]
      %v422 = vld [vmem:[%s166 + $0x3dc] sm:$0xf]
      %v423 = vld [vmem:[%s166 + $0x3e0] sm:$0xf]
      %v424 = vld [vmem:[%s166 + $0x3e4] sm:$0xf]
      %v425 = vld [vmem:[%s166 + $0x3e8] sm:$0xf]
      %v426 = vld [vmem:[%s166 + $0x3ec] sm:$0xf]
      %v427 = vld [vmem:[%s166 + $0x3f0] sm:$0xf]
      %v428 = vld [vmem:[%s166 + $0x3f4] sm:$0xf]
      %v429 = vld [vmem:[%s166 + $0x3f8] sm:$0xf]
      %v430 = vld [vmem:[%s166 + $0x3fc] sm:$0xf]
      %v431 = vld [vmem:[%s1] sm:$0xf]
      %v432 = vld [vmem:[%s2] sm:$0x1]
      %v434 = vlaneseq
      %v435 = vshrl.u32 %v434, 7
      %v436 = vsub.s32 0, %v435
      %v437 = vrot.slane %v432, %v436
      %v695 = vunpack.c.l.b16 %v175
      %v696 = vunpack.c.l.b16 %v176
      %v697 = vunpack.c.l.b16 %v177
      %v698 = vunpack.c.l.b16 %v178
      %v699 = vunpack.c.l.b16 %v179
      %v700 = vunpack.c.l.b16 %v180
      %v701 = vunpack.c.l.b16 %v181
      %v702 = vunpack.c.l.b16 %v182
      %v703 = vunpack.c.l.b16 %v183
      %v704 = vunpack.c.l.b16 %v184
      %v705 = vunpack.c.l.b16 %v185
      %v706 = vunpack.c.l.b16 %v186
      %v707 = vunpack.c.l.b16 %v187
      %v708 = vunpack.c.l.b16 %v188
      %v709 = vunpack.c.l.b16 %v189
      %v710 = vunpack.c.l.b16 %v190
      %v711 = vunpack.c.l.b16 %v191
      %v712 = vunpack.c.l.b16 %v192
      %v713 = vunpack.c.l.b16 %v193
      %v714 = vunpack.c.l.b16 %v194
      %v715 = vunpack.c.l.b16 %v195
      %v716 = vunpack.c.l.b16 %v196
      %v717 = vunpack.c.l.b16 %v197
      %v718 = vunpack.c.l.b16 %v198
      %v719 = vunpack.c.l.b16 %v199
      %v720 = vunpack.c.l.b16 %v200
      %v721 = vunpack.c.l.b16 %v201
      %v722 = vunpack.c.l.b16 %v202
      %v723 = vunpack.c.l.b16 %v203
      %v724 = vunpack.c.l.b16 %v204
      %v725 = vunpack.c.l.b16 %v205
      %v726 = vunpack.c.l.b16 %v206
      %v727 = vunpack.c.l.b16 %v207
      %v728 = vunpack.c.l.b16 %v208
      %v729 = vunpack.c.l.b16 %v209
      %v730 = vunpack.c.l.b16 %v210
      %v731 = vunpack.c.l.b16 %v211
      %v732 = vunpack.c.l.b16 %v212
      %v733 = vunpack.c.l.b16 %v213
      %v734 = vunpack.c.l.b16 %v214
      %v735 = vunpack.c.l.b16 %v215
      %v736 = vunpack.c.l.b16 %v216
      %v737 = vunpack.c.l.b16 %v217
      %v738 = vunpack.c.l.b16 %v218
      %v739 = vunpack.c.l.b16 %v219
      %v740 = vunpack.c.l.b16 %v220
      %v741 = vunpack.c.l.b16 %v221
      %v742 = vunpack.c.l.b16 %v222
      %v743 = vunpack.c.l.b16 %v223
      %v744 = vunpack.c.l.b16 %v224
      %v745 = vunpack.c.l.b16 %v225
      %v746 = vunpack.c.l.b16 %v226
      %v747 = vunpack.c.l.b16 %v227
      %v748 = vunpack.c.l.b16 %v228
      %v749 = vunpack.c.l.b16 %v229
      %v750 = vunpack.c.l.b16 %v230
      %v751 = vunpack.c.l.b16 %v231
      %v752 = vunpack.c.l.b16 %v232
      %v753 = vunpack.c.l.b16 %v233
      %v754 = vunpack.c.l.b16 %v234
      %v755 = vunpack.c.l.b16 %v235
      %v756 = vunpack.c.l.b16 %v236
      %v757 = vunpack.c.l.b16 %v237
      %v758 = vunpack.c.l.b16 %v238
      %v759 = vunpack.c.l.b16 %v239
      %v760 = vunpack.c.l.b16 %v240
      %v761 = vunpack.c.l.b16 %v241
      %v762 = vunpack.c.l.b16 %v242
      %v763 = vunpack.c.l.b16 %v243
      %v764 = vunpack.c.l.b16 %v244
      %v765 = vunpack.c.l.b16 %v245
      %v766 = vunpack.c.l.b16 %v246
      %v767 = vunpack.c.l.b16 %v247
      %v768 = vunpack.c.l.b16 %v248
      %v769 = vunpack.c.l.b16 %v249
      %v770 = vunpack.c.l.b16 %v250
      %v771 = vunpack.c.l.b16 %v251
      %v772 = vunpack.c.l.b16 %v252
      %v773 = vunpack.c.l.b16 %v253
      %v774 = vunpack.c.l.b16 %v254
      %v775 = vunpack.c.l.b16 %v255
      %v776 = vunpack.c.l.b16 %v256
      %v777 = vunpack.c.l.b16 %v257
      %v778 = vunpack.c.l.b16 %v258
      %v779 = vunpack.c.l.b16 %v259
      %v780 = vunpack.c.l.b16 %v260
      %v781 = vunpack.c.l.b16 %v261
      %v782 = vunpack.c.l.b16 %v262
      %v783 = vunpack.c.l.b16 %v263
      %v784 = vunpack.c.l.b16 %v264
      %v785 = vunpack.c.l.b16 %v265
      %v786 = vunpack.c.l.b16 %v266
      %v787 = vunpack.c.l.b16 %v267
      %v788 = vunpack.c.l.b16 %v268
      %v789 = vunpack.c.l.b16 %v269
      %v790 = vunpack.c.l.b16 %v270
      %v791 = vunpack.c.l.b16 %v271
      %v792 = vunpack.c.l.b16 %v272
      %v793 = vunpack.c.l.b16 %v273
      %v794 = vunpack.c.l.b16 %v274
      %v795 = vunpack.c.l.b16 %v275
      %v796 = vunpack.c.l.b16 %v276
      %v797 = vunpack.c.l.b16 %v277
      %v798 = vunpack.c.l.b16 %v278
      %v799 = vunpack.c.l.b16 %v279
      %v800 = vunpack.c.l.b16 %v280
      %v801 = vunpack.c.l.b16 %v281
      %v802 = vunpack.c.l.b16 %v282
      %v803 = vunpack.c.l.b16 %v283
      %v804 = vunpack.c.l.b16 %v284
      %v805 = vunpack.c.l.b16 %v285
      %v806 = vunpack.c.l.b16 %v286
      %v807 = vunpack.c.l.b16 %v287
      %v808 = vunpack.c.l.b16 %v288
      %v809 = vunpack.c.l.b16 %v289
      %v810 = vunpack.c.l.b16 %v290
      %v811 = vunpack.c.l.b16 %v291
      %v812 = vunpack.c.l.b16 %v292
      %v813 = vunpack.c.l.b16 %v293
      %v814 = vunpack.c.l.b16 %v294
      %v815 = vunpack.c.l.b16 %v295
      %v816 = vunpack.c.l.b16 %v296
      %v817 = vunpack.c.l.b16 %v297
      %v818 = vunpack.c.l.b16 %v298
      %v819 = vunpack.c.l.b16 %v299
      %v820 = vunpack.c.l.b16 %v300
      %v821 = vunpack.c.l.b16 %v301
      %v822 = vunpack.c.l.b16 %v302
      %v823 = vunpack.c.l.b16 %v303
      %v824 = vunpack.c.l.b16 %v304
      %v825 = vunpack.c.l.b16 %v305
      %v826 = vunpack.c.l.b16 %v306
      %v827 = vunpack.c.l.b16 %v307
      %v828 = vunpack.c.l.b16 %v308
      %v829 = vunpack.c.l.b16 %v309
      %v830 = vunpack.c.l.b16 %v310
      %v831 = vunpack.c.l.b16 %v311
      %v832 = vunpack.c.l.b16 %v312
      %v833 = vunpack.c.l.b16 %v313
      %v834 = vunpack.c.l.b16 %v314
      %v835 = vunpack.c.l.b16 %v315
      %v836 = vunpack.c.l.b16 %v316
      %v837 = vunpack.c.l.b16 %v317
      %v838 = vunpack.c.l.b16 %v318
      %v839 = vunpack.c.l.b16 %v319
      %v840 = vunpack.c.l.b16 %v320
      %v841 = vunpack.c.l.b16 %v321
      %v842 = vunpack.c.l.b16 %v322
      %v843 = vunpack.c.l.b16 %v323
      %v844 = vunpack.c.l.b16 %v324
      %v845 = vunpack.c.l.b16 %v325
      %v846 = vunpack.c.l.b16 %v326
      %v847 = vunpack.c.l.b16 %v327
      %v848 = vunpack.c.l.b16 %v328
      %v849 = vunpack.c.l.b16 %v329
      %v850 = vunpack.c.l.b16 %v330
      %v851 = vunpack.c.l.b16 %v331
      %v852 = vunpack.c.l.b16 %v332
      %v853 = vunpack.c.l.b16 %v333
      %v854 = vunpack.c.l.b16 %v334
      %v855 = vunpack.c.l.b16 %v335
      %v856 = vunpack.c.l.b16 %v336
      %v857 = vunpack.c.l.b16 %v337
      %v858 = vunpack.c.l.b16 %v338
      %v859 = vunpack.c.l.b16 %v339
      %v860 = vunpack.c.l.b16 %v340
      %v861 = vunpack.c.l.b16 %v341
      %v862 = vunpack.c.l.b16 %v342
      %v863 = vunpack.c.l.b16 %v343
      %v864 = vunpack.c.l.b16 %v344
      %v865 = vunpack.c.l.b16 %v345
      %v866 = vunpack.c.l.b16 %v346
      %v867 = vunpack.c.l.b16 %v347
      %v868 = vunpack.c.l.b16 %v348
      %v869 = vunpack.c.l.b16 %v349
      %v870 = vunpack.c.l.b16 %v350
      %v871 = vunpack.c.l.b16 %v351
      %v872 = vunpack.c.l.b16 %v352
      %v873 = vunpack.c.l.b16 %v353
      %v874 = vunpack.c.l.b16 %v354
      %v875 = vunpack.c.l.b16 %v355
      %v876 = vunpack.c.l.b16 %v356
      %v877 = vunpack.c.l.b16 %v357
      %v878 = vunpack.c.l.b16 %v358
      %v879 = vunpack.c.l.b16 %v359
      %v880 = vunpack.c.l.b16 %v360
      %v881 = vunpack.c.l.b16 %v361
      %v882 = vunpack.c.l.b16 %v362
      %v883 = vunpack.c.l.b16 %v363
      %v884 = vunpack.c.l.b16 %v364
      %v885 = vunpack.c.l.b16 %v365
      %v886 = vunpack.c.l.b16 %v366
      %v887 = vunpack.c.l.b16 %v367
      %v888 = vunpack.c.l.b16 %v368
      %v889 = vunpack.c.l.b16 %v369
      %v890 = vunpack.c.l.b16 %v370
      %v891 = vunpack.c.l.b16 %v371
      %v892 = vunpack.c.l.b16 %v372
      %v893 = vunpack.c.l.b16 %v373
      %v894 = vunpack.c.l.b16 %v374
      %v895 = vunpack.c.l.b16 %v375
      %v896 = vunpack.c.l.b16 %v376
      %v897 = vunpack.c.l.b16 %v377
      %v898 = vunpack.c.l.b16 %v378
      %v899 = vunpack.c.l.b16 %v379
      %v900 = vunpack.c.l.b16 %v380
      %v901 = vunpack.c.l.b16 %v381
      %v902 = vunpack.c.l.b16 %v382
      %v903 = vunpack.c.l.b16 %v383
      %v904 = vunpack.c.l.b16 %v384
      %v905 = vunpack.c.l.b16 %v385
      %v906 = vunpack.c.l.b16 %v386
      %v907 = vunpack.c.l.b16 %v387
      %v908 = vunpack.c.l.b16 %v388
      %v909 = vunpack.c.l.b16 %v389
      %v910 = vunpack.c.l.b16 %v390
      %v911 = vunpack.c.l.b16 %v391
      %v912 = vunpack.c.l.b16 %v392
      %v913 = vunpack.c.l.b16 %v393
      %v914 = vunpack.c.l.b16 %v394
      %v915 = vunpack.c.l.b16 %v395
      %v916 = vunpack.c.l.b16 %v396
      %v917 = vunpack.c.l.b16 %v397
      %v918 = vunpack.c.l.b16 %v398
      %v919 = vunpack.c.l.b16 %v399
      %v920 = vunpack.c.l.b16 %v400
      %v921 = vunpack.c.l.b16 %v401
      %v922 = vunpack.c.l.b16 %v402
      %v923 = vunpack.c.l.b16 %v403
      %v924 = vunpack.c.l.b16 %v404
      %v925 = vunpack.c.l.b16 %v405
      %v926 = vunpack.c.l.b16 %v406
      %v927 = vunpack.c.l.b16 %v407
      %v928 = vunpack.c.l.b16 %v408
      %v929 = vunpack.c.l.b16 %v409
      %v930 = vunpack.c.l.b16 %v410
      %v931 = vunpack.c.l.b16 %v411
      %v932 = vunpack.c.l.b16 %v412
      %v933 = vunpack.c.l.b16 %v413
      %v934 = vunpack.c.l.b16 %v414
      %v935 = vunpack.c.l.b16 %v415
      %v936 = vunpack.c.l.b16 %v416
      %v937 = vunpack.c.l.b16 %v417
      %v938 = vunpack.c.l.b16 %v418
      %v939 = vunpack.c.l.b16 %v419
      %v940 = vunpack.c.l.b16 %v420
      %v941 = vunpack.c.l.b16 %v421
      %v942 = vunpack.c.l.b16 %v422
      %v943 = vunpack.c.l.b16 %v423
      %v944 = vunpack.c.l.b16 %v424
      %v945 = vunpack.c.l.b16 %v425
      %v946 = vunpack.c.l.b16 %v426
      %v947 = vunpack.c.l.b16 %v427
      %v948 = vunpack.c.l.b16 %v428
      %v949 = vunpack.c.l.b16 %v429
      %v950 = vunpack.c.l.b16 %v430
      %v951 = vpack.c.b16 %v696, %v695
      %v952 = vpack.c.b16 %v698, %v697
      %v953 = vpack.c.b16 %v700, %v699
      %v954 = vpack.c.b16 %v702, %v701
      %v955 = vpack.c.b16 %v704, %v703
      %v956 = vpack.c.b16 %v706, %v705
      %v957 = vpack.c.b16 %v708, %v707
      %v958 = vpack.c.b16 %v710, %v709
      %v959 = vpack.c.b16 %v712, %v711
      %v960 = vpack.c.b16 %v714, %v713
      %v961 = vpack.c.b16 %v716, %v715
      %v962 = vpack.c.b16 %v718, %v717
      %v963 = vpack.c.b16 %v720, %v719
      %v964 = vpack.c.b16 %v722, %v721
      %v965 = vpack.c.b16 %v724, %v723
      %v966 = vpack.c.b16 %v726, %v725
      %v967 = vpack.c.b16 %v728, %v727
      %v968 = vpack.c.b16 %v730, %v729
      %v969 = vpack.c.b16 %v732, %v731
      %v970 = vpack.c.b16 %v734, %v733
      %v971 = vpack.c.b16 %v736, %v735
      %v972 = vpack.c.b16 %v738, %v737
      %v973 = vpack.c.b16 %v740, %v739
      %v974 = vpack.c.b16 %v742, %v741
      %v975 = vpack.c.b16 %v744, %v743
      %v976 = vpack.c.b16 %v746, %v745
      %v977 = vpack.c.b16 %v748, %v747
      %v978 = vpack.c.b16 %v750, %v749
      %v979 = vpack.c.b16 %v752, %v751
      %v980 = vpack.c.b16 %v754, %v753
      %v981 = vpack.c.b16 %v756, %v755
      %v982 = vpack.c.b16 %v758, %v757
      %v983 = vpack.c.b16 %v760, %v759
      %v984 = vpack.c.b16 %v762, %v761
      %v985 = vpack.c.b16 %v764, %v763
      %v986 = vpack.c.b16 %v766, %v765
      %v987 = vpack.c.b16 %v768, %v767
      %v988 = vpack.c.b16 %v770, %v769
      %v989 = vpack.c.b16 %v772, %v771
      %v990 = vpack.c.b16 %v774, %v773
      %v991 = vpack.c.b16 %v776, %v775
      %v992 = vpack.c.b16 %v778, %v777
      %v993 = vpack.c.b16 %v780, %v779
      %v994 = vpack.c.b16 %v782, %v781
      %v995 = vpack.c.b16 %v784, %v783
      %v996 = vpack.c.b16 %v786, %v785
      %v997 = vpack.c.b16 %v788, %v787
      %v998 = vpack.c.b16 %v790, %v789
      %v999 = vpack.c.b16 %v792, %v791
      %v1000 = vpack.c.b16 %v794, %v793
      %v1001 = vpack.c.b16 %v796, %v795
      %v1002 = vpack.c.b16 %v798, %v797
      %v1003 = vpack.c.b16 %v800, %v799
      %v1004 = vpack.c.b16 %v802, %v801
      %v1005 = vpack.c.b16 %v804, %v803
      %v1006 = vpack.c.b16 %v806, %v805
      %v1007 = vpack.c.b16 %v808, %v807
      %v1008 = vpack.c.b16 %v810, %v809
      %v1009 = vpack.c.b16 %v812, %v811
      %v1010 = vpack.c.b16 %v814, %v813
      %v1011 = vpack.c.b16 %v816, %v815
      %v1012 = vpack.c.b16 %v818, %v817
      %v1013 = vpack.c.b16 %v820, %v819
      %v1014 = vpack.c.b16 %v822, %v821
      %v1015 = vpack.c.b16 %v824, %v823
      %v1016 = vpack.c.b16 %v826, %v825
      %v1017 = vpack.c.b16 %v828, %v827
      %v1018 = vpack.c.b16 %v830, %v829
      %v1019 = vpack.c.b16 %v832, %v831
      %v1020 = vpack.c.b16 %v834, %v833
      %v1021 = vpack.c.b16 %v836, %v835
      %v1022 = vpack.c.b16 %v838, %v837
      %v1023 = vpack.c.b16 %v840, %v839
      %v1024 = vpack.c.b16 %v842, %v841
      %v1025 = vpack.c.b16 %v844, %v843
      %v1026 = vpack.c.b16 %v846, %v845
      %v1027 = vpack.c.b16 %v848, %v847
      %v1028 = vpack.c.b16 %v850, %v849
      %v1029 = vpack.c.b16 %v852, %v851
      %v1030 = vpack.c.b16 %v854, %v853
      %v1031 = vpack.c.b16 %v856, %v855
      %v1032 = vpack.c.b16 %v858, %v857
      %v1033 = vpack.c.b16 %v860, %v859
      %v1034 = vpack.c.b16 %v862, %v861
      %v1035 = vpack.c.b16 %v864, %v863
      %v1036 = vpack.c.b16 %v866, %v865
      %v1037 = vpack.c.b16 %v868, %v867
      %v1038 = vpack.c.b16 %v870, %v869
      %v1039 = vpack.c.b16 %v872, %v871
      %v1040 = vpack.c.b16 %v874, %v873
      %v1041 = vpack.c.b16 %v876, %v875
      %v1042 = vpack.c.b16 %v878, %v877
      %v1043 = vpack.c.b16 %v880, %v879
      %v1044 = vpack.c.b16 %v882, %v881
      %v1045 = vpack.c.b16 %v884, %v883
      %v1046 = vpack.c.b16 %v886, %v885
      %v1047 = vpack.c.b16 %v888, %v887
      %v1048 = vpack.c.b16 %v890, %v889
      %v1049 = vpack.c.b16 %v892, %v891
      %v1050 = vpack.c.b16 %v894, %v893
      %v1051 = vpack.c.b16 %v896, %v895
      %v1052 = vpack.c.b16 %v898, %v897
      %v1053 = vpack.c.b16 %v900, %v899
      %v1054 = vpack.c.b16 %v902, %v901
      %v1055 = vpack.c.b16 %v904, %v903
      %v1056 = vpack.c.b16 %v906, %v905
      %v1057 = vpack.c.b16 %v908, %v907
      %v1058 = vpack.c.b16 %v910, %v909
      %v1059 = vpack.c.b16 %v912, %v911
      %v1060 = vpack.c.b16 %v914, %v913
      %v1061 = vpack.c.b16 %v916, %v915
      %v1062 = vpack.c.b16 %v918, %v917
      %v1063 = vpack.c.b16 %v920, %v919
      %v1064 = vpack.c.b16 %v922, %v921
      %v1065 = vpack.c.b16 %v924, %v923
      %v1066 = vpack.c.b16 %v926, %v925
      %v1067 = vpack.c.b16 %v928, %v927
      %v1068 = vpack.c.b16 %v930, %v929
      %v1069 = vpack.c.b16 %v932, %v931
      %v1070 = vpack.c.b16 %v934, %v933
      %v1071 = vpack.c.b16 %v936, %v935
      %v1072 = vpack.c.b16 %v938, %v937
      %v1073 = vpack.c.b16 %v940, %v939
      %v1074 = vpack.c.b16 %v942, %v941
      %v1075 = vpack.c.b16 %v944, %v943
      %v1076 = vpack.c.b16 %v946, %v945
      %v1077 = vpack.c.b16 %v948, %v947
      %v1078 = vpack.c.b16 %v950, %v949
      %vm1079 = vcmask 64512
      %v1081 = vsel %vm1079, %v951, 0
      %v1084 = vsel %vm1079, %v952, 0
      %v1087 = vsel %vm1079, %v953, 0
      %v1090 = vsel %vm1079, %v954, 0
      %v1093 = vsel %vm1079, %v955, 0
      %v1096 = vsel %vm1079, %v956, 0
      %v1099 = vsel %vm1079, %v957, 0
      %v1102 = vsel %vm1079, %v958, 0
      %v1105 = vsel %vm1079, %v959, 0
      %v1108 = vsel %vm1079, %v960, 0
      %v1111 = vsel %vm1079, %v961, 0
      %v1114 = vsel %vm1079, %v962, 0
      %v1117 = vsel %vm1079, %v963, 0
      %v1120 = vsel %vm1079, %v964, 0
      %v1123 = vsel %vm1079, %v965, 0
      %v1126 = vsel %vm1079, %v966, 0
      %v1129 = vsel %vm1079, %v967, 0
      %v1132 = vsel %vm1079, %v968, 0
      %v1135 = vsel %vm1079, %v969, 0
      %v1138 = vsel %vm1079, %v970, 0
      %v1141 = vsel %vm1079, %v971, 0
      %v1144 = vsel %vm1079, %v972, 0
      %v1147 = vsel %vm1079, %v973, 0
      %v1150 = vsel %vm1079, %v974, 0
      %v1153 = vsel %vm1079, %v975, 0
      %v1156 = vsel %vm1079, %v976, 0
      %v1159 = vsel %vm1079, %v977, 0
      %v1162 = vsel %vm1079, %v978, 0
      %v1165 = vsel %vm1079, %v979, 0
      %v1168 = vsel %vm1079, %v980, 0
      %v1171 = vsel %vm1079, %v981, 0
      %v1174 = vsel %vm1079, %v982, 0
      %v1177 = vsel %vm1079, %v983, 0
      %v1180 = vsel %vm1079, %v984, 0
      %v1183 = vsel %vm1079, %v985, 0
      %v1186 = vsel %vm1079, %v986, 0
      %v1189 = vsel %vm1079, %v987, 0
      %v1192 = vsel %vm1079, %v988, 0
      %v1195 = vsel %vm1079, %v989, 0
      %v1198 = vsel %vm1079, %v990, 0
      %v1201 = vsel %vm1079, %v991, 0
      %v1204 = vsel %vm1079, %v992, 0
      %v1207 = vsel %vm1079, %v993, 0
      %v1210 = vsel %vm1079, %v994, 0
      %v1213 = vsel %vm1079, %v995, 0
      %v1216 = vsel %vm1079, %v996, 0
      %v1219 = vsel %vm1079, %v997, 0
      %v1222 = vsel %vm1079, %v998, 0
      %v1225 = vsel %vm1079, %v999, 0
      %v1228 = vsel %vm1079, %v1000, 0
      %v1231 = vsel %vm1079, %v1001, 0
      %v1234 = vsel %vm1079, %v1002, 0
      %v1237 = vsel %vm1079, %v1003, 0
      %v1240 = vsel %vm1079, %v1004, 0
      %v1243 = vsel %vm1079, %v1005, 0
      %v1246 = vsel %vm1079, %v1006, 0
      %v1249 = vsel %vm1079, %v1007, 0
      %v1252 = vsel %vm1079, %v1008, 0
      %v1255 = vsel %vm1079, %v1009, 0
      %v1258 = vsel %vm1079, %v1010, 0
      %v1261 = vsel %vm1079, %v1011, 0
      %v1264 = vsel %vm1079, %v1012, 0
      %v1267 = vsel %vm1079, %v1013, 0
      %v1270 = vsel %vm1079, %v1014, 0
      %v1273 = vsel %vm1079, %v1015, 0
      %v1276 = vsel %vm1079, %v1016, 0
      %v1279 = vsel %vm1079, %v1017, 0
      %v1282 = vsel %vm1079, %v1018, 0
      %v1285 = vsel %vm1079, %v1019, 0
      %v1288 = vsel %vm1079, %v1020, 0
      %v1291 = vsel %vm1079, %v1021, 0
      %v1294 = vsel %vm1079, %v1022, 0
      %v1297 = vsel %vm1079, %v1023, 0
      %v1300 = vsel %vm1079, %v1024, 0
      %v1303 = vsel %vm1079, %v1025, 0
      %v1306 = vsel %vm1079, %v1026, 0
      %v1309 = vsel %vm1079, %v1027, 0
      %v1312 = vsel %vm1079, %v1028, 0
      %v1315 = vsel %vm1079, %v1029, 0
      %v1318 = vsel %vm1079, %v1030, 0
      %v1321 = vsel %vm1079, %v1031, 0
      %v1324 = vsel %vm1079, %v1032, 0
      %v1327 = vsel %vm1079, %v1033, 0
      %v1330 = vsel %vm1079, %v1034, 0
      %v1333 = vsel %vm1079, %v1035, 0
      %v1336 = vsel %vm1079, %v1036, 0
      %v1339 = vsel %vm1079, %v1037, 0
      %v1342 = vsel %vm1079, %v1038, 0
      %v1345 = vsel %vm1079, %v1039, 0
      %v1348 = vsel %vm1079, %v1040, 0
      %v1351 = vsel %vm1079, %v1041, 0
      %v1354 = vsel %vm1079, %v1042, 0
      %v1357 = vsel %vm1079, %v1043, 0
      %v1360 = vsel %vm1079, %v1044, 0
      %v1363 = vsel %vm1079, %v1045, 0
      %v1366 = vsel %vm1079, %v1046, 0
      %v1369 = vsel %vm1079, %v1047, 0
      %v1372 = vsel %vm1079, %v1048, 0
      %v1375 = vsel %vm1079, %v1049, 0
      %v1378 = vsel %vm1079, %v1050, 0
      %v1381 = vsel %vm1079, %v1051, 0
      %v1384 = vsel %vm1079, %v1052, 0
      %v1387 = vsel %vm1079, %v1053, 0
      %v1390 = vsel %vm1079, %v1054, 0
      %v1393 = vsel %vm1079, %v1055, 0
      %v1396 = vsel %vm1079, %v1056, 0
      %v1399 = vsel %vm1079, %v1057, 0
      %v1402 = vsel %vm1079, %v1058, 0
      %v1405 = vsel %vm1079, %v1059, 0
      %v1408 = vsel %vm1079, %v1060, 0
      %v1411 = vsel %vm1079, %v1061, 0
      %v1414 = vsel %vm1079, %v1062, 0
      %v1417 = vsel %vm1079, %v1063, 0
      %v1420 = vsel %vm1079, %v1064, 0
      %v1423 = vsel %vm1079, %v1065, 0
      %v1426 = vsel %vm1079, %v1066, 0
      %v1429 = vsel %vm1079, %v1067, 0
      %v1432 = vsel %vm1079, %v1068, 0
      %v1435 = vsel %vm1079, %v1069, 0
      %v1438 = vsel %vm1079, %v1070, 0
      %v1441 = vsel %vm1079, %v1071, 0
      %v1444 = vsel %vm1079, %v1072, 0
      %v1447 = vsel %vm1079, %v1073, 0
      %v1450 = vsel %vm1079, %v1074, 0
      %v1453 = vsel %vm1079, %v1075, 0
      %v1456 = vsel %vm1079, %v1076, 0
      %v1459 = vsel %vm1079, %v1077, 0
      %v1462 = vsel %vm1079, %v1078, 0
      %vm1464 = vcmask 1043456
      %v1466 = vsel %vm1464, %v431, 0
      %1468 = vmatprep.subr.bf16.mxu0 0
      %1469 = vmatpush1.bf16.msra.mxu0 %v1466
      %1470 = vmatprep.subr.bf16.mxu0 0
      %1471 = vmatpush1.bf16.msra.mxu0 0
      %1472 = vmatprep.subr.bf16.mxu0 0
      %1473 = vmatpush1.bf16.msra.mxu0 0
      %1474 = vmatprep.subr.bf16.mxu0 0
      %1475 = vmatpush1.bf16.msra.mxu0 0
      %1476 = vmatprep.subr.bf16.mxu0 0
      %1477 = vmatpush1.bf16.msra.mxu0 0
      %1478 = vmatprep.subr.bf16.mxu0 0
      %1479 = vmatpush1.bf16.msra.mxu0 0
      %1480 = vmatprep.subr.bf16.mxu0 0
      %1481 = vmatpush1.bf16.msra.mxu0 0
      %1482 = vmatprep.subr.bf16.mxu0 0
      %1483 = vmatpush1.bf16.msra.mxu0 0
      %1484 = vmatprep.subr.bf16.mxu0 0
      %1485 = vmatpush1.bf16.msra.mxu0 0
      %1486 = vmatprep.subr.bf16.mxu0 0
      %1487 = vmatpush1.bf16.msra.mxu0 0
      %1488 = vmatprep.subr.bf16.mxu0 0
      %1489 = vmatpush1.bf16.msra.mxu0 0
      %1490 = vmatprep.subr.bf16.mxu0 0
      %1491 = vmatpush1.bf16.msra.mxu0 0
      %1492 = vmatprep.subr.bf16.mxu0 0
      %1493 = vmatpush1.bf16.msra.mxu0 0
      %1494 = vmatprep.subr.bf16.mxu0 0
      %1495 = vmatpush1.bf16.msra.mxu0 0
      %1496 = vmatprep.subr.bf16.mxu0 0
      %1497 = vmatpush1.bf16.msra.mxu0 0
      %1498 = vmatprep.subr.bf16.mxu0 0
      %1499 = vmatpush1.bf16.msra.mxu0 0
      %1500 = vmatprep.mubr.bf16.mxu0 0
      %1501 = vmatmul.mubr.bf16.gmra.mrb[0].mxu0 %v1081
      %v1502 = vpop.f32.mrb[0].mxu0
      %v1503 = vadd.f32 %v437, %v1502
      %v1504 = vpop.f32.mrb[0].mxu0
      %v1505 = vpop.f32.mrb[0].mxu0
      %v1506 = vadd.f32 %v437, %v1505
      %v1507 = vpop.f32.mrb[0].mxu0
      %1508 = vmatprep.mubr.bf16.mxu0 0
      %1509 = vmatmul.mubr.bf16.gmra.mrb[0].mxu0 %v1084
      %v1510 = vpop.f32.mrb[0].mxu0
      %v1511 = vadd.f32 %v437, %v1510
      %v1512 = vpop.f32.mrb[0].mxu0
      %v1513 = vpop.f32.mrb[0].mxu0
      %v1514 = vadd.f32 %v437, %v1513
      %v1515 = vpop.f32.mrb[0].mxu0
      %1516 = vmatprep.mubr.bf16.mxu0 0
      %1517 = vmatmul.mubr.bf16.gmra.mrb[0].mxu0 %v1087
      %v1518 = vpop.f32.mrb[0].mxu0
      %v1519 = vadd.f32 %v437, %v1518
      %v1520 = vpop.f32.mrb[0].mxu0
      %v1521 = vpop.f32.mrb[0].mxu0
      %v1522 = vadd.f32 %v437, %v1521
      %v1523 = vpop.f32.mrb[0].mxu0
      %1524 = vmatprep.mubr.bf16.mxu0 0
      %1525 = vmatmul.mubr.bf16.gmra.mrb[0].mxu0 %v1090
      %v1526 = vpop.f32.mrb[0].mxu0
      %v1527 = vadd.f32 %v437, %v1526
      %v1528 = vpop.f32.mrb[0].mxu0
      %v1529 = vpop.f32.mrb[0].mxu0
      %v1530 = vadd.f32 %v437, %v1529
      %v1531 = vpop.f32.mrb[0].mxu0
      %1532 = vmatprep.mubr.bf16.mxu0 0
      %1533 = vmatmul.mubr.bf16.gmra.mrb[0].mxu0 %v1093
      %v1534 = vpop.f32.mrb[0].mxu0
      %v1535 = vadd.f32 %v437, %v1534
      %v1536 = vpop.f32.mrb[0].mxu0
      %v1537 = vpop.f32.mrb[0].mxu0
      %v1538 = vadd.f32 %v437, %v1537
      %v1539 = vpop.f32.mrb[0].mxu0
      %1540 = vmatprep.mubr.bf16.mxu0 0
      %1541 = vmatmul.mubr.bf16.gmra.mrb[0].mxu0 %v1096
      %v1542 = vpop.f32.mrb[0].mxu0
      %v1543 = vadd.f32 %v437, %v1542
      %v1544 = vpop.f32.mrb[0].mxu0
      %v1545 = vpop.f32.mrb[0].mxu0
      %v1546 = vadd.f32 %v437, %v1545
      %v1547 = vpop.f32.mrb[0].mxu0
      %1548 = vmatprep.mubr.bf16.mxu0 0
      %1549 = vmatmul.mubr.bf16.gmra.mrb[0].mxu0 %v1099
      %v1550 = vpop.f32.mrb[0].mxu0
      %v1551 = vadd.f32 %v437, %v1550
      %v1552 = vpop.f32.mrb[0].mxu0
      %v1553 = vpop.f32.mrb[0].mxu0
      %v1554 = vadd.f32 %v437, %v1553
      %v1555 = vpop.f32.mrb[0].mxu0
      %1556 = vmatprep.mubr.bf16.mxu0 0
      %1557 = vmatmul.mubr.bf16.gmra.mrb[0].mxu0 %v1102
      %v1558 = vpop.f32.mrb[0].mxu0
      %v1559 = vadd.f32 %v437, %v1558
      %v1560 = vpop.f32.mrb[0].mxu0
      %v1561 = vpop.f32.mrb[0].mxu0
      %v1562 = vadd.f32 %v437, %v1561
      %v1563 = vpop.f32.mrb[0].mxu0
      %1564 = vmatprep.mubr.bf16.mxu0 0
      %1565 = vmatmul.mubr.bf16.gmra.mrb[0].mxu0 %v1105
      %v1566 = vpop.f32.mrb[0].mxu0
      %v1567 = vadd.f32 %v437, %v1566
      %v1568 = vpop.f32.mrb[0].mxu0
      %v1569 = vpop.f32.mrb[0].mxu0
      %v1570 = vadd.f32 %v437, %v1569
      %v1571 = vpop.f32.mrb[0].mxu0
      %1572 = vmatprep.mubr.bf16.mxu0 0
      %1573 = vmatmul.mubr.bf16.gmra.mrb[0].mxu0 %v1108
      %v1574 = vpop.f32.mrb[0].mxu0
      %v1575 = vadd.f32 %v437, %v1574
      %v1576 = vpop.f32.mrb[0].mxu0
      %v1577 = vpop.f32.mrb[0].mxu0
      %v1578 = vadd.f32 %v437, %v1577
      %v1579 = vpop.f32.mrb[0].mxu0
      %1580 = vmatprep.mubr.bf16.mxu0 0
      %1581 = vmatmul.mubr.bf16.gmra.mrb[0].mxu0 %v1111
      %v1582 = vpop.f32.mrb[0].mxu0
      %v1583 = vadd.f32 %v437, %v1582
      %v1584 = vpop.f32.mrb[0].mxu0
      %v1585 = vpop.f32.mrb[0].mxu0
      %v1586 = vadd.f32 %v437, %v1585
      %v1587 = vpop.f32.mrb[0].mxu0
      %1588 = vmatprep.mubr.bf16.mxu0 0
      %1589 = vmatmul.mubr.bf16.gmra.mrb[0].mxu0 %v1114
      %v1590 = vpop.f32.mrb[0].mxu0
      %v1591 = vadd.f32 %v437, %v1590
      %v1592 = vpop.f32.mrb[0].mxu0
      %v1593 = vpop.f32.mrb[0].mxu0
      %v1594 = vadd.f32 %v437, %v1593
      %v1595 = vpop.f32.mrb[0].mxu0
      %1596 = vmatprep.mubr.bf16.mxu0 0
      %1597 = vmatmul.mubr.bf16.gmra.mrb[0].mxu0 %v1117
      %v1598 = vpop.f32.mrb[0].mxu0
      %v1599 = vadd.f32 %v437, %v1598
      %v1600 = vpop.f32.mrb[0].mxu0
      %v1601 = vpop.f32.mrb[0].mxu0
      %v1602 = vadd.f32 %v437, %v1601
      %v1603 = vpop.f32.mrb[0].mxu0
      %1604 = vmatprep.mubr.bf16.mxu0 0
      %1605 = vmatmul.mubr.bf16.gmra.mrb[0].mxu0 %v1120
      %v1606 = vpop.f32.mrb[0].mxu0
      %v1607 = vadd.f32 %v437, %v1606
      %v1608 = vpop.f32.mrb[0].mxu0
      %v1609 = vpop.f32.mrb[0].mxu0
      %v1610 = vadd.f32 %v437, %v1609
      %v1611 = vpop.f32.mrb[0].mxu0
      %1612 = vmatprep.mubr.bf16.mxu0 0
      %1613 = vmatmul.mubr.bf16.gmra.mrb[0].mxu0 %v1123
      %v1614 = vpop.f32.mrb[0].mxu0
      %v1615 = vadd.f32 %v437, %v1614
      %v1616 = vpop.f32.mrb[0].mxu0
      %v1617 = vpop.f32.mrb[0].mxu0
      %v1618 = vadd.f32 %v437, %v1617
      %v1619 = vpop.f32.mrb[0].mxu0
      %1620 = vmatprep.mubr.bf16.mxu0 0
      %1621 = vmatmul.mubr.bf16.gmra.mrb[0].mxu0 %v1126
      %v1622 = vpop.f32.mrb[0].mxu0
      %v1623 = vadd.f32 %v437, %v1622
      %v1624 = vpop.f32.mrb[0].mxu0
      %v1625 = vpop.f32.mrb[0].mxu0
      %v1626 = vadd.f32 %v437, %v1625
      %v1627 = vpop.f32.mrb[0].mxu0
      %1628 = vmatprep.mubr.bf16.mxu0 0
      %1629 = vmatmul.mubr.bf16.gmra.mrb[0].mxu0 %v1129
      %v1630 = vpop.f32.mrb[0].mxu0
      %v1631 = vadd.f32 %v437, %v1630
      %v1632 = vpop.f32.mrb[0].mxu0
      %v1633 = vpop.f32.mrb[0].mxu0
      %v1634 = vadd.f32 %v437, %v1633
      %v1635 = vpop.f32.mrb[0].mxu0
      %1636 = vmatprep.mubr.bf16.mxu0 0
      %1637 = vmatmul.mubr.bf16.gmra.mrb[0].mxu0 %v1132
      %v1638 = vpop.f32.mrb[0].mxu0
      %v1639 = vadd.f32 %v437, %v1638
      %v1640 = vpop.f32.mrb[0].mxu0
      %v1641 = vpop.f32.mrb[0].mxu0
      %v1642 = vadd.f32 %v437, %v1641
      %v1643 = vpop.f32.mrb[0].mxu0
      %1644 = vmatprep.mubr.bf16.mxu0 0
      %1645 = vmatmul.mubr.bf16.gmra.mrb[0].mxu0 %v1135
      %v1646 = vpop.f32.mrb[0].mxu0
      %v1647 = vadd.f32 %v437, %v1646
      %v1648 = vpop.f32.mrb[0].mxu0
      %v1649 = vpop.f32.mrb[0].mxu0
      %v1650 = vadd.f32 %v437, %v1649
      %v1651 = vpop.f32.mrb[0].mxu0
      %1652 = vmatprep.mubr.bf16.mxu0 0
      %1653 = vmatmul.mubr.bf16.gmra.mrb[0].mxu0 %v1138
      %v1654 = vpop.f32.mrb[0].mxu0
      %v1655 = vadd.f32 %v437, %v1654
      %v1656 = vpop.f32.mrb[0].mxu0
      %v1657 = vpop.f32.mrb[0].mxu0
      %v1658 = vadd.f32 %v437, %v1657
      %v1659 = vpop.f32.mrb[0].mxu0
      %1660 = vmatprep.mubr.bf16.mxu0 0
      %1661 = vmatmul.mubr.bf16.gmra.mrb[0].mxu0 %v1141
      %v1662 = vpop.f32.mrb[0].mxu0
      %v1663 = vadd.f32 %v437, %v1662
      %v1664 = vpop.f32.mrb[0].mxu0
      %v1665 = vpop.f32.mrb[0].mxu0
      %v1666 = vadd.f32 %v437, %v1665
      %v1667 = vpop.f32.mrb[0].mxu0
      %1668 = vmatprep.mubr.bf16.mxu0 0
      %1669 = vmatmul.mubr.bf16.gmra.mrb[0].mxu0 %v1144
      %v1670 = vpop.f32.mrb[0].mxu0
      %v1671 = vadd.f32 %v437, %v1670
      %v1672 = vpop.f32.mrb[0].mxu0
      %v1673 = vpop.f32.mrb[0].mxu0
      %v1674 = vadd.f32 %v437, %v1673
      %v1675 = vpop.f32.mrb[0].mxu0
      %1676 = vmatprep.mubr.bf16.mxu0 0
      %1677 = vmatmul.mubr.bf16.gmra.mrb[0].mxu0 %v1147
      %v1678 = vpop.f32.mrb[0].mxu0
      %v1679 = vadd.f32 %v437, %v1678
      %v1680 = vpop.f32.mrb[0].mxu0
      %v1681 = vpop.f32.mrb[0].mxu0
      %v1682 = vadd.f32 %v437, %v1681
      %v1683 = vpop.f32.mrb[0].mxu0
      %1684 = vmatprep.mubr.bf16.mxu0 0
      %1685 = vmatmul.mubr.bf16.gmra.mrb[0].mxu0 %v1150
      %v1686 = vpop.f32.mrb[0].mxu0
      %v1687 = vadd.f32 %v437, %v1686
      %v1688 = vpop.f32.mrb[0].mxu0
      %v1689 = vpop.f32.mrb[0].mxu0
      %v1690 = vadd.f32 %v437, %v1689
      %v1691 = vpop.f32.mrb[0].mxu0
      %1692 = vmatprep.mubr.bf16.mxu0 0
      %1693 = vmatmul.mubr.bf16.gmra.mrb[0].mxu0 %v1153
      %v1694 = vpop.f32.mrb[0].mxu0
      %v1695 = vadd.f32 %v437, %v1694
      %v1696 = vpop.f32.mrb[0].mxu0
      %v1697 = vpop.f32.mrb[0].mxu0
      %v1698 = vadd.f32 %v437, %v1697
      %v1699 = vpop.f32.mrb[0].mxu0
      %1700 = vmatprep.mubr.bf16.mxu0 0
      %1701 = vmatmul.mubr.bf16.gmra.mrb[0].mxu0 %v1156
      %v1702 = vpop.f32.mrb[0].mxu0
      %v1703 = vadd.f32 %v437, %v1702
      %v1704 = vpop.f32.mrb[0].mxu0
      %v1705 = vpop.f32.mrb[0].mxu0
      %v1706 = vadd.f32 %v437, %v1705
      %v1707 = vpop.f32.mrb[0].mxu0
      %1708 = vmatprep.mubr.bf16.mxu0 0
      %1709 = vmatmul.mubr.bf16.gmra.mrb[0].mxu0 %v1159
      %v1710 = vpop.f32.mrb[0].mxu0
      %v1711 = vadd.f32 %v437, %v1710
      %v1712 = vpop.f32.mrb[0].mxu0
      %v1713 = vpop.f32.mrb[0].mxu0
      %v1714 = vadd.f32 %v437, %v1713
      %v1715 = vpop.f32.mrb[0].mxu0
      %1716 = vmatprep.mubr.bf16.mxu0 0
      %1717 = vmatmul.mubr.bf16.gmra.mrb[0].mxu0 %v1162
      %v1718 = vpop.f32.mrb[0].mxu0
      %v1719 = vadd.f32 %v437, %v1718
      %v1720 = vpop.f32.mrb[0].mxu0
      %v1721 = vpop.f32.mrb[0].mxu0
      %v1722 = vadd.f32 %v437, %v1721
      %v1723 = vpop.f32.mrb[0].mxu0
      %1724 = vmatprep.mubr.bf16.mxu0 0
      %1725 = vmatmul.mubr.bf16.gmra.mrb[0].mxu0 %v1165
      %v1726 = vpop.f32.mrb[0].mxu0
      %v1727 = vadd.f32 %v437, %v1726
      %v1728 = vpop.f32.mrb[0].mxu0
      %v1729 = vpop.f32.mrb[0].mxu0
      %v1730 = vadd.f32 %v437, %v1729
      %v1731 = vpop.f32.mrb[0].mxu0
      %1732 = vmatprep.mubr.bf16.mxu0 0
      %1733 = vmatmul.mubr.bf16.gmra.mrb[0].mxu0 %v1168
      %v1734 = vpop.f32.mrb[0].mxu0
      %v1735 = vadd.f32 %v437, %v1734
      %v1736 = vpop.f32.mrb[0].mxu0
      %v1737 = vpop.f32.mrb[0].mxu0
      %v1738 = vadd.f32 %v437, %v1737
      %v1739 = vpop.f32.mrb[0].mxu0
      %1740 = vmatprep.mubr.bf16.mxu0 0
      %1741 = vmatmul.mubr.bf16.gmra.mrb[0].mxu0 %v1171
      %v1742 = vpop.f32.mrb[0].mxu0
      %v1743 = vadd.f32 %v437, %v1742
      %v1744 = vpop.f32.mrb[0].mxu0
      %v1745 = vpop.f32.mrb[0].mxu0
      %v1746 = vadd.f32 %v437, %v1745
      %v1747 = vpop.f32.mrb[0].mxu0
      %1748 = vmatprep.mubr.bf16.mxu0 0
      %1749 = vmatmul.mubr.bf16.gmra.mrb[0].mxu0 %v1174
      %v1750 = vpop.f32.mrb[0].mxu0
      %v1751 = vadd.f32 %v437, %v1750
      %v1752 = vpop.f32.mrb[0].mxu0
      %v1753 = vpop.f32.mrb[0].mxu0
      %v1754 = vadd.f32 %v437, %v1753
      %v1755 = vpop.f32.mrb[0].mxu0
      %1756 = vmatprep.mubr.bf16.mxu0 0
      %1757 = vmatmul.mubr.bf16.gmra.mrb[0].mxu0 %v1177
      %v1758 = vpop.f32.mrb[0].mxu0
      %v1759 = vadd.f32 %v437, %v1758
      %v1760 = vpop.f32.mrb[0].mxu0
      %v1761 = vpop.f32.mrb[0].mxu0
      %v1762 = vadd.f32 %v437, %v1761
      %v1763 = vpop.f32.mrb[0].mxu0
      %1764 = vmatprep.mubr.bf16.mxu0 0
      %1765 = vmatmul.mubr.bf16.gmra.mrb[0].mxu0 %v1180
      %v1766 = vpop.f32.mrb[0].mxu0
      %v1767 = vadd.f32 %v437, %v1766
      %v1768 = vpop.f32.mrb[0].mxu0
      %v1769 = vpop.f32.mrb[0].mxu0
      %v1770 = vadd.f32 %v437, %v1769
      %v1771 = vpop.f32.mrb[0].mxu0
      %1772 = vmatprep.mubr.bf16.mxu0 0
      %1773 = vmatmul.mubr.bf16.gmra.mrb[0].mxu0 %v1183
      %v1774 = vpop.f32.mrb[0].mxu0
      %v1775 = vadd.f32 %v437, %v1774
      %v1776 = vpop.f32.mrb[0].mxu0
      %v1777 = vpop.f32.mrb[0].mxu0
      %v1778 = vadd.f32 %v437, %v1777
      %v1779 = vpop.f32.mrb[0].mxu0
      %1780 = vmatprep.mubr.bf16.mxu0 0
      %1781 = vmatmul.mubr.bf16.gmra.mrb[0].mxu0 %v1186
      %v1782 = vpop.f32.mrb[0].mxu0
      %v1783 = vadd.f32 %v437, %v1782
      %v1784 = vpop.f32.mrb[0].mxu0
      %v1785 = vpop.f32.mrb[0].mxu0
      %v1786 = vadd.f32 %v437, %v1785
      %v1787 = vpop.f32.mrb[0].mxu0
      %1788 = vmatprep.mubr.bf16.mxu0 0
      %1789 = vmatmul.mubr.bf16.gmra.mrb[0].mxu0 %v1189
      %v1790 = vpop.f32.mrb[0].mxu0
      %v1791 = vadd.f32 %v437, %v1790
      %v1792 = vpop.f32.mrb[0].mxu0
      %v1793 = vpop.f32.mrb[0].mxu0
      %v1794 = vadd.f32 %v437, %v1793
      %v1795 = vpop.f32.mrb[0].mxu0
      %1796 = vmatprep.mubr.bf16.mxu0 0
      %1797 = vmatmul.mubr.bf16.gmra.mrb[0].mxu0 %v1192
      %v1798 = vpop.f32.mrb[0].mxu0
      %v1799 = vadd.f32 %v437, %v1798
      %v1800 = vpop.f32.mrb[0].mxu0
      %v1801 = vpop.f32.mrb[0].mxu0
      %v1802 = vadd.f32 %v437, %v1801
      %v1803 = vpop.f32.mrb[0].mxu0
      %1804 = vmatprep.mubr.bf16.mxu0 0
      %1805 = vmatmul.mubr.bf16.gmra.mrb[0].mxu0 %v1195
      %v1806 = vpop.f32.mrb[0].mxu0
      %v1807 = vadd.f32 %v437, %v1806
      %v1808 = vpop.f32.mrb[0].mxu0
      %v1809 = vpop.f32.mrb[0].mxu0
      %v1810 = vadd.f32 %v437, %v1809
      %v1811 = vpop.f32.mrb[0].mxu0
      %1812 = vmatprep.mubr.bf16.mxu0 0
      %1813 = vmatmul.mubr.bf16.gmra.mrb[0].mxu0 %v1198
      %v1814 = vpop.f32.mrb[0].mxu0
      %v1815 = vadd.f32 %v437, %v1814
      %v1816 = vpop.f32.mrb[0].mxu0
      %v1817 = vpop.f32.mrb[0].mxu0
      %v1818 = vadd.f32 %v437, %v1817
      %v1819 = vpop.f32.mrb[0].mxu0
      %1820 = vmatprep.mubr.bf16.mxu0 0
      %1821 = vmatmul.mubr.bf16.gmra.mrb[0].mxu0 %v1201
      %v1822 = vpop.f32.mrb[0].mxu0
      %v1823 = vadd.f32 %v437, %v1822
      %v1824 = vpop.f32.mrb[0].mxu0
      %v1825 = vpop.f32.mrb[0].mxu0
      %v1826 = vadd.f32 %v437, %v1825
      %v1827 = vpop.f32.mrb[0].mxu0
      %1828 = vmatprep.mubr.bf16.mxu0 0
      %1829 = vmatmul.mubr.bf16.gmra.mrb[0].mxu0 %v1204
      %v1830 = vpop.f32.mrb[0].mxu0
      %v1831 = vadd.f32 %v437, %v1830
      %v1832 = vpop.f32.mrb[0].mxu0
      %v1833 = vpop.f32.mrb[0].mxu0
      %v1834 = vadd.f32 %v437, %v1833
      %v1835 = vpop.f32.mrb[0].mxu0
      %1836 = vmatprep.mubr.bf16.mxu0 0
      %1837 = vmatmul.mubr.bf16.gmra.mrb[0].mxu0 %v1207
      %v1838 = vpop.f32.mrb[0].mxu0
      %v1839 = vadd.f32 %v437, %v1838
      %v1840 = vpop.f32.mrb[0].mxu0
      %v1841 = vpop.f32.mrb[0].mxu0
      %v1842 = vadd.f32 %v437, %v1841
      %v1843 = vpop.f32.mrb[0].mxu0
      %1844 = vmatprep.mubr.bf16.mxu0 0
      %1845 = vmatmul.mubr.bf16.gmra.mrb[0].mxu0 %v1210
      %v1846 = vpop.f32.mrb[0].mxu0
      %v1847 = vadd.f32 %v437, %v1846
      %v1848 = vpop.f32.mrb[0].mxu0
      %v1849 = vpop.f32.mrb[0].mxu0
      %v1850 = vadd.f32 %v437, %v1849
      %v1851 = vpop.f32.mrb[0].mxu0
      %1852 = vmatprep.mubr.bf16.mxu0 0
      %1853 = vmatmul.mubr.bf16.gmra.mrb[0].mxu0 %v1213
      %v1854 = vpop.f32.mrb[0].mxu0
      %v1855 = vadd.f32 %v437, %v1854
      %v1856 = vpop.f32.mrb[0].mxu0
      %v1857 = vpop.f32.mrb[0].mxu0
      %v1858 = vadd.f32 %v437, %v1857
      %v1859 = vpop.f32.mrb[0].mxu0
      %1860 = vmatprep.mubr.bf16.mxu0 0
      %1861 = vmatmul.mubr.bf16.gmra.mrb[0].mxu0 %v1216
      %v1862 = vpop.f32.mrb[0].mxu0
      %v1863 = vadd.f32 %v437, %v1862
      %v1864 = vpop.f32.mrb[0].mxu0
      %v1865 = vpop.f32.mrb[0].mxu0
      %v1866 = vadd.f32 %v437, %v1865
      %v1867 = vpop.f32.mrb[0].mxu0
      %1868 = vmatprep.mubr.bf16.mxu0 0
      %1869 = vmatmul.mubr.bf16.gmra.mrb[0].mxu0 %v1219
      %v1870 = vpop.f32.mrb[0].mxu0
      %v1871 = vadd.f32 %v437, %v1870
      %v1872 = vpop.f32.mrb[0].mxu0
      %v1873 = vpop.f32.mrb[0].mxu0
      %v1874 = vadd.f32 %v437, %v1873
      %v1875 = vpop.f32.mrb[0].mxu0
      %1876 = vmatprep.mubr.bf16.mxu0 0
      %1877 = vmatmul.mubr.bf16.gmra.mrb[0].mxu0 %v1222
      %v1878 = vpop.f32.mrb[0].mxu0
      %v1879 = vadd.f32 %v437, %v1878
      %v1880 = vpop.f32.mrb[0].mxu0
      %v1881 = vpop.f32.mrb[0].mxu0
      %v1882 = vadd.f32 %v437, %v1881
      %v1883 = vpop.f32.mrb[0].mxu0
      %1884 = vmatprep.mubr.bf16.mxu0 0
      %1885 = vmatmul.mubr.bf16.gmra.mrb[0].mxu0 %v1225
      %v1886 = vpop.f32.mrb[0].mxu0
      %v1887 = vadd.f32 %v437, %v1886
      %v1888 = vpop.f32.mrb[0].mxu0
      %v1889 = vpop.f32.mrb[0].mxu0
      %v1890 = vadd.f32 %v437, %v1889
      %v1891 = vpop.f32.mrb[0].mxu0
      %1892 = vmatprep.mubr.bf16.mxu0 0
      %1893 = vmatmul.mubr.bf16.gmra.mrb[0].mxu0 %v1228
      %v1894 = vpop.f32.mrb[0].mxu0
      %v1895 = vadd.f32 %v437, %v1894
      %v1896 = vpop.f32.mrb[0].mxu0
      %v1897 = vpop.f32.mrb[0].mxu0
      %v1898 = vadd.f32 %v437, %v1897
      %v1899 = vpop.f32.mrb[0].mxu0
      %1900 = vmatprep.mubr.bf16.mxu0 0
      %1901 = vmatmul.mubr.bf16.gmra.mrb[0].mxu0 %v1231
      %v1902 = vpop.f32.mrb[0].mxu0
      %v1903 = vadd.f32 %v437, %v1902
      %v1904 = vpop.f32.mrb[0].mxu0
      %v1905 = vpop.f32.mrb[0].mxu0
      %v1906 = vadd.f32 %v437, %v1905
      %v1907 = vpop.f32.mrb[0].mxu0
      %1908 = vmatprep.mubr.bf16.mxu0 0
      %1909 = vmatmul.mubr.bf16.gmra.mrb[0].mxu0 %v1234
      %v1910 = vpop.f32.mrb[0].mxu0
      %v1911 = vadd.f32 %v437, %v1910
      %v1912 = vpop.f32.mrb[0].mxu0
      %v1913 = vpop.f32.mrb[0].mxu0
      %v1914 = vadd.f32 %v437, %v1913
      %v1915 = vpop.f32.mrb[0].mxu0
      %1916 = vmatprep.mubr.bf16.mxu0 0
      %1917 = vmatmul.mubr.bf16.gmra.mrb[0].mxu0 %v1237
      %v1918 = vpop.f32.mrb[0].mxu0
      %v1919 = vadd.f32 %v437, %v1918
      %v1920 = vpop.f32.mrb[0].mxu0
      %v1921 = vpop.f32.mrb[0].mxu0
      %v1922 = vadd.f32 %v437, %v1921
      %v1923 = vpop.f32.mrb[0].mxu0
      %1924 = vmatprep.mubr.bf16.mxu0 0
      %1925 = vmatmul.mubr.bf16.gmra.mrb[0].mxu0 %v1240
      %v1926 = vpop.f32.mrb[0].mxu0
      %v1927 = vadd.f32 %v437, %v1926
      %v1928 = vpop.f32.mrb[0].mxu0
      %v1929 = vpop.f32.mrb[0].mxu0
      %v1930 = vadd.f32 %v437, %v1929
      %v1931 = vpop.f32.mrb[0].mxu0
      %1932 = vmatprep.mubr.bf16.mxu0 0
      %1933 = vmatmul.mubr.bf16.gmra.mrb[0].mxu0 %v1243
      %v1934 = vpop.f32.mrb[0].mxu0
      %v1935 = vadd.f32 %v437, %v1934
      %v1936 = vpop.f32.mrb[0].mxu0
      %v1937 = vpop.f32.mrb[0].mxu0
      %v1938 = vadd.f32 %v437, %v1937
      %v1939 = vpop.f32.mrb[0].mxu0
      %1940 = vmatprep.mubr.bf16.mxu0 0
      %1941 = vmatmul.mubr.bf16.gmra.mrb[0].mxu0 %v1246
      %v1942 = vpop.f32.mrb[0].mxu0
      %v1943 = vadd.f32 %v437, %v1942
      %v1944 = vpop.f32.mrb[0].mxu0
      %v1945 = vpop.f32.mrb[0].mxu0
      %v1946 = vadd.f32 %v437, %v1945
      %v1947 = vpop.f32.mrb[0].mxu0
      %1948 = vmatprep.mubr.bf16.mxu0 0
      %1949 = vmatmul.mubr.bf16.gmra.mrb[0].mxu0 %v1249
      %v1950 = vpop.f32.mrb[0].mxu0
      %v1951 = vadd.f32 %v437, %v1950
      %v1952 = vpop.f32.mrb[0].mxu0
      %v1953 = vpop.f32.mrb[0].mxu0
      %v1954 = vadd.f32 %v437, %v1953
      %v1955 = vpop.f32.mrb[0].mxu0
      %1956 = vmatprep.mubr.bf16.mxu0 0
      %1957 = vmatmul.mubr.bf16.gmra.mrb[0].mxu0 %v1252
      %v1958 = vpop.f32.mrb[0].mxu0
      %v1959 = vadd.f32 %v437, %v1958
      %v1960 = vpop.f32.mrb[0].mxu0
      %v1961 = vpop.f32.mrb[0].mxu0
      %v1962 = vadd.f32 %v437, %v1961
      %v1963 = vpop.f32.mrb[0].mxu0
      %1964 = vmatprep.mubr.bf16.mxu0 0
      %1965 = vmatmul.mubr.bf16.gmra.mrb[0].mxu0 %v1255
      %v1966 = vpop.f32.mrb[0].mxu0
      %v1967 = vadd.f32 %v437, %v1966
      %v1968 = vpop.f32.mrb[0].mxu0
      %v1969 = vpop.f32.mrb[0].mxu0
      %v1970 = vadd.f32 %v437, %v1969
      %v1971 = vpop.f32.mrb[0].mxu0
      %1972 = vmatprep.mubr.bf16.mxu0 0
      %1973 = vmatmul.mubr.bf16.gmra.mrb[0].mxu0 %v1258
      %v1974 = vpop.f32.mrb[0].mxu0
      %v1975 = vadd.f32 %v437, %v1974
      %v1976 = vpop.f32.mrb[0].mxu0
      %v1977 = vpop.f32.mrb[0].mxu0
      %v1978 = vadd.f32 %v437, %v1977
      %v1979 = vpop.f32.mrb[0].mxu0
      %1980 = vmatprep.mubr.bf16.mxu0 0
      %1981 = vmatmul.mubr.bf16.gmra.mrb[0].mxu0 %v1261
      %v1982 = vpop.f32.mrb[0].mxu0
      %v1983 = vadd.f32 %v437, %v1982
      %v1984 = vpop.f32.mrb[0].mxu0
      %v1985 = vpop.f32.mrb[0].mxu0
      %v1986 = vadd.f32 %v437, %v1985
      %v1987 = vpop.f32.mrb[0].mxu0
      %1988 = vmatprep.mubr.bf16.mxu0 0
      %1989 = vmatmul.mubr.bf16.gmra.mrb[0].mxu0 %v1264
      %v1990 = vpop.f32.mrb[0].mxu0
      %v1991 = vadd.f32 %v437, %v1990
      %v1992 = vpop.f32.mrb[0].mxu0
      %v1993 = vpop.f32.mrb[0].mxu0
      %v1994 = vadd.f32 %v437, %v1993
      %v1995 = vpop.f32.mrb[0].mxu0
      %1996 = vmatprep.mubr.bf16.mxu0 0
      %1997 = vmatmul.mubr.bf16.gmra.mrb[0].mxu0 %v1267
      %v1998 = vpop.f32.mrb[0].mxu0
      %v1999 = vadd.f32 %v437, %v1998
      %v2000 = vpop.f32.mrb[0].mxu0
      %v2001 = vpop.f32.mrb[0].mxu0
      %v2002 = vadd.f32 %v437, %v2001
      %v2003 = vpop.f32.mrb[0].mxu0
      %2004 = vmatprep.mubr.bf16.mxu0 0
      %2005 = vmatmul.mubr.bf16.gmra.mrb[0].mxu0 %v1270
      %v2006 = vpop.f32.mrb[0].mxu0
      %v2007 = vadd.f32 %v437, %v2006
      %v2008 = vpop.f32.mrb[0].mxu0
      %v2009 = vpop.f32.mrb[0].mxu0
      %v2010 = vadd.f32 %v437, %v2009
      %v2011 = vpop.f32.mrb[0].mxu0
      %2012 = vmatprep.mubr.bf16.mxu0 0
      %2013 = vmatmul.mubr.bf16.gmra.mrb[0].mxu0 %v1273
      %v2014 = vpop.f32.mrb[0].mxu0
      %v2015 = vadd.f32 %v437, %v2014
      %v2016 = vpop.f32.mrb[0].mxu0
      %v2017 = vpop.f32.mrb[0].mxu0
      %v2018 = vadd.f32 %v437, %v2017
      %v2019 = vpop.f32.mrb[0].mxu0
      %2020 = vmatprep.mubr.bf16.mxu0 0
      %2021 = vmatmul.mubr.bf16.gmra.mrb[0].mxu0 %v1276
      %v2022 = vpop.f32.mrb[0].mxu0
      %v2023 = vadd.f32 %v437, %v2022
      %v2024 = vpop.f32.mrb[0].mxu0
      %v2025 = vpop.f32.mrb[0].mxu0
      %v2026 = vadd.f32 %v437, %v2025
      %v2027 = vpop.f32.mrb[0].mxu0
      %2028 = vmatprep.mubr.bf16.mxu0 0
      %2029 = vmatmul.mubr.bf16.gmra.mrb[0].mxu0 %v1279
      %v2030 = vpop.f32.mrb[0].mxu0
      %v2031 = vadd.f32 %v437, %v2030
      %v2032 = vpop.f32.mrb[0].mxu0
      %v2033 = vpop.f32.mrb[0].mxu0
      %v2034 = vadd.f32 %v437, %v2033
      %v2035 = vpop.f32.mrb[0].mxu0
      %2036 = vmatprep.mubr.bf16.mxu0 0
      %2037 = vmatmul.mubr.bf16.gmra.mrb[0].mxu0 %v1282
      %v2038 = vpop.f32.mrb[0].mxu0
      %v2039 = vadd.f32 %v437, %v2038
      %v2040 = vpop.f32.mrb[0].mxu0
      %v2041 = vpop.f32.mrb[0].mxu0
      %v2042 = vadd.f32 %v437, %v2041
      %v2043 = vpop.f32.mrb[0].mxu0
      %2044 = vmatprep.mubr.bf16.mxu0 0
      %2045 = vmatmul.mubr.bf16.gmra.mrb[0].mxu0 %v1285
      %v2046 = vpop.f32.mrb[0].mxu0
      %v2047 = vadd.f32 %v437, %v2046
      %v2048 = vpop.f32.mrb[0].mxu0
      %v2049 = vpop.f32.mrb[0].mxu0
      %v2050 = vadd.f32 %v437, %v2049
      %v2051 = vpop.f32.mrb[0].mxu0
      %2052 = vmatprep.mubr.bf16.mxu0 0
      %2053 = vmatmul.mubr.bf16.gmra.mrb[0].mxu0 %v1288
      %v2054 = vpop.f32.mrb[0].mxu0
      %v2055 = vadd.f32 %v437, %v2054
      %v2056 = vpop.f32.mrb[0].mxu0
      %v2057 = vpop.f32.mrb[0].mxu0
      %v2058 = vadd.f32 %v437, %v2057
      %v2059 = vpop.f32.mrb[0].mxu0
      %2060 = vmatprep.mubr.bf16.mxu0 0
      %2061 = vmatmul.mubr.bf16.gmra.mrb[0].mxu0 %v1291
      %v2062 = vpop.f32.mrb[0].mxu0
      %v2063 = vadd.f32 %v437, %v2062
      %v2064 = vpop.f32.mrb[0].mxu0
      %v2065 = vpop.f32.mrb[0].mxu0
      %v2066 = vadd.f32 %v437, %v2065
      %v2067 = vpop.f32.mrb[0].mxu0
      %2068 = vmatprep.mubr.bf16.mxu0 0
      %2069 = vmatmul.mubr.bf16.gmra.mrb[0].mxu0 %v1294
      %v2070 = vpop.f32.mrb[0].mxu0
      %v2071 = vadd.f32 %v437, %v2070
      %v2072 = vpop.f32.mrb[0].mxu0
      %v2073 = vpop.f32.mrb[0].mxu0
      %v2074 = vadd.f32 %v437, %v2073
      %v2075 = vpop.f32.mrb[0].mxu0
      %2076 = vmatprep.mubr.bf16.mxu0 0
      %2077 = vmatmul.mubr.bf16.gmra.mrb[0].mxu0 %v1297
      %v2078 = vpop.f32.mrb[0].mxu0
      %v2079 = vadd.f32 %v437, %v2078
      %v2080 = vpop.f32.mrb[0].mxu0
      %v2081 = vpop.f32.mrb[0].mxu0
      %v2082 = vadd.f32 %v437, %v2081
      %v2083 = vpop.f32.mrb[0].mxu0
      %2084 = vmatprep.mubr.bf16.mxu0 0
      %2085 = vmatmul.mubr.bf16.gmra.mrb[0].mxu0 %v1300
      %v2086 = vpop.f32.mrb[0].mxu0
      %v2087 = vadd.f32 %v437, %v2086
      %v2088 = vpop.f32.mrb[0].mxu0
      %v2089 = vpop.f32.mrb[0].mxu0
      %v2090 = vadd.f32 %v437, %v2089
      %v2091 = vpop.f32.mrb[0].mxu0
      %2092 = vmatprep.mubr.bf16.mxu0 0
      %2093 = vmatmul.mubr.bf16.gmra.mrb[0].mxu0 %v1303
      %v2094 = vpop.f32.mrb[0].mxu0
      %v2095 = vadd.f32 %v437, %v2094
      %v2096 = vpop.f32.mrb[0].mxu0
      %v2097 = vpop.f32.mrb[0].mxu0
      %v2098 = vadd.f32 %v437, %v2097
      %v2099 = vpop.f32.mrb[0].mxu0
      %2100 = vmatprep.mubr.bf16.mxu0 0
      %2101 = vmatmul.mubr.bf16.gmra.mrb[0].mxu0 %v1306
      %v2102 = vpop.f32.mrb[0].mxu0
      %v2103 = vadd.f32 %v437, %v2102
      %v2104 = vpop.f32.mrb[0].mxu0
      %v2105 = vpop.f32.mrb[0].mxu0
      %v2106 = vadd.f32 %v437, %v2105
      %v2107 = vpop.f32.mrb[0].mxu0
      %2108 = vmatprep.mubr.bf16.mxu0 0
      %2109 = vmatmul.mubr.bf16.gmra.mrb[0].mxu0 %v1309
      %v2110 = vpop.f32.mrb[0].mxu0
      %v2111 = vadd.f32 %v437, %v2110
      %v2112 = vpop.f32.mrb[0].mxu0
      %v2113 = vpop.f32.mrb[0].mxu0
      %v2114 = vadd.f32 %v437, %v2113
      %v2115 = vpop.f32.mrb[0].mxu0
      %2116 = vmatprep.mubr.bf16.mxu0 0
      %2117 = vmatmul.mubr.bf16.gmra.mrb[0].mxu0 %v1312
      %v2118 = vpop.f32.mrb[0].mxu0
      %v2119 = vadd.f32 %v437, %v2118
      %v2120 = vpop.f32.mrb[0].mxu0
      %v2121 = vpop.f32.mrb[0].mxu0
      %v2122 = vadd.f32 %v437, %v2121
      %v2123 = vpop.f32.mrb[0].mxu0
      %2124 = vmatprep.mubr.bf16.mxu0 0
      %2125 = vmatmul.mubr.bf16.gmra.mrb[0].mxu0 %v1315
      %v2126 = vpop.f32.mrb[0].mxu0
      %v2127 = vadd.f32 %v437, %v2126
      %v2128 = vpop.f32.mrb[0].mxu0
      %v2129 = vpop.f32.mrb[0].mxu0
      %v2130 = vadd.f32 %v437, %v2129
      %v2131 = vpop.f32.mrb[0].mxu0
      %2132 = vmatprep.mubr.bf16.mxu0 0
      %2133 = vmatmul.mubr.bf16.gmra.mrb[0].mxu0 %v1318
      %v2134 = vpop.f32.mrb[0].mxu0
      %v2135 = vadd.f32 %v437, %v2134
      %v2136 = vpop.f32.mrb[0].mxu0
      %v2137 = vpop.f32.mrb[0].mxu0
      %v2138 = vadd.f32 %v437, %v2137
      %v2139 = vpop.f32.mrb[0].mxu0
      %2140 = vmatprep.mubr.bf16.mxu0 0
      %2141 = vmatmul.mubr.bf16.gmra.mrb[0].mxu0 %v1321
      %v2142 = vpop.f32.mrb[0].mxu0
      %v2143 = vadd.f32 %v437, %v2142
      %v2144 = vpop.f32.mrb[0].mxu0
      %v2145 = vpop.f32.mrb[0].mxu0
      %v2146 = vadd.f32 %v437, %v2145
      %v2147 = vpop.f32.mrb[0].mxu0
      %2148 = vmatprep.mubr.bf16.mxu0 0
      %2149 = vmatmul.mubr.bf16.gmra.mrb[0].mxu0 %v1324
      %v2150 = vpop.f32.mrb[0].mxu0
      %v2151 = vadd.f32 %v437, %v2150
      %v2152 = vpop.f32.mrb[0].mxu0
      %v2153 = vpop.f32.mrb[0].mxu0
      %v2154 = vadd.f32 %v437, %v2153
      %v2155 = vpop.f32.mrb[0].mxu0
      %2156 = vmatprep.mubr.bf16.mxu0 0
      %2157 = vmatmul.mubr.bf16.gmra.mrb[0].mxu0 %v1327
      %v2158 = vpop.f32.mrb[0].mxu0
      %v2159 = vadd.f32 %v437, %v2158
      %v2160 = vpop.f32.mrb[0].mxu0
      %v2161 = vpop.f32.mrb[0].mxu0
      %v2162 = vadd.f32 %v437, %v2161
      %v2163 = vpop.f32.mrb[0].mxu0
      %2164 = vmatprep.mubr.bf16.mxu0 0
      %2165 = vmatmul.mubr.bf16.gmra.mrb[0].mxu0 %v1330
      %v2166 = vpop.f32.mrb[0].mxu0
      %v2167 = vadd.f32 %v437, %v2166
      %v2168 = vpop.f32.mrb[0].mxu0
      %v2169 = vpop.f32.mrb[0].mxu0
      %v2170 = vadd.f32 %v437, %v2169
      %v2171 = vpop.f32.mrb[0].mxu0
      %2172 = vmatprep.mubr.bf16.mxu0 0
      %2173 = vmatmul.mubr.bf16.gmra.mrb[0].mxu0 %v1333
      %v2174 = vpop.f32.mrb[0].mxu0
      %v2175 = vadd.f32 %v437, %v2174
      %v2176 = vpop.f32.mrb[0].mxu0
      %v2177 = vpop.f32.mrb[0].mxu0
      %v2178 = vadd.f32 %v437, %v2177
      %v2179 = vpop.f32.mrb[0].mxu0
      %2180 = vmatprep.mubr.bf16.mxu0 0
      %2181 = vmatmul.mubr.bf16.gmra.mrb[0].mxu0 %v1336
      %v2182 = vpop.f32.mrb[0].mxu0
      %v2183 = vadd.f32 %v437, %v2182
      %v2184 = vpop.f32.mrb[0].mxu0
      %v2185 = vpop.f32.mrb[0].mxu0
      %v2186 = vadd.f32 %v437, %v2185
      %v2187 = vpop.f32.mrb[0].mxu0
      %2188 = vmatprep.mubr.bf16.mxu0 0
      %2189 = vmatmul.mubr.bf16.gmra.mrb[0].mxu0 %v1339
      %v2190 = vpop.f32.mrb[0].mxu0
      %v2191 = vadd.f32 %v437, %v2190
      %v2192 = vpop.f32.mrb[0].mxu0
      %v2193 = vpop.f32.mrb[0].mxu0
      %v2194 = vadd.f32 %v437, %v2193
      %v2195 = vpop.f32.mrb[0].mxu0
      %2196 = vmatprep.mubr.bf16.mxu0 0
      %2197 = vmatmul.mubr.bf16.gmra.mrb[0].mxu0 %v1342
      %v2198 = vpop.f32.mrb[0].mxu0
      %v2199 = vadd.f32 %v437, %v2198
      %v2200 = vpop.f32.mrb[0].mxu0
      %v2201 = vpop.f32.mrb[0].mxu0
      %v2202 = vadd.f32 %v437, %v2201
      %v2203 = vpop.f32.mrb[0].mxu0
      %2204 = vmatprep.mubr.bf16.mxu0 0
      %2205 = vmatmul.mubr.bf16.gmra.mrb[0].mxu0 %v1345
      %v2206 = vpop.f32.mrb[0].mxu0
      %v2207 = vadd.f32 %v437, %v2206
      %v2208 = vpop.f32.mrb[0].mxu0
      %v2209 = vpop.f32.mrb[0].mxu0
      %v2210 = vadd.f32 %v437, %v2209
      %v2211 = vpop.f32.mrb[0].mxu0
      %2212 = vmatprep.mubr.bf16.mxu0 0
      %2213 = vmatmul.mubr.bf16.gmra.mrb[0].mxu0 %v1348
      %v2214 = vpop.f32.mrb[0].mxu0
      %v2215 = vadd.f32 %v437, %v2214
      %v2216 = vpop.f32.mrb[0].mxu0
      %v2217 = vpop.f32.mrb[0].mxu0
      %v2218 = vadd.f32 %v437, %v2217
      %v2219 = vpop.f32.mrb[0].mxu0
      %2220 = vmatprep.mubr.bf16.mxu0 0
      %2221 = vmatmul.mubr.bf16.gmra.mrb[0].mxu0 %v1351
      %v2222 = vpop.f32.mrb[0].mxu0
      %v2223 = vadd.f32 %v437, %v2222
      %v2224 = vpop.f32.mrb[0].mxu0
      %v2225 = vpop.f32.mrb[0].mxu0
      %v2226 = vadd.f32 %v437, %v2225
      %v2227 = vpop.f32.mrb[0].mxu0
      %2228 = vmatprep.mubr.bf16.mxu0 0
      %2229 = vmatmul.mubr.bf16.gmra.mrb[0].mxu0 %v1354
      %v2230 = vpop.f32.mrb[0].mxu0
      %v2231 = vadd.f32 %v437, %v2230
      %v2232 = vpop.f32.mrb[0].mxu0
      %v2233 = vpop.f32.mrb[0].mxu0
      %v2234 = vadd.f32 %v437, %v2233
      %v2235 = vpop.f32.mrb[0].mxu0
      %2236 = vmatprep.mubr.bf16.mxu0 0
      %2237 = vmatmul.mubr.bf16.gmra.mrb[0].mxu0 %v1357
      %v2238 = vpop.f32.mrb[0].mxu0
      %v2239 = vadd.f32 %v437, %v2238
      %v2240 = vpop.f32.mrb[0].mxu0
      %v2241 = vpop.f32.mrb[0].mxu0
      %v2242 = vadd.f32 %v437, %v2241
      %v2243 = vpop.f32.mrb[0].mxu0
      %2244 = vmatprep.mubr.bf16.mxu0 0
      %2245 = vmatmul.mubr.bf16.gmra.mrb[0].mxu0 %v1360
      %v2246 = vpop.f32.mrb[0].mxu0
      %v2247 = vadd.f32 %v437, %v2246
      %v2248 = vpop.f32.mrb[0].mxu0
      %v2249 = vpop.f32.mrb[0].mxu0
      %v2250 = vadd.f32 %v437, %v2249
      %v2251 = vpop.f32.mrb[0].mxu0
      %2252 = vmatprep.mubr.bf16.mxu0 0
      %2253 = vmatmul.mubr.bf16.gmra.mrb[0].mxu0 %v1363
      %v2254 = vpop.f32.mrb[0].mxu0
      %v2255 = vadd.f32 %v437, %v2254
      %v2256 = vpop.f32.mrb[0].mxu0
      %v2257 = vpop.f32.mrb[0].mxu0
      %v2258 = vadd.f32 %v437, %v2257
      %v2259 = vpop.f32.mrb[0].mxu0
      %2260 = vmatprep.mubr.bf16.mxu0 0
      %2261 = vmatmul.mubr.bf16.gmra.mrb[0].mxu0 %v1366
      %v2262 = vpop.f32.mrb[0].mxu0
      %v2263 = vadd.f32 %v437, %v2262
      %v2264 = vpop.f32.mrb[0].mxu0
      %v2265 = vpop.f32.mrb[0].mxu0
      %v2266 = vadd.f32 %v437, %v2265
      %v2267 = vpop.f32.mrb[0].mxu0
      %2268 = vmatprep.mubr.bf16.mxu0 0
      %2269 = vmatmul.mubr.bf16.gmra.mrb[0].mxu0 %v1369
      %v2270 = vpop.f32.mrb[0].mxu0
      %v2271 = vadd.f32 %v437, %v2270
      %v2272 = vpop.f32.mrb[0].mxu0
      %v2273 = vpop.f32.mrb[0].mxu0
      %v2274 = vadd.f32 %v437, %v2273
      %v2275 = vpop.f32.mrb[0].mxu0
      %2276 = vmatprep.mubr.bf16.mxu0 0
      %2277 = vmatmul.mubr.bf16.gmra.mrb[0].mxu0 %v1372
      %v2278 = vpop.f32.mrb[0].mxu0
      %v2279 = vadd.f32 %v437, %v2278
      %v2280 = vpop.f32.mrb[0].mxu0
      %v2281 = vpop.f32.mrb[0].mxu0
      %v2282 = vadd.f32 %v437, %v2281
      %v2283 = vpop.f32.mrb[0].mxu0
      %2284 = vmatprep.mubr.bf16.mxu0 0
      %2285 = vmatmul.mubr.bf16.gmra.mrb[0].mxu0 %v1375
      %v2286 = vpop.f32.mrb[0].mxu0
      %v2287 = vadd.f32 %v437, %v2286
      %v2288 = vpop.f32.mrb[0].mxu0
      %v2289 = vpop.f32.mrb[0].mxu0
      %v2290 = vadd.f32 %v437, %v2289
      %v2291 = vpop.f32.mrb[0].mxu0
      %2292 = vmatprep.mubr.bf16.mxu0 0
      %2293 = vmatmul.mubr.bf16.gmra.mrb[0].mxu0 %v1378
      %v2294 = vpop.f32.mrb[0].mxu0
      %v2295 = vadd.f32 %v437, %v2294
      %v2296 = vpop.f32.mrb[0].mxu0
      %v2297 = vpop.f32.mrb[0].mxu0
      %v2298 = vadd.f32 %v437, %v2297
      %v2299 = vpop.f32.mrb[0].mxu0
      %2300 = vmatprep.mubr.bf16.mxu0 0
      %2301 = vmatmul.mubr.bf16.gmra.mrb[0].mxu0 %v1381
      %v2302 = vpop.f32.mrb[0].mxu0
      %v2303 = vadd.f32 %v437, %v2302
      %v2304 = vpop.f32.mrb[0].mxu0
      %v2305 = vpop.f32.mrb[0].mxu0
      %v2306 = vadd.f32 %v437, %v2305
      %v2307 = vpop.f32.mrb[0].mxu0
      %2308 = vmatprep.mubr.bf16.mxu0 0
      %2309 = vmatmul.mubr.bf16.gmra.mrb[0].mxu0 %v1384
      %v2310 = vpop.f32.mrb[0].mxu0
      %v2311 = vadd.f32 %v437, %v2310
      %v2312 = vpop.f32.mrb[0].mxu0
      %v2313 = vpop.f32.mrb[0].mxu0
      %v2314 = vadd.f32 %v437, %v2313
      %v2315 = vpop.f32.mrb[0].mxu0
      %2316 = vmatprep.mubr.bf16.mxu0 0
      %2317 = vmatmul.mubr.bf16.gmra.mrb[0].mxu0 %v1387
      %v2318 = vpop.f32.mrb[0].mxu0
      %v2319 = vadd.f32 %v437, %v2318
      %v2320 = vpop.f32.mrb[0].mxu0
      %v2321 = vpop.f32.mrb[0].mxu0
      %v2322 = vadd.f32 %v437, %v2321
      %v2323 = vpop.f32.mrb[0].mxu0
      %2324 = vmatprep.mubr.bf16.mxu0 0
      %2325 = vmatmul.mubr.bf16.gmra.mrb[0].mxu0 %v1390
      %v2326 = vpop.f32.mrb[0].mxu0
      %v2327 = vadd.f32 %v437, %v2326
      %v2328 = vpop.f32.mrb[0].mxu0
      %v2329 = vpop.f32.mrb[0].mxu0
      %v2330 = vadd.f32 %v437, %v2329
      %v2331 = vpop.f32.mrb[0].mxu0
      %2332 = vmatprep.mubr.bf16.mxu0 0
      %2333 = vmatmul.mubr.bf16.gmra.mrb[0].mxu0 %v1393
      %v2334 = vpop.f32.mrb[0].mxu0
      %v2335 = vadd.f32 %v437, %v2334
      %v2336 = vpop.f32.mrb[0].mxu0
      %v2337 = vpop.f32.mrb[0].mxu0
      %v2338 = vadd.f32 %v437, %v2337
      %v2339 = vpop.f32.mrb[0].mxu0
      %2340 = vmatprep.mubr.bf16.mxu0 0
      %2341 = vmatmul.mubr.bf16.gmra.mrb[0].mxu0 %v1396
      %v2342 = vpop.f32.mrb[0].mxu0
      %v2343 = vadd.f32 %v437, %v2342
      %v2344 = vpop.f32.mrb[0].mxu0
      %v2345 = vpop.f32.mrb[0].mxu0
      %v2346 = vadd.f32 %v437, %v2345
      %v2347 = vpop.f32.mrb[0].mxu0
      %2348 = vmatprep.mubr.bf16.mxu0 0
      %2349 = vmatmul.mubr.bf16.gmra.mrb[0].mxu0 %v1399
      %v2350 = vpop.f32.mrb[0].mxu0
      %v2351 = vadd.f32 %v437, %v2350
      %v2352 = vpop.f32.mrb[0].mxu0
      %v2353 = vpop.f32.mrb[0].mxu0
      %v2354 = vadd.f32 %v437, %v2353
      %v2355 = vpop.f32.mrb[0].mxu0
      %2356 = vmatprep.mubr.bf16.mxu0 0
      %2357 = vmatmul.mubr.bf16.gmra.mrb[0].mxu0 %v1402
      %v2358 = vpop.f32.mrb[0].mxu0
      %v2359 = vadd.f32 %v437, %v2358
      %v2360 = vpop.f32.mrb[0].mxu0
      %v2361 = vpop.f32.mrb[0].mxu0
      %v2362 = vadd.f32 %v437, %v2361
      %v2363 = vpop.f32.mrb[0].mxu0
      %2364 = vmatprep.mubr.bf16.mxu0 0
      %2365 = vmatmul.mubr.bf16.gmra.mrb[0].mxu0 %v1405
      %v2366 = vpop.f32.mrb[0].mxu0
      %v2367 = vadd.f32 %v437, %v2366
      %v2368 = vpop.f32.mrb[0].mxu0
      %v2369 = vpop.f32.mrb[0].mxu0
      %v2370 = vadd.f32 %v437, %v2369
      %v2371 = vpop.f32.mrb[0].mxu0
      %2372 = vmatprep.mubr.bf16.mxu0 0
      %2373 = vmatmul.mubr.bf16.gmra.mrb[0].mxu0 %v1408
      %v2374 = vpop.f32.mrb[0].mxu0
      %v2375 = vadd.f32 %v437, %v2374
      %v2376 = vpop.f32.mrb[0].mxu0
      %v2377 = vpop.f32.mrb[0].mxu0
      %v2378 = vadd.f32 %v437, %v2377
      %v2379 = vpop.f32.mrb[0].mxu0
      %2380 = vmatprep.mubr.bf16.mxu0 0
      %2381 = vmatmul.mubr.bf16.gmra.mrb[0].mxu0 %v1411
      %v2382 = vpop.f32.mrb[0].mxu0
      %v2383 = vadd.f32 %v437, %v2382
      %v2384 = vpop.f32.mrb[0].mxu0
      %v2385 = vpop.f32.mrb[0].mxu0
      %v2386 = vadd.f32 %v437, %v2385
      %v2387 = vpop.f32.mrb[0].mxu0
      %2388 = vmatprep.mubr.bf16.mxu0 0
      %2389 = vmatmul.mubr.bf16.gmra.mrb[0].mxu0 %v1414
      %v2390 = vpop.f32.mrb[0].mxu0
      %v2391 = vadd.f32 %v437, %v2390
      %v2392 = vpop.f32.mrb[0].mxu0
      %v2393 = vpop.f32.mrb[0].mxu0
      %v2394 = vadd.f32 %v437, %v2393
      %v2395 = vpop.f32.mrb[0].mxu0
      %2396 = vmatprep.mubr.bf16.mxu0 0
      %2397 = vmatmul.mubr.bf16.gmra.mrb[0].mxu0 %v1417
      %v2398 = vpop.f32.mrb[0].mxu0
      %v2399 = vadd.f32 %v437, %v2398
      %v2400 = vpop.f32.mrb[0].mxu0
      %v2401 = vpop.f32.mrb[0].mxu0
      %v2402 = vadd.f32 %v437, %v2401
      %v2403 = vpop.f32.mrb[0].mxu0
      %2404 = vmatprep.mubr.bf16.mxu0 0
      %2405 = vmatmul.mubr.bf16.gmra.mrb[0].mxu0 %v1420
      %v2406 = vpop.f32.mrb[0].mxu0
      %v2407 = vadd.f32 %v437, %v2406
      %v2408 = vpop.f32.mrb[0].mxu0
      %v2409 = vpop.f32.mrb[0].mxu0
      %v2410 = vadd.f32 %v437, %v2409
      %v2411 = vpop.f32.mrb[0].mxu0
      %2412 = vmatprep.mubr.bf16.mxu0 0
      %2413 = vmatmul.mubr.bf16.gmra.mrb[0].mxu0 %v1423
      %v2414 = vpop.f32.mrb[0].mxu0
      %v2415 = vadd.f32 %v437, %v2414
      %v2416 = vpop.f32.mrb[0].mxu0
      %v2417 = vpop.f32.mrb[0].mxu0
      %v2418 = vadd.f32 %v437, %v2417
      %v2419 = vpop.f32.mrb[0].mxu0
      %2420 = vmatprep.mubr.bf16.mxu0 0
      %2421 = vmatmul.mubr.bf16.gmra.mrb[0].mxu0 %v1426
      %v2422 = vpop.f32.mrb[0].mxu0
      %v2423 = vadd.f32 %v437, %v2422
      %v2424 = vpop.f32.mrb[0].mxu0
      %v2425 = vpop.f32.mrb[0].mxu0
      %v2426 = vadd.f32 %v437, %v2425
      %v2427 = vpop.f32.mrb[0].mxu0
      %2428 = vmatprep.mubr.bf16.mxu0 0
      %2429 = vmatmul.mubr.bf16.gmra.mrb[0].mxu0 %v1429
      %v2430 = vpop.f32.mrb[0].mxu0
      %v2431 = vadd.f32 %v437, %v2430
      %v2432 = vpop.f32.mrb[0].mxu0
      %v2433 = vpop.f32.mrb[0].mxu0
      %v2434 = vadd.f32 %v437, %v2433
      %v2435 = vpop.f32.mrb[0].mxu0
      %2436 = vmatprep.mubr.bf16.mxu0 0
      %2437 = vmatmul.mubr.bf16.gmra.mrb[0].mxu0 %v1432
      %v2438 = vpop.f32.mrb[0].mxu0
      %v2439 = vadd.f32 %v437, %v2438
      %v2440 = vpop.f32.mrb[0].mxu0
      %v2441 = vpop.f32.mrb[0].mxu0
      %v2442 = vadd.f32 %v437, %v2441
      %v2443 = vpop.f32.mrb[0].mxu0
      %2444 = vmatprep.mubr.bf16.mxu0 0
      %2445 = vmatmul.mubr.bf16.gmra.mrb[0].mxu0 %v1435
      %v2446 = vpop.f32.mrb[0].mxu0
      %v2447 = vadd.f32 %v437, %v2446
      %v2448 = vpop.f32.mrb[0].mxu0
      %v2449 = vpop.f32.mrb[0].mxu0
      %v2450 = vadd.f32 %v437, %v2449
      %v2451 = vpop.f32.mrb[0].mxu0
      %2452 = vmatprep.mubr.bf16.mxu0 0
      %2453 = vmatmul.mubr.bf16.gmra.mrb[0].mxu0 %v1438
      %v2454 = vpop.f32.mrb[0].mxu0
      %v2455 = vadd.f32 %v437, %v2454
      %v2456 = vpop.f32.mrb[0].mxu0
      %v2457 = vpop.f32.mrb[0].mxu0
      %v2458 = vadd.f32 %v437, %v2457
      %v2459 = vpop.f32.mrb[0].mxu0
      %2460 = vmatprep.mubr.bf16.mxu0 0
      %2461 = vmatmul.mubr.bf16.gmra.mrb[0].mxu0 %v1441
      %v2462 = vpop.f32.mrb[0].mxu0
      %v2463 = vadd.f32 %v437, %v2462
      %v2464 = vpop.f32.mrb[0].mxu0
      %v2465 = vpop.f32.mrb[0].mxu0
      %v2466 = vadd.f32 %v437, %v2465
      %v2467 = vpop.f32.mrb[0].mxu0
      %2468 = vmatprep.mubr.bf16.mxu0 0
      %2469 = vmatmul.mubr.bf16.gmra.mrb[0].mxu0 %v1444
      %v2470 = vpop.f32.mrb[0].mxu0
      %v2471 = vadd.f32 %v437, %v2470
      %v2472 = vpop.f32.mrb[0].mxu0
      %v2473 = vpop.f32.mrb[0].mxu0
      %v2474 = vadd.f32 %v437, %v2473
      %v2475 = vpop.f32.mrb[0].mxu0
      %2476 = vmatprep.mubr.bf16.mxu0 0
      %2477 = vmatmul.mubr.bf16.gmra.mrb[0].mxu0 %v1447
      %v2478 = vpop.f32.mrb[0].mxu0
      %v2479 = vadd.f32 %v437, %v2478
      %v2480 = vpop.f32.mrb[0].mxu0
      %v2481 = vpop.f32.mrb[0].mxu0
      %v2482 = vadd.f32 %v437, %v2481
      %v2483 = vpop.f32.mrb[0].mxu0
      %2484 = vmatprep.mubr.bf16.mxu0 0
      %2485 = vmatmul.mubr.bf16.gmra.mrb[0].mxu0 %v1450
      %v2486 = vpop.f32.mrb[0].mxu0
      %v2487 = vadd.f32 %v437, %v2486
      %v2488 = vpop.f32.mrb[0].mxu0
      %v2489 = vpop.f32.mrb[0].mxu0
      %v2490 = vadd.f32 %v437, %v2489
      %v2491 = vpop.f32.mrb[0].mxu0
      %2492 = vmatprep.mubr.bf16.mxu0 0
      %2493 = vmatmul.mubr.bf16.gmra.mrb[0].mxu0 %v1453
      %v2494 = vpop.f32.mrb[0].mxu0
      %v2495 = vadd.f32 %v437, %v2494
      %v2496 = vpop.f32.mrb[0].mxu0
      %v2497 = vpop.f32.mrb[0].mxu0
      %v2498 = vadd.f32 %v437, %v2497
      %v2499 = vpop.f32.mrb[0].mxu0
      %2500 = vmatprep.mubr.bf16.mxu0 0
      %2501 = vmatmul.mubr.bf16.gmra.mrb[0].mxu0 %v1456
      %v2502 = vpop.f32.mrb[0].mxu0
      %v2503 = vadd.f32 %v437, %v2502
      %v2504 = vpop.f32.mrb[0].mxu0
      %v2505 = vpop.f32.mrb[0].mxu0
      %v2506 = vadd.f32 %v437, %v2505
      %v2507 = vpop.f32.mrb[0].mxu0
      %2508 = vmatprep.mubr.bf16.mxu0 0
      %2509 = vmatmul.mubr.bf16.gmra.mrb[0].mxu0 %v1459
      %v2510 = vpop.f32.mrb[0].mxu0
      %v2511 = vadd.f32 %v437, %v2510
      %v2512 = vpop.f32.mrb[0].mxu0
      %v2513 = vpop.f32.mrb[0].mxu0
      %v2514 = vadd.f32 %v437, %v2513
      %v2515 = vpop.f32.mrb[0].mxu0
      %2516 = vmatprep.mubr.bf16.mxu0 0
      %2517 = vmatmul.mubr.bf16.gmra.mrb[0].mxu0 %v1462
      %v2518 = vpop.f32.mrb[0].mxu0
      %v2519 = vadd.f32 %v437, %v2518
      %v2520 = vpop.f32.mrb[0].mxu0
      %v2521 = vpop.f32.mrb[0].mxu0
      %v2522 = vadd.f32 %v437, %v2521
      %v2523 = vpop.f32.mrb[0].mxu0
      %2524 = vdwg.mxu0
      %v2525 = vpack.c.bf16 %v1506, %v1503
      %v2526 = vpack.c.bf16 %v1514, %v1511
      %v2527 = vpack.c.bf16 %v1522, %v1519
      %v2528 = vpack.c.bf16 %v1530, %v1527
      %v2529 = vpack.c.bf16 %v1538, %v1535
      %v2530 = vpack.c.bf16 %v1546, %v1543
      %v2531 = vpack.c.bf16 %v1554, %v1551
      %v2532 = vpack.c.bf16 %v1562, %v1559
      %v2533 = vpack.c.bf16 %v1570, %v1567
      %v2534 = vpack.c.bf16 %v1578, %v1575
      %v2535 = vpack.c.bf16 %v1586, %v1583
      %v2536 = vpack.c.bf16 %v1594, %v1591
      %v2537 = vpack.c.bf16 %v1602, %v1599
      %v2538 = vpack.c.bf16 %v1610, %v1607
      %v2539 = vpack.c.bf16 %v1618, %v1615
      %v2540 = vpack.c.bf16 %v1626, %v1623
      %v2541 = vpack.c.bf16 %v1634, %v1631
      %v2542 = vpack.c.bf16 %v1642, %v1639
      %v2543 = vpack.c.bf16 %v1650, %v1647
      %v2544 = vpack.c.bf16 %v1658, %v1655
      %v2545 = vpack.c.bf16 %v1666, %v1663
      %v2546 = vpack.c.bf16 %v1674, %v1671
      %v2547 = vpack.c.bf16 %v1682, %v1679
      %v2548 = vpack.c.bf16 %v1690, %v1687
      %v2549 = vpack.c.bf16 %v1698, %v1695
      %v2550 = vpack.c.bf16 %v1706, %v1703
      %v2551 = vpack.c.bf16 %v1714, %v1711
      %v2552 = vpack.c.bf16 %v1722, %v1719
      %v2553 = vpack.c.bf16 %v1730, %v1727
      %v2554 = vpack.c.bf16 %v1738, %v1735
      %v2555 = vpack.c.bf16 %v1746, %v1743
      %v2556 = vpack.c.bf16 %v1754, %v1751
      %v2557 = vpack.c.bf16 %v1762, %v1759
      %v2558 = vpack.c.bf16 %v1770, %v1767
      %v2559 = vpack.c.bf16 %v1778, %v1775
      %v2560 = vpack.c.bf16 %v1786, %v1783
      %v2561 = vpack.c.bf16 %v1794, %v1791
      %v2562 = vpack.c.bf16 %v1802, %v1799
      %v2563 = vpack.c.bf16 %v1810, %v1807
      %v2564 = vpack.c.bf16 %v1818, %v1815
      %v2565 = vpack.c.bf16 %v1826, %v1823
      %v2566 = vpack.c.bf16 %v1834, %v1831
      %v2567 = vpack.c.bf16 %v1842, %v1839
      %v2568 = vpack.c.bf16 %v1850, %v1847
      %v2569 = vpack.c.bf16 %v1858, %v1855
      %v2570 = vpack.c.bf16 %v1866, %v1863
      %v2571 = vpack.c.bf16 %v1874, %v1871
      %v2572 = vpack.c.bf16 %v1882, %v1879
      %v2573 = vpack.c.bf16 %v1890, %v1887
      %v2574 = vpack.c.bf16 %v1898, %v1895
      %v2575 = vpack.c.bf16 %v1906, %v1903
      %v2576 = vpack.c.bf16 %v1914, %v1911
      %v2577 = vpack.c.bf16 %v1922, %v1919
      %v2578 = vpack.c.bf16 %v1930, %v1927
      %v2579 = vpack.c.bf16 %v1938, %v1935
      %v2580 = vpack.c.bf16 %v1946, %v1943
      %v2581 = vpack.c.bf16 %v1954, %v1951
      %v2582 = vpack.c.bf16 %v1962, %v1959
      %v2583 = vpack.c.bf16 %v1970, %v1967
      %v2584 = vpack.c.bf16 %v1978, %v1975
      %v2585 = vpack.c.bf16 %v1986, %v1983
      %v2586 = vpack.c.bf16 %v1994, %v1991
      %v2587 = vpack.c.bf16 %v2002, %v1999
      %v2588 = vpack.c.bf16 %v2010, %v2007
      %v2589 = vpack.c.bf16 %v2018, %v2015
      %v2590 = vpack.c.bf16 %v2026, %v2023
      %v2591 = vpack.c.bf16 %v2034, %v2031
      %v2592 = vpack.c.bf16 %v2042, %v2039
      %v2593 = vpack.c.bf16 %v2050, %v2047
      %v2594 = vpack.c.bf16 %v2058, %v2055
      %v2595 = vpack.c.bf16 %v2066, %v2063
      %v2596 = vpack.c.bf16 %v2074, %v2071
      %v2597 = vpack.c.bf16 %v2082, %v2079
      %v2598 = vpack.c.bf16 %v2090, %v2087
      %v2599 = vpack.c.bf16 %v2098, %v2095
      %v2600 = vpack.c.bf16 %v2106, %v2103
      %v2601 = vpack.c.bf16 %v2114, %v2111
      %v2602 = vpack.c.bf16 %v2122, %v2119
      %v2603 = vpack.c.bf16 %v2130, %v2127
      %v2604 = vpack.c.bf16 %v2138, %v2135
      %v2605 = vpack.c.bf16 %v2146, %v2143
      %v2606 = vpack.c.bf16 %v2154, %v2151
      %v2607 = vpack.c.bf16 %v2162, %v2159
      %v2608 = vpack.c.bf16 %v2170, %v2167
      %v2609 = vpack.c.bf16 %v2178, %v2175
      %v2610 = vpack.c.bf16 %v2186, %v2183
      %v2611 = vpack.c.bf16 %v2194, %v2191
      %v2612 = vpack.c.bf16 %v2202, %v2199
      %v2613 = vpack.c.bf16 %v2210, %v2207
      %v2614 = vpack.c.bf16 %v2218, %v2215
      %v2615 = vpack.c.bf16 %v2226, %v2223
      %v2616 = vpack.c.bf16 %v2234, %v2231
      %v2617 = vpack.c.bf16 %v2242, %v2239
      %v2618 = vpack.c.bf16 %v2250, %v2247
      %v2619 = vpack.c.bf16 %v2258, %v2255
      %v2620 = vpack.c.bf16 %v2266, %v2263
      %v2621 = vpack.c.bf16 %v2274, %v2271
      %v2622 = vpack.c.bf16 %v2282, %v2279
      %v2623 = vpack.c.bf16 %v2290, %v2287
      %v2624 = vpack.c.bf16 %v2298, %v2295
      %v2625 = vpack.c.bf16 %v2306, %v2303
      %v2626 = vpack.c.bf16 %v2314, %v2311
      %v2627 = vpack.c.bf16 %v2322, %v2319
      %v2628 = vpack.c.bf16 %v2330, %v2327
      %v2629 = vpack.c.bf16 %v2338, %v2335
      %v2630 = vpack.c.bf16 %v2346, %v2343
      %v2631 = vpack.c.bf16 %v2354, %v2351
      %v2632 = vpack.c.bf16 %v2362, %v2359
      %v2633 = vpack.c.bf16 %v2370, %v2367
      %v2634 = vpack.c.bf16 %v2378, %v2375
      %v2635 = vpack.c.bf16 %v2386, %v2383
      %v2636 = vpack.c.bf16 %v2394, %v2391
      %v2637 = vpack.c.bf16 %v2402, %v2399
      %v2638 = vpack.c.bf16 %v2410, %v2407
      %v2639 = vpack.c.bf16 %v2418, %v2415
      %v2640 = vpack.c.bf16 %v2426, %v2423
      %v2641 = vpack.c.bf16 %v2434, %v2431
      %v2642 = vpack.c.bf16 %v2442, %v2439
      %v2643 = vpack.c.bf16 %v2450, %v2447
      %v2644 = vpack.c.bf16 %v2458, %v2455
      %v2645 = vpack.c.bf16 %v2466, %v2463
      %v2646 = vpack.c.bf16 %v2474, %v2471
      %v2647 = vpack.c.bf16 %v2482, %v2479
      %v2648 = vpack.c.bf16 %v2490, %v2487
      %v2649 = vpack.c.bf16 %v2498, %v2495
      %v2650 = vpack.c.bf16 %v2506, %v2503
      %v2651 = vpack.c.bf16 %v2514, %v2511
      %v2652 = vpack.c.bf16 %v2522, %v2519
      %v2781 = vunpack.c.l.b16 %v2525
      %v2782 = vunpack.c.h.b16 %v2525
      %v2783 = vunpack.c.l.b16 %v2526
      %v2784 = vunpack.c.h.b16 %v2526
      %v2785 = vunpack.c.l.b16 %v2527
      %v2786 = vunpack.c.h.b16 %v2527
      %v2787 = vunpack.c.l.b16 %v2528
      %v2788 = vunpack.c.h.b16 %v2528
      %v2789 = vunpack.c.l.b16 %v2529
      %v2790 = vunpack.c.h.b16 %v2529
      %v2791 = vunpack.c.l.b16 %v2530
      %v2792 = vunpack.c.h.b16 %v2530
      %v2793 = vunpack.c.l.b16 %v2531
      %v2794 = vunpack.c.h.b16 %v2531
      %v2795 = vunpack.c.l.b16 %v2532
      %v2796 = vunpack.c.h.b16 %v2532
      %v2797 = vunpack.c.l.b16 %v2533
      %v2798 = vunpack.c.h.b16 %v2533
      %v2799 = vunpack.c.l.b16 %v2534
      %v2800 = vunpack.c.h.b16 %v2534
      %v2801 = vunpack.c.l.b16 %v2535
      %v2802 = vunpack.c.h.b16 %v2535
      %v2803 = vunpack.c.l.b16 %v2536
      %v2804 = vunpack.c.h.b16 %v2536
      %v2805 = vunpack.c.l.b16 %v2537
      %v2806 = vunpack.c.h.b16 %v2537
      %v2807 = vunpack.c.l.b16 %v2538
      %v2808 = vunpack.c.h.b16 %v2538
      %v2809 = vunpack.c.l.b16 %v2539
      %v2810 = vunpack.c.h.b16 %v2539
      %v2811 = vunpack.c.l.b16 %v2540
      %v2812 = vunpack.c.h.b16 %v2540
      %v2813 = vunpack.c.l.b16 %v2541
      %v2814 = vunpack.c.h.b16 %v2541
      %v2815 = vunpack.c.l.b16 %v2542
      %v2816 = vunpack.c.h.b16 %v2542
      %v2817 = vunpack.c.l.b16 %v2543
      %v2818 = vunpack.c.h.b16 %v2543
      %v2819 = vunpack.c.l.b16 %v2544
      %v2820 = vunpack.c.h.b16 %v2544
      %v2821 = vunpack.c.l.b16 %v2545
      %v2822 = vunpack.c.h.b16 %v2545
      %v2823 = vunpack.c.l.b16 %v2546
      %v2824 = vunpack.c.h.b16 %v2546
      %v2825 = vunpack.c.l.b16 %v2547
      %v2826 = vunpack.c.h.b16 %v2547
      %v2827 = vunpack.c.l.b16 %v2548
      %v2828 = vunpack.c.h.b16 %v2548
      %v2829 = vunpack.c.l.b16 %v2549
      %v2830 = vunpack.c.h.b16 %v2549
      %v2831 = vunpack.c.l.b16 %v2550
      %v2832 = vunpack.c.h.b16 %v2550
      %v2833 = vunpack.c.l.b16 %v2551
      %v2834 = vunpack.c.h.b16 %v2551
      %v2835 = vunpack.c.l.b16 %v2552
      %v2836 = vunpack.c.h.b16 %v2552
      %v2837 = vunpack.c.l.b16 %v2553
      %v2838 = vunpack.c.h.b16 %v2553
      %v2839 = vunpack.c.l.b16 %v2554
      %v2840 = vunpack.c.h.b16 %v2554
      %v2841 = vunpack.c.l.b16 %v2555
      %v2842 = vunpack.c.h.b16 %v2555
      %v2843 = vunpack.c.l.b16 %v2556
      %v2844 = vunpack.c.h.b16 %v2556
      %v2845 = vunpack.c.l.b16 %v2557
      %v2846 = vunpack.c.h.b16 %v2557
      %v2847 = vunpack.c.l.b16 %v2558
      %v2848 = vunpack.c.h.b16 %v2558
      %v2849 = vunpack.c.l.b16 %v2559
      %v2850 = vunpack.c.h.b16 %v2559
      %v2851 = vunpack.c.l.b16 %v2560
      %v2852 = vunpack.c.h.b16 %v2560
      %v2853 = vunpack.c.l.b16 %v2561
      %v2854 = vunpack.c.h.b16 %v2561
      %v2855 = vunpack.c.l.b16 %v2562
      %v2856 = vunpack.c.h.b16 %v2562
      %v2857 = vunpack.c.l.b16 %v2563
      %v2858 = vunpack.c.h.b16 %v2563
      %v2859 = vunpack.c.l.b16 %v2564
      %v2860 = vunpack.c.h.b16 %v2564
      %v2861 = vunpack.c.l.b16 %v2565
      %v2862 = vunpack.c.h.b16 %v2565
      %v2863 = vunpack.c.l.b16 %v2566
      %v2864 = vunpack.c.h.b16 %v2566
      %v2865 = vunpack.c.l.b16 %v2567
      %v2866 = vunpack.c.h.b16 %v2567
      %v2867 = vunpack.c.l.b16 %v2568
      %v2868 = vunpack.c.h.b16 %v2568
      %v2869 = vunpack.c.l.b16 %v2569
      %v2870 = vunpack.c.h.b16 %v2569
      %v2871 = vunpack.c.l.b16 %v2570
      %v2872 = vunpack.c.h.b16 %v2570
      %v2873 = vunpack.c.l.b16 %v2571
      %v2874 = vunpack.c.h.b16 %v2571
      %v2875 = vunpack.c.l.b16 %v2572
      %v2876 = vunpack.c.h.b16 %v2572
      %v2877 = vunpack.c.l.b16 %v2573
      %v2878 = vunpack.c.h.b16 %v2573
      %v2879 = vunpack.c.l.b16 %v2574
      %v2880 = vunpack.c.h.b16 %v2574
      %v2881 = vunpack.c.l.b16 %v2575
      %v2882 = vunpack.c.h.b16 %v2575
      %v2883 = vunpack.c.l.b16 %v2576
      %v2884 = vunpack.c.h.b16 %v2576
      %v2885 = vunpack.c.l.b16 %v2577
      %v2886 = vunpack.c.h.b16 %v2577
      %v2887 = vunpack.c.l.b16 %v2578
      %v2888 = vunpack.c.h.b16 %v2578
      %v2889 = vunpack.c.l.b16 %v2579
      %v2890 = vunpack.c.h.b16 %v2579
      %v2891 = vunpack.c.l.b16 %v2580
      %v2892 = vunpack.c.h.b16 %v2580
      %v2893 = vunpack.c.l.b16 %v2581
      %v2894 = vunpack.c.h.b16 %v2581
      %v2895 = vunpack.c.l.b16 %v2582
      %v2896 = vunpack.c.h.b16 %v2582
      %v2897 = vunpack.c.l.b16 %v2583
      %v2898 = vunpack.c.h.b16 %v2583
      %v2899 = vunpack.c.l.b16 %v2584
      %v2900 = vunpack.c.h.b16 %v2584
      %v2901 = vunpack.c.l.b16 %v2585
      %v2902 = vunpack.c.h.b16 %v2585
      %v2903 = vunpack.c.l.b16 %v2586
      %v2904 = vunpack.c.h.b16 %v2586
      %v2905 = vunpack.c.l.b16 %v2587
      %v2906 = vunpack.c.h.b16 %v2587
      %v2907 = vunpack.c.l.b16 %v2588
      %v2908 = vunpack.c.h.b16 %v2588
      %v2909 = vunpack.c.l.b16 %v2589
      %v2910 = vunpack.c.h.b16 %v2589
      %v2911 = vunpack.c.l.b16 %v2590
      %v2912 = vunpack.c.h.b16 %v2590
      %v2913 = vunpack.c.l.b16 %v2591
      %v2914 = vunpack.c.h.b16 %v2591
      %v2915 = vunpack.c.l.b16 %v2592
      %v2916 = vunpack.c.h.b16 %v2592
      %v2917 = vunpack.c.l.b16 %v2593
      %v2918 = vunpack.c.h.b16 %v2593
      %v2919 = vunpack.c.l.b16 %v2594
      %v2920 = vunpack.c.h.b16 %v2594
      %v2921 = vunpack.c.l.b16 %v2595
      %v2922 = vunpack.c.h.b16 %v2595
      %v2923 = vunpack.c.l.b16 %v2596
      %v2924 = vunpack.c.h.b16 %v2596
      %v2925 = vunpack.c.l.b16 %v2597
      %v2926 = vunpack.c.h.b16 %v2597
      %v2927 = vunpack.c.l.b16 %v2598
      %v2928 = vunpack.c.h.b16 %v2598
      %v2929 = vunpack.c.l.b16 %v2599
      %v2930 = vunpack.c.h.b16 %v2599
      %v2931 = vunpack.c.l.b16 %v2600
      %v2932 = vunpack.c.h.b16 %v2600
      %v2933 = vunpack.c.l.b16 %v2601
      %v2934 = vunpack.c.h.b16 %v2601
      %v2935 = vunpack.c.l.b16 %v2602
      %v2936 = vunpack.c.h.b16 %v2602
      %v2937 = vunpack.c.l.b16 %v2603
      %v2938 = vunpack.c.h.b16 %v2603
      %v2939 = vunpack.c.l.b16 %v2604
      %v2940 = vunpack.c.h.b16 %v2604
      %v2941 = vunpack.c.l.b16 %v2605
      %v2942 = vunpack.c.h.b16 %v2605
      %v2943 = vunpack.c.l.b16 %v2606
      %v2944 = vunpack.c.h.b16 %v2606
      %v2945 = vunpack.c.l.b16 %v2607
      %v2946 = vunpack.c.h.b16 %v2607
      %v2947 = vunpack.c.l.b16 %v2608
      %v2948 = vunpack.c.h.b16 %v2608
      %v2949 = vunpack.c.l.b16 %v2609
      %v2950 = vunpack.c.h.b16 %v2609
      %v2951 = vunpack.c.l.b16 %v2610
      %v2952 = vunpack.c.h.b16 %v2610
      %v2953 = vunpack.c.l.b16 %v2611
      %v2954 = vunpack.c.h.b16 %v2611
      %v2955 = vunpack.c.l.b16 %v2612
      %v2956 = vunpack.c.h.b16 %v2612
      %v2957 = vunpack.c.l.b16 %v2613
      %v2958 = vunpack.c.h.b16 %v2613
      %v2959 = vunpack.c.l.b16 %v2614
      %v2960 = vunpack.c.h.b16 %v2614
      %v2961 = vunpack.c.l.b16 %v2615
      %v2962 = vunpack.c.h.b16 %v2615
      %v2963 = vunpack.c.l.b16 %v2616
      %v2964 = vunpack.c.h.b16 %v2616
      %v2965 = vunpack.c.l.b16 %v2617
      %v2966 = vunpack.c.h.b16 %v2617
      %v2967 = vunpack.c.l.b16 %v2618
      %v2968 = vunpack.c.h.b16 %v2618
      %v2969 = vunpack.c.l.b16 %v2619
      %v2970 = vunpack.c.h.b16 %v2619
      %v2971 = vunpack.c.l.b16 %v2620
      %v2972 = vunpack.c.h.b16 %v2620
      %v2973 = vunpack.c.l.b16 %v2621
      %v2974 = vunpack.c.h.b16 %v2621
      %v2975 = vunpack.c.l.b16 %v2622
      %v2976 = vunpack.c.h.b16 %v2622
      %v2977 = vunpack.c.l.b16 %v2623
      %v2978 = vunpack.c.h.b16 %v2623
      %v2979 = vunpack.c.l.b16 %v2624
      %v2980 = vunpack.c.h.b16 %v2624
      %v2981 = vunpack.c.l.b16 %v2625
      %v2982 = vunpack.c.h.b16 %v2625
      %v2983 = vunpack.c.l.b16 %v2626
      %v2984 = vunpack.c.h.b16 %v2626
      %v2985 = vunpack.c.l.b16 %v2627
      %v2986 = vunpack.c.h.b16 %v2627
      %v2987 = vunpack.c.l.b16 %v2628
      %v2988 = vunpack.c.h.b16 %v2628
      %v2989 = vunpack.c.l.b16 %v2629
      %v2990 = vunpack.c.h.b16 %v2629
      %v2991 = vunpack.c.l.b16 %v2630
      %v2992 = vunpack.c.h.b16 %v2630
      %v2993 = vunpack.c.l.b16 %v2631
      %v2994 = vunpack.c.h.b16 %v2631
      %v2995 = vunpack.c.l.b16 %v2632
      %v2996 = vunpack.c.h.b16 %v2632
      %v2997 = vunpack.c.l.b16 %v2633
      %v2998 = vunpack.c.h.b16 %v2633
      %v2999 = vunpack.c.l.b16 %v2634
      %v3000 = vunpack.c.h.b16 %v2634
      %v3001 = vunpack.c.l.b16 %v2635
      %v3002 = vunpack.c.h.b16 %v2635
      %v3003 = vunpack.c.l.b16 %v2636
      %v3004 = vunpack.c.h.b16 %v2636
      %v3005 = vunpack.c.l.b16 %v2637
      %v3006 = vunpack.c.h.b16 %v2637
      %v3007 = vunpack.c.l.b16 %v2638
      %v3008 = vunpack.c.h.b16 %v2638
      %v3009 = vunpack.c.l.b16 %v2639
      %v3010 = vunpack.c.h.b16 %v2639
      %v3011 = vunpack.c.l.b16 %v2640
      %v3012 = vunpack.c.h.b16 %v2640
      %v3013 = vunpack.c.l.b16 %v2641
      %v3014 = vunpack.c.h.b16 %v2641
      %v3015 = vunpack.c.l.b16 %v2642
      %v3016 = vunpack.c.h.b16 %v2642
      %v3017 = vunpack.c.l.b16 %v2643
      %v3018 = vunpack.c.h.b16 %v2643
      %v3019 = vunpack.c.l.b16 %v2644
      %v3020 = vunpack.c.h.b16 %v2644
      %v3021 = vunpack.c.l.b16 %v2645
      %v3022 = vunpack.c.h.b16 %v2645
      %v3023 = vunpack.c.l.b16 %v2646
      %v3024 = vunpack.c.h.b16 %v2646
      %v3025 = vunpack.c.l.b16 %v2647
      %v3026 = vunpack.c.h.b16 %v2647
      %v3027 = vunpack.c.l.b16 %v2648
      %v3028 = vunpack.c.h.b16 %v2648
      %v3029 = vunpack.c.l.b16 %v2649
      %v3030 = vunpack.c.h.b16 %v2649
      %v3031 = vunpack.c.l.b16 %v2650
      %v3032 = vunpack.c.h.b16 %v2650
      %v3033 = vunpack.c.l.b16 %v2651
      %v3034 = vunpack.c.h.b16 %v2651
      %v3035 = vunpack.c.l.b16 %v2652
      %v3036 = vunpack.c.h.b16 %v2652
      %v3037 = vpack.c.b16 %v2781, %v2781
      %v3038 = vpack.c.b16 %v2782, %v2782
      %v3039 = vpack.c.b16 %v2783, %v2783
      %v3040 = vpack.c.b16 %v2784, %v2784
      %v3041 = vpack.c.b16 %v2785, %v2785
      %v3042 = vpack.c.b16 %v2786, %v2786
      %v3043 = vpack.c.b16 %v2787, %v2787
      %v3044 = vpack.c.b16 %v2788, %v2788
      %v3045 = vpack.c.b16 %v2789, %v2789
      %v3046 = vpack.c.b16 %v2790, %v2790
      %v3047 = vpack.c.b16 %v2791, %v2791
      %v3048 = vpack.c.b16 %v2792, %v2792
      %v3049 = vpack.c.b16 %v2793, %v2793
      %v3050 = vpack.c.b16 %v2794, %v2794
      %v3051 = vpack.c.b16 %v2795, %v2795
      %v3052 = vpack.c.b16 %v2796, %v2796
      %v3053 = vpack.c.b16 %v2797, %v2797
      %v3054 = vpack.c.b16 %v2798, %v2798
      %v3055 = vpack.c.b16 %v2799, %v2799
      %v3056 = vpack.c.b16 %v2800, %v2800
      %v3057 = vpack.c.b16 %v2801, %v2801
      %v3058 = vpack.c.b16 %v2802, %v2802
      %v3059 = vpack.c.b16 %v2803, %v2803
      %v3060 = vpack.c.b16 %v2804, %v2804
      %v3061 = vpack.c.b16 %v2805, %v2805
      %v3062 = vpack.c.b16 %v2806, %v2806
      %v3063 = vpack.c.b16 %v2807, %v2807
      %v3064 = vpack.c.b16 %v2808, %v2808
      %v3065 = vpack.c.b16 %v2809, %v2809
      %v3066 = vpack.c.b16 %v2810, %v2810
      %v3067 = vpack.c.b16 %v2811, %v2811
      %v3068 = vpack.c.b16 %v2812, %v2812
      %v3069 = vpack.c.b16 %v2813, %v2813
      %v3070 = vpack.c.b16 %v2814, %v2814
      %v3071 = vpack.c.b16 %v2815, %v2815
      %v3072 = vpack.c.b16 %v2816, %v2816
      %v3073 = vpack.c.b16 %v2817, %v2817
      %v3074 = vpack.c.b16 %v2818, %v2818
      %v3075 = vpack.c.b16 %v2819, %v2819
      %v3076 = vpack.c.b16 %v2820, %v2820
      %v3077 = vpack.c.b16 %v2821, %v2821
      %v3078 = vpack.c.b16 %v2822, %v2822
      %v3079 = vpack.c.b16 %v2823, %v2823
      %v3080 = vpack.c.b16 %v2824, %v2824
      %v3081 = vpack.c.b16 %v2825, %v2825
      %v3082 = vpack.c.b16 %v2826, %v2826
      %v3083 = vpack.c.b16 %v2827, %v2827
      %v3084 = vpack.c.b16 %v2828, %v2828
      %v3085 = vpack.c.b16 %v2829, %v2829
      %v3086 = vpack.c.b16 %v2830, %v2830
      %v3087 = vpack.c.b16 %v2831, %v2831
      %v3088 = vpack.c.b16 %v2832, %v2832
      %v3089 = vpack.c.b16 %v2833, %v2833
      %v3090 = vpack.c.b16 %v2834, %v2834
      %v3091 = vpack.c.b16 %v2835, %v2835
      %v3092 = vpack.c.b16 %v2836, %v2836
      %v3093 = vpack.c.b16 %v2837, %v2837
      %v3094 = vpack.c.b16 %v2838, %v2838
      %v3095 = vpack.c.b16 %v2839, %v2839
      %v3096 = vpack.c.b16 %v2840, %v2840
      %v3097 = vpack.c.b16 %v2841, %v2841
      %v3098 = vpack.c.b16 %v2842, %v2842
      %v3099 = vpack.c.b16 %v2843, %v2843
      %v3100 = vpack.c.b16 %v2844, %v2844
      %v3101 = vpack.c.b16 %v2845, %v2845
      %v3102 = vpack.c.b16 %v2846, %v2846
      %v3103 = vpack.c.b16 %v2847, %v2847
      %v3104 = vpack.c.b16 %v2848, %v2848
      %v3105 = vpack.c.b16 %v2849, %v2849
      %v3106 = vpack.c.b16 %v2850, %v2850
      %v3107 = vpack.c.b16 %v2851, %v2851
      %v3108 = vpack.c.b16 %v2852, %v2852
      %v3109 = vpack.c.b16 %v2853, %v2853
      %v3110 = vpack.c.b16 %v2854, %v2854
      %v3111 = vpack.c.b16 %v2855, %v2855
      %v3112 = vpack.c.b16 %v2856, %v2856
      %v3113 = vpack.c.b16 %v2857, %v2857
      %v3114 = vpack.c.b16 %v2858, %v2858
      %v3115 = vpack.c.b16 %v2859, %v2859
      %v3116 = vpack.c.b16 %v2860, %v2860
      %v3117 = vpack.c.b16 %v2861, %v2861
      %v3118 = vpack.c.b16 %v2862, %v2862
      %v3119 = vpack.c.b16 %v2863, %v2863
      %v3120 = vpack.c.b16 %v2864, %v2864
      %v3121 = vpack.c.b16 %v2865, %v2865
      %v3122 = vpack.c.b16 %v2866, %v2866
      %v3123 = vpack.c.b16 %v2867, %v2867
      %v3124 = vpack.c.b16 %v2868, %v2868
      %v3125 = vpack.c.b16 %v2869, %v2869
      %v3126 = vpack.c.b16 %v2870, %v2870
      %v3127 = vpack.c.b16 %v2871, %v2871
      %v3128 = vpack.c.b16 %v2872, %v2872
      %v3129 = vpack.c.b16 %v2873, %v2873
      %v3130 = vpack.c.b16 %v2874, %v2874
      %v3131 = vpack.c.b16 %v2875, %v2875
      %v3132 = vpack.c.b16 %v2876, %v2876
      %v3133 = vpack.c.b16 %v2877, %v2877
      %v3134 = vpack.c.b16 %v2878, %v2878
      %v3135 = vpack.c.b16 %v2879, %v2879
      %v3136 = vpack.c.b16 %v2880, %v2880
      %v3137 = vpack.c.b16 %v2881, %v2881
      %v3138 = vpack.c.b16 %v2882, %v2882
      %v3139 = vpack.c.b16 %v2883, %v2883
      %v3140 = vpack.c.b16 %v2884, %v2884
      %v3141 = vpack.c.b16 %v2885, %v2885
      %v3142 = vpack.c.b16 %v2886, %v2886
      %v3143 = vpack.c.b16 %v2887, %v2887
      %v3144 = vpack.c.b16 %v2888, %v2888
      %v3145 = vpack.c.b16 %v2889, %v2889
      %v3146 = vpack.c.b16 %v2890, %v2890
      %v3147 = vpack.c.b16 %v2891, %v2891
      %v3148 = vpack.c.b16 %v2892, %v2892
      %v3149 = vpack.c.b16 %v2893, %v2893
      %v3150 = vpack.c.b16 %v2894, %v2894
      %v3151 = vpack.c.b16 %v2895, %v2895
      %v3152 = vpack.c.b16 %v2896, %v2896
      %v3153 = vpack.c.b16 %v2897, %v2897
      %v3154 = vpack.c.b16 %v2898, %v2898
      %v3155 = vpack.c.b16 %v2899, %v2899
      %v3156 = vpack.c.b16 %v2900, %v2900
      %v3157 = vpack.c.b16 %v2901, %v2901
      %v3158 = vpack.c.b16 %v2902, %v2902
      %v3159 = vpack.c.b16 %v2903, %v2903
      %v3160 = vpack.c.b16 %v2904, %v2904
      %v3161 = vpack.c.b16 %v2905, %v2905
      %v3162 = vpack.c.b16 %v2906, %v2906
      %v3163 = vpack.c.b16 %v2907, %v2907
      %v3164 = vpack.c.b16 %v2908, %v2908
      %v3165 = vpack.c.b16 %v2909, %v2909
      %v3166 = vpack.c.b16 %v2910, %v2910
      %v3167 = vpack.c.b16 %v2911, %v2911
      %v3168 = vpack.c.b16 %v2912, %v2912
      %v3169 = vpack.c.b16 %v2913, %v2913
      %v3170 = vpack.c.b16 %v2914, %v2914
      %v3171 = vpack.c.b16 %v2915, %v2915
      %v3172 = vpack.c.b16 %v2916, %v2916
      %v3173 = vpack.c.b16 %v2917, %v2917
      %v3174 = vpack.c.b16 %v2918, %v2918
      %v3175 = vpack.c.b16 %v2919, %v2919
      %v3176 = vpack.c.b16 %v2920, %v2920
      %v3177 = vpack.c.b16 %v2921, %v2921
      %v3178 = vpack.c.b16 %v2922, %v2922
      %v3179 = vpack.c.b16 %v2923, %v2923
      %v3180 = vpack.c.b16 %v2924, %v2924
      %v3181 = vpack.c.b16 %v2925, %v2925
      %v3182 = vpack.c.b16 %v2926, %v2926
      %v3183 = vpack.c.b16 %v2927, %v2927
      %v3184 = vpack.c.b16 %v2928, %v2928
      %v3185 = vpack.c.b16 %v2929, %v2929
      %v3186 = vpack.c.b16 %v2930, %v2930
      %v3187 = vpack.c.b16 %v2931, %v2931
      %v3188 = vpack.c.b16 %v2932, %v2932
      %v3189 = vpack.c.b16 %v2933, %v2933
      %v3190 = vpack.c.b16 %v2934, %v2934
      %v3191 = vpack.c.b16 %v2935, %v2935
      %v3192 = vpack.c.b16 %v2936, %v2936
      %v3193 = vpack.c.b16 %v2937, %v2937
      %v3194 = vpack.c.b16 %v2938, %v2938
      %v3195 = vpack.c.b16 %v2939, %v2939
      %v3196 = vpack.c.b16 %v2940, %v2940
      %v3197 = vpack.c.b16 %v2941, %v2941
      %v3198 = vpack.c.b16 %v2942, %v2942
      %v3199 = vpack.c.b16 %v2943, %v2943
      %v3200 = vpack.c.b16 %v2944, %v2944
      %v3201 = vpack.c.b16 %v2945, %v2945
      %v3202 = vpack.c.b16 %v2946, %v2946
      %v3203 = vpack.c.b16 %v2947, %v2947
      %v3204 = vpack.c.b16 %v2948, %v2948
      %v3205 = vpack.c.b16 %v2949, %v2949
      %v3206 = vpack.c.b16 %v2950, %v2950
      %v3207 = vpack.c.b16 %v2951, %v2951
      %v3208 = vpack.c.b16 %v2952, %v2952
      %v3209 = vpack.c.b16 %v2953, %v2953
      %v3210 = vpack.c.b16 %v2954, %v2954
      %v3211 = vpack.c.b16 %v2955, %v2955
      %v3212 = vpack.c.b16 %v2956, %v2956
      %v3213 = vpack.c.b16 %v2957, %v2957
      %v3214 = vpack.c.b16 %v2958, %v2958
      %v3215 = vpack.c.b16 %v2959, %v2959
      %v3216 = vpack.c.b16 %v2960, %v2960
      %v3217 = vpack.c.b16 %v2961, %v2961
      %v3218 = vpack.c.b16 %v2962, %v2962
      %v3219 = vpack.c.b16 %v2963, %v2963
      %v3220 = vpack.c.b16 %v2964, %v2964
      %v3221 = vpack.c.b16 %v2965, %v2965
      %v3222 = vpack.c.b16 %v2966, %v2966
      %v3223 = vpack.c.b16 %v2967, %v2967
      %v3224 = vpack.c.b16 %v2968, %v2968
      %v3225 = vpack.c.b16 %v2969, %v2969
      %v3226 = vpack.c.b16 %v2970, %v2970
      %v3227 = vpack.c.b16 %v2971, %v2971
      %v3228 = vpack.c.b16 %v2972, %v2972
      %v3229 = vpack.c.b16 %v2973, %v2973
      %v3230 = vpack.c.b16 %v2974, %v2974
      %v3231 = vpack.c.b16 %v2975, %v2975
      %v3232 = vpack.c.b16 %v2976, %v2976
      %v3233 = vpack.c.b16 %v2977, %v2977
      %v3234 = vpack.c.b16 %v2978, %v2978
      %v3235 = vpack.c.b16 %v2979, %v2979
      %v3236 = vpack.c.b16 %v2980, %v2980
      %v3237 = vpack.c.b16 %v2981, %v2981
      %v3238 = vpack.c.b16 %v2982, %v2982
      %v3239 = vpack.c.b16 %v2983, %v2983
      %v3240 = vpack.c.b16 %v2984, %v2984
      %v3241 = vpack.c.b16 %v2985, %v2985
      %v3242 = vpack.c.b16 %v2986, %v2986
      %v3243 = vpack.c.b16 %v2987, %v2987
      %v3244 = vpack.c.b16 %v2988, %v2988
      %v3245 = vpack.c.b16 %v2989, %v2989
      %v3246 = vpack.c.b16 %v2990, %v2990
      %v3247 = vpack.c.b16 %v2991, %v2991
      %v3248 = vpack.c.b16 %v2992, %v2992
      %v3249 = vpack.c.b16 %v2993, %v2993
      %v3250 = vpack.c.b16 %v2994, %v2994
      %v3251 = vpack.c.b16 %v2995, %v2995
      %v3252 = vpack.c.b16 %v2996, %v2996
      %v3253 = vpack.c.b16 %v2997, %v2997
      %v3254 = vpack.c.b16 %v2998, %v2998
      %v3255 = vpack.c.b16 %v2999, %v2999
      %v3256 = vpack.c.b16 %v3000, %v3000
      %v3257 = vpack.c.b16 %v3001, %v3001
      %v3258 = vpack.c.b16 %v3002, %v3002
      %v3259 = vpack.c.b16 %v3003, %v3003
      %v3260 = vpack.c.b16 %v3004, %v3004
      %v3261 = vpack.c.b16 %v3005, %v3005
      %v3262 = vpack.c.b16 %v3006, %v3006
      %v3263 = vpack.c.b16 %v3007, %v3007
      %v3264 = vpack.c.b16 %v3008, %v3008
      %v3265 = vpack.c.b16 %v3009, %v3009
      %v3266 = vpack.c.b16 %v3010, %v3010
      %v3267 = vpack.c.b16 %v3011, %v3011
      %v3268 = vpack.c.b16 %v3012, %v3012
      %v3269 = vpack.c.b16 %v3013, %v3013
      %v3270 = vpack.c.b16 %v3014, %v3014
      %v3271 = vpack.c.b16 %v3015, %v3015
      %v3272 = vpack.c.b16 %v3016, %v3016
      %v3273 = vpack.c.b16 %v3017, %v3017
      %v3274 = vpack.c.b16 %v3018, %v3018
      %v3275 = vpack.c.b16 %v3019, %v3019
      %v3276 = vpack.c.b16 %v3020, %v3020
      %v3277 = vpack.c.b16 %v3021, %v3021
      %v3278 = vpack.c.b16 %v3022, %v3022
      %v3279 = vpack.c.b16 %v3023, %v3023
      %v3280 = vpack.c.b16 %v3024, %v3024
      %v3281 = vpack.c.b16 %v3025, %v3025
      %v3282 = vpack.c.b16 %v3026, %v3026
      %v3283 = vpack.c.b16 %v3027, %v3027
      %v3284 = vpack.c.b16 %v3028, %v3028
      %v3285 = vpack.c.b16 %v3029, %v3029
      %v3286 = vpack.c.b16 %v3030, %v3030
      %v3287 = vpack.c.b16 %v3031, %v3031
      %v3288 = vpack.c.b16 %v3032, %v3032
      %v3289 = vpack.c.b16 %v3033, %v3033
      %v3290 = vpack.c.b16 %v3034, %v3034
      %v3291 = vpack.c.b16 %v3035, %v3035
      %v3292 = vpack.c.b16 %v3036, %v3036
      %vm3549 = vcmask 93184
      %3550 = vst.msk [vmem:[%s172] sm:$0xf] %vm3549, %v3037
      %3551 = vst.msk [vmem:[%s172 + $0x4] sm:$0xf] %vm3549, %v3038
      %3552 = vst.msk [vmem:[%s172 + $0x8] sm:$0xf] %vm3549, %v3039
      %3553 = vst.msk [vmem:[%s172 + $0xc] sm:$0xf] %vm3549, %v3040
      %3554 = vst.msk [vmem:[%s172 + $0x10] sm:$0xf] %vm3549, %v3041
      %3555 = vst.msk [vmem:[%s172 + $0x14] sm:$0xf] %vm3549, %v3042
      %3556 = vst.msk [vmem:[%s172 + $0x18] sm:$0xf] %vm3549, %v3043
      %3557 = vst.msk [vmem:[%s172 + $0x1c] sm:$0xf] %vm3549, %v3044
      %3558 = vst.msk [vmem:[%s172 + $0x20] sm:$0xf] %vm3549, %v3045
      %3559 = vst.msk [vmem:[%s172 + $0x24] sm:$0xf] %vm3549, %v3046
      %3560 = vst.msk [vmem:[%s172 + $0x28] sm:$0xf] %vm3549, %v3047
      %3561 = vst.msk [vmem:[%s172 + $0x2c] sm:$0xf] %vm3549, %v3048
      %3562 = vst.msk [vmem:[%s172 + $0x30] sm:$0xf] %vm3549, %v3049
      %3563 = vst.msk [vmem:[%s172 + $0x34] sm:$0xf] %vm3549, %v3050
      %3564 = vst.msk [vmem:[%s172 + $0x38] sm:$0xf] %vm3549, %v3051
      %3565 = vst.msk [vmem:[%s172 + $0x3c] sm:$0xf] %vm3549, %v3052
      %3566 = vst.msk [vmem:[%s172 + $0x40] sm:$0xf] %vm3549, %v3053
      %3567 = vst.msk [vmem:[%s172 + $0x44] sm:$0xf] %vm3549, %v3054
      %3568 = vst.msk [vmem:[%s172 + $0x48] sm:$0xf] %vm3549, %v3055
      %3569 = vst.msk [vmem:[%s172 + $0x4c] sm:$0xf] %vm3549, %v3056
      %3570 = vst.msk [vmem:[%s172 + $0x50] sm:$0xf] %vm3549, %v3057
      %3571 = vst.msk [vmem:[%s172 + $0x54] sm:$0xf] %vm3549, %v3058
      %3572 = vst.msk [vmem:[%s172 + $0x58] sm:$0xf] %vm3549, %v3059
      %3573 = vst.msk [vmem:[%s172 + $0x5c] sm:$0xf] %vm3549, %v3060
      %3574 = vst.msk [vmem:[%s172 + $0x60] sm:$0xf] %vm3549, %v3061
      %3575 = vst.msk [vmem:[%s172 + $0x64] sm:$0xf] %vm3549, %v3062
      %3576 = vst.msk [vmem:[%s172 + $0x68] sm:$0xf] %vm3549, %v3063
      %3577 = vst.msk [vmem:[%s172 + $0x6c] sm:$0xf] %vm3549, %v3064
      %3578 = vst.msk [vmem:[%s172 + $0x70] sm:$0xf] %vm3549, %v3065
      %3579 = vst.msk [vmem:[%s172 + $0x74] sm:$0xf] %vm3549, %v3066
      %3580 = vst.msk [vmem:[%s172 + $0x78] sm:$0xf] %vm3549, %v3067
      %3581 = vst.msk [vmem:[%s172 + $0x7c] sm:$0xf] %vm3549, %v3068
      %3582 = vst.msk [vmem:[%s172 + $0x80] sm:$0xf] %vm3549, %v3069
      %3583 = vst.msk [vmem:[%s172 + $0x84] sm:$0xf] %vm3549, %v3070
      %3584 = vst.msk [vmem:[%s172 + $0x88] sm:$0xf] %vm3549, %v3071
      %3585 = vst.msk [vmem:[%s172 + $0x8c] sm:$0xf] %vm3549, %v3072
      %3586 = vst.msk [vmem:[%s172 + $0x90] sm:$0xf] %vm3549, %v3073
      %3587 = vst.msk [vmem:[%s172 + $0x94] sm:$0xf] %vm3549, %v3074
      %3588 = vst.msk [vmem:[%s172 + $0x98] sm:$0xf] %vm3549, %v3075
      %3589 = vst.msk [vmem:[%s172 + $0x9c] sm:$0xf] %vm3549, %v3076
      %3590 = vst.msk [vmem:[%s172 + $0xa0] sm:$0xf] %vm3549, %v3077
      %3591 = vst.msk [vmem:[%s172 + $0xa4] sm:$0xf] %vm3549, %v3078
      %3592 = vst.msk [vmem:[%s172 + $0xa8] sm:$0xf] %vm3549, %v3079
      %3593 = vst.msk [vmem:[%s172 + $0xac] sm:$0xf] %vm3549, %v3080
      %3594 = vst.msk [vmem:[%s172 + $0xb0] sm:$0xf] %vm3549, %v3081
      %3595 = vst.msk [vmem:[%s172 + $0xb4] sm:$0xf] %vm3549, %v3082
      %3596 = vst.msk [vmem:[%s172 + $0xb8] sm:$0xf] %vm3549, %v3083
      %3597 = vst.msk [vmem:[%s172 + $0xbc] sm:$0xf] %vm3549, %v3084
      %3598 = vst.msk [vmem:[%s172 + $0xc0] sm:$0xf] %vm3549, %v3085
      %3599 = vst.msk [vmem:[%s172 + $0xc4] sm:$0xf] %vm3549, %v3086
      %3600 = vst.msk [vmem:[%s172 + $0xc8] sm:$0xf] %vm3549, %v3087
      %3601 = vst.msk [vmem:[%s172 + $0xcc] sm:$0xf] %vm3549, %v3088
      %3602 = vst.msk [vmem:[%s172 + $0xd0] sm:$0xf] %vm3549, %v3089
      %3603 = vst.msk [vmem:[%s172 + $0xd4] sm:$0xf] %vm3549, %v3090
      %3604 = vst.msk [vmem:[%s172 + $0xd8] sm:$0xf] %vm3549, %v3091
      %3605 = vst.msk [vmem:[%s172 + $0xdc] sm:$0xf] %vm3549, %v3092
      %3606 = vst.msk [vmem:[%s172 + $0xe0] sm:$0xf] %vm3549, %v3093
      %3607 = vst.msk [vmem:[%s172 + $0xe4] sm:$0xf] %vm3549, %v3094
      %3608 = vst.msk [vmem:[%s172 + $0xe8] sm:$0xf] %vm3549, %v3095
      %3609 = vst.msk [vmem:[%s172 + $0xec] sm:$0xf] %vm3549, %v3096
      %3610 = vst.msk [vmem:[%s172 + $0xf0] sm:$0xf] %vm3549, %v3097
      %3611 = vst.msk [vmem:[%s172 + $0xf4] sm:$0xf] %vm3549, %v3098
      %3612 = vst.msk [vmem:[%s172 + $0xf8] sm:$0xf] %vm3549, %v3099
      %3613 = vst.msk [vmem:[%s172 + $0xfc] sm:$0xf] %vm3549, %v3100
      %3614 = vst.msk [vmem:[%s172 + $0x100] sm:$0xf] %vm3549, %v3101
      %3615 = vst.msk [vmem:[%s172 + $0x104] sm:$0xf] %vm3549, %v3102
      %3616 = vst.msk [vmem:[%s172 + $0x108] sm:$0xf] %vm3549, %v3103
      %3617 = vst.msk [vmem:[%s172 + $0x10c] sm:$0xf] %vm3549, %v3104
      %3618 = vst.msk [vmem:[%s172 + $0x110] sm:$0xf] %vm3549, %v3105
      %3619 = vst.msk [vmem:[%s172 + $0x114] sm:$0xf] %vm3549, %v3106
      %3620 = vst.msk [vmem:[%s172 + $0x118] sm:$0xf] %vm3549, %v3107
      %3621 = vst.msk [vmem:[%s172 + $0x11c] sm:$0xf] %vm3549, %v3108
      %3622 = vst.msk [vmem:[%s172 + $0x120] sm:$0xf] %vm3549, %v3109
      %3623 = vst.msk [vmem:[%s172 + $0x124] sm:$0xf] %vm3549, %v3110
      %3624 = vst.msk [vmem:[%s172 + $0x128] sm:$0xf] %vm3549, %v3111
      %3625 = vst.msk [vmem:[%s172 + $0x12c] sm:$0xf] %vm3549, %v3112
      %3626 = vst.msk [vmem:[%s172 + $0x130] sm:$0xf] %vm3549, %v3113
      %3627 = vst.msk [vmem:[%s172 + $0x134] sm:$0xf] %vm3549, %v3114
      %3628 = vst.msk [vmem:[%s172 + $0x138] sm:$0xf] %vm3549, %v3115
      %3629 = vst.msk [vmem:[%s172 + $0x13c] sm:$0xf] %vm3549, %v3116
      %3630 = vst.msk [vmem:[%s172 + $0x140] sm:$0xf] %vm3549, %v3117
      %3631 = vst.msk [vmem:[%s172 + $0x144] sm:$0xf] %vm3549, %v3118
      %3632 = vst.msk [vmem:[%s172 + $0x148] sm:$0xf] %vm3549, %v3119
      %3633 = vst.msk [vmem:[%s172 + $0x14c] sm:$0xf] %vm3549, %v3120
      %3634 = vst.msk [vmem:[%s172 + $0x150] sm:$0xf] %vm3549, %v3121
      %3635 = vst.msk [vmem:[%s172 + $0x154] sm:$0xf] %vm3549, %v3122
      %3636 = vst.msk [vmem:[%s172 + $0x158] sm:$0xf] %vm3549, %v3123
      %3637 = vst.msk [vmem:[%s172 + $0x15c] sm:$0xf] %vm3549, %v3124
      %3638 = vst.msk [vmem:[%s172 + $0x160] sm:$0xf] %vm3549, %v3125
      %3639 = vst.msk [vmem:[%s172 + $0x164] sm:$0xf] %vm3549, %v3126
      %3640 = vst.msk [vmem:[%s172 + $0x168] sm:$0xf] %vm3549, %v3127
      %3641 = vst.msk [vmem:[%s172 + $0x16c] sm:$0xf] %vm3549, %v3128
      %3642 = vst.msk [vmem:[%s172 + $0x170] sm:$0xf] %vm3549, %v3129
      %3643 = vst.msk [vmem:[%s172 + $0x174] sm:$0xf] %vm3549, %v3130
      %3644 = vst.msk [vmem:[%s172 + $0x178] sm:$0xf] %vm3549, %v3131
      %3645 = vst.msk [vmem:[%s172 + $0x17c] sm:$0xf] %vm3549, %v3132
      %3646 = vst.msk [vmem:[%s172 + $0x180] sm:$0xf] %vm3549, %v3133
      %3647 = vst.msk [vmem:[%s172 + $0x184] sm:$0xf] %vm3549, %v3134
      %3648 = vst.msk [vmem:[%s172 + $0x188] sm:$0xf] %vm3549, %v3135
      %3649 = vst.msk [vmem:[%s172 + $0x18c] sm:$0xf] %vm3549, %v3136
      %3650 = vst.msk [vmem:[%s172 + $0x190] sm:$0xf] %vm3549, %v3137
      %3651 = vst.msk [vmem:[%s172 + $0x194] sm:$0xf] %vm3549, %v3138
      %3652 = vst.msk [vmem:[%s172 + $0x198] sm:$0xf] %vm3549, %v3139
      %3653 = vst.msk [vmem:[%s172 + $0x19c] sm:$0xf] %vm3549, %v3140
      %3654 = vst.msk [vmem:[%s172 + $0x1a0] sm:$0xf] %vm3549, %v3141
      %3655 = vst.msk [vmem:[%s172 + $0x1a4] sm:$0xf] %vm3549, %v3142
      %3656 = vst.msk [vmem:[%s172 + $0x1a8] sm:$0xf] %vm3549, %v3143
      %3657 = vst.msk [vmem:[%s172 + $0x1ac] sm:$0xf] %vm3549, %v3144
      %3658 = vst.msk [vmem:[%s172 + $0x1b0] sm:$0xf] %vm3549, %v3145
      %3659 = vst.msk [vmem:[%s172 + $0x1b4] sm:$0xf] %vm3549, %v3146
      %3660 = vst.msk [vmem:[%s172 + $0x1b8] sm:$0xf] %vm3549, %v3147
      %3661 = vst.msk [vmem:[%s172 + $0x1bc] sm:$0xf] %vm3549, %v3148
      %3662 = vst.msk [vmem:[%s172 + $0x1c0] sm:$0xf] %vm3549, %v3149
      %3663 = vst.msk [vmem:[%s172 + $0x1c4] sm:$0xf] %vm3549, %v3150
      %3664 = vst.msk [vmem:[%s172 + $0x1c8] sm:$0xf] %vm3549, %v3151
      %3665 = vst.msk [vmem:[%s172 + $0x1cc] sm:$0xf] %vm3549, %v3152
      %3666 = vst.msk [vmem:[%s172 + $0x1d0] sm:$0xf] %vm3549, %v3153
      %3667 = vst.msk [vmem:[%s172 + $0x1d4] sm:$0xf] %vm3549, %v3154
      %3668 = vst.msk [vmem:[%s172 + $0x1d8] sm:$0xf] %vm3549, %v3155
      %3669 = vst.msk [vmem:[%s172 + $0x1dc] sm:$0xf] %vm3549, %v3156
      %3670 = vst.msk [vmem:[%s172 + $0x1e0] sm:$0xf] %vm3549, %v3157
      %3671 = vst.msk [vmem:[%s172 + $0x1e4] sm:$0xf] %vm3549, %v3158
      %3672 = vst.msk [vmem:[%s172 + $0x1e8] sm:$0xf] %vm3549, %v3159
      %3673 = vst.msk [vmem:[%s172 + $0x1ec] sm:$0xf] %vm3549, %v3160
      %3674 = vst.msk [vmem:[%s172 + $0x1f0] sm:$0xf] %vm3549, %v3161
      %3675 = vst.msk [vmem:[%s172 + $0x1f4] sm:$0xf] %vm3549, %v3162
      %3676 = vst.msk [vmem:[%s172 + $0x1f8] sm:$0xf] %vm3549, %v3163
      %3677 = vst.msk [vmem:[%s172 + $0x1fc] sm:$0xf] %vm3549, %v3164
      %3678 = vst.msk [vmem:[%s172 + $0x200] sm:$0xf] %vm3549, %v3165
      %3679 = vst.msk [vmem:[%s172 + $0x204] sm:$0xf] %vm3549, %v3166
      %3680 = vst.msk [vmem:[%s172 + $0x208] sm:$0xf] %vm3549, %v3167
      %3681 = vst.msk [vmem:[%s172 + $0x20c] sm:$0xf] %vm3549, %v3168
      %3682 = vst.msk [vmem:[%s172 + $0x210] sm:$0xf] %vm3549, %v3169
      %3683 = vst.msk [vmem:[%s172 + $0x214] sm:$0xf] %vm3549, %v3170
      %3684 = vst.msk [vmem:[%s172 + $0x218] sm:$0xf] %vm3549, %v3171
      %3685 = vst.msk [vmem:[%s172 + $0x21c] sm:$0xf] %vm3549, %v3172
      %3686 = vst.msk [vmem:[%s172 + $0x220] sm:$0xf] %vm3549, %v3173
      %3687 = vst.msk [vmem:[%s172 + $0x224] sm:$0xf] %vm3549, %v3174
      %3688 = vst.msk [vmem:[%s172 + $0x228] sm:$0xf] %vm3549, %v3175
      %3689 = vst.msk [vmem:[%s172 + $0x22c] sm:$0xf] %vm3549, %v3176
      %3690 = vst.msk [vmem:[%s172 + $0x230] sm:$0xf] %vm3549, %v3177
      %3691 = vst.msk [vmem:[%s172 + $0x234] sm:$0xf] %vm3549, %v3178
      %3692 = vst.msk [vmem:[%s172 + $0x238] sm:$0xf] %vm3549, %v3179
      %3693 = vst.msk [vmem:[%s172 + $0x23c] sm:$0xf] %vm3549, %v3180
      %3694 = vst.msk [vmem:[%s172 + $0x240] sm:$0xf] %vm3549, %v3181
      %3695 = vst.msk [vmem:[%s172 + $0x244] sm:$0xf] %vm3549, %v3182
      %3696 = vst.msk [vmem:[%s172 + $0x248] sm:$0xf] %vm3549, %v3183
      %3697 = vst.msk [vmem:[%s172 + $0x24c] sm:$0xf] %vm3549, %v3184
      %3698 = vst.msk [vmem:[%s172 + $0x250] sm:$0xf] %vm3549, %v3185
      %3699 = vst.msk [vmem:[%s172 + $0x254] sm:$0xf] %vm3549, %v3186
      %3700 = vst.msk [vmem:[%s172 + $0x258] sm:$0xf] %vm3549, %v3187
      %3701 = vst.msk [vmem:[%s172 + $0x25c] sm:$0xf] %vm3549, %v3188
      %3702 = vst.msk [vmem:[%s172 + $0x260] sm:$0xf] %vm3549, %v3189
      %3703 = vst.msk [vmem:[%s172 + $0x264] sm:$0xf] %vm3549, %v3190
      %3704 = vst.msk [vmem:[%s172 + $0x268] sm:$0xf] %vm3549, %v3191
      %3705 = vst.msk [vmem:[%s172 + $0x26c] sm:$0xf] %vm3549, %v3192
      %3706 = vst.msk [vmem:[%s172 + $0x270] sm:$0xf] %vm3549, %v3193
      %3707 = vst.msk [vmem:[%s172 + $0x274] sm:$0xf] %vm3549, %v3194
      %3708 = vst.msk [vmem:[%s172 + $0x278] sm:$0xf] %vm3549, %v3195
      %3709 = vst.msk [vmem:[%s172 + $0x27c] sm:$0xf] %vm3549, %v3196
      %3710 = vst.msk [vmem:[%s172 + $0x280] sm:$0xf] %vm3549, %v3197
      %3711 = vst.msk [vmem:[%s172 + $0x284] sm:$0xf] %vm3549, %v3198
      %3712 = vst.msk [vmem:[%s172 + $0x288] sm:$0xf] %vm3549, %v3199
      %3713 = vst.msk [vmem:[%s172 + $0x28c] sm:$0xf] %vm3549, %v3200
      %3714 = vst.msk [vmem:[%s172 + $0x290] sm:$0xf] %vm3549, %v3201
      %3715 = vst.msk [vmem:[%s172 + $0x294] sm:$0xf] %vm3549, %v3202
      %3716 = vst.msk [vmem:[%s172 + $0x298] sm:$0xf] %vm3549, %v3203
      %3717 = vst.msk [vmem:[%s172 + $0x29c] sm:$0xf] %vm3549, %v3204
      %3718 = vst.msk [vmem:[%s172 + $0x2a0] sm:$0xf] %vm3549, %v3205
      %3719 = vst.msk [vmem:[%s172 + $0x2a4] sm:$0xf] %vm3549, %v3206
      %3720 = vst.msk [vmem:[%s172 + $0x2a8] sm:$0xf] %vm3549, %v3207
      %3721 = vst.msk [vmem:[%s172 + $0x2ac] sm:$0xf] %vm3549, %v3208
      %3722 = vst.msk [vmem:[%s172 + $0x2b0] sm:$0xf] %vm3549, %v3209
      %3723 = vst.msk [vmem:[%s172 + $0x2b4] sm:$0xf] %vm3549, %v3210
      %3724 = vst.msk [vmem:[%s172 + $0x2b8] sm:$0xf] %vm3549, %v3211
      %3725 = vst.msk [vmem:[%s172 + $0x2bc] sm:$0xf] %vm3549, %v3212
      %3726 = vst.msk [vmem:[%s172 + $0x2c0] sm:$0xf] %vm3549, %v3213
      %3727 = vst.msk [vmem:[%s172 + $0x2c4] sm:$0xf] %vm3549, %v3214
      %3728 = vst.msk [vmem:[%s172 + $0x2c8] sm:$0xf] %vm3549, %v3215
      %3729 = vst.msk [vmem:[%s172 + $0x2cc] sm:$0xf] %vm3549, %v3216
      %3730 = vst.msk [vmem:[%s172 + $0x2d0] sm:$0xf] %vm3549, %v3217
      %3731 = vst.msk [vmem:[%s172 + $0x2d4] sm:$0xf] %vm3549, %v3218
      %3732 = vst.msk [vmem:[%s172 + $0x2d8] sm:$0xf] %vm3549, %v3219
      %3733 = vst.msk [vmem:[%s172 + $0x2dc] sm:$0xf] %vm3549, %v3220
      %3734 = vst.msk [vmem:[%s172 + $0x2e0] sm:$0xf] %vm3549, %v3221
      %3735 = vst.msk [vmem:[%s172 + $0x2e4] sm:$0xf] %vm3549, %v3222
      %3736 = vst.msk [vmem:[%s172 + $0x2e8] sm:$0xf] %vm3549, %v3223
      %3737 = vst.msk [vmem:[%s172 + $0x2ec] sm:$0xf] %vm3549, %v3224
      %3738 = vst.msk [vmem:[%s172 + $0x2f0] sm:$0xf] %vm3549, %v3225
      %3739 = vst.msk [vmem:[%s172 + $0x2f4] sm:$0xf] %vm3549, %v3226
      %3740 = vst.msk [vmem:[%s172 + $0x2f8] sm:$0xf] %vm3549, %v3227
      %3741 = vst.msk [vmem:[%s172 + $0x2fc] sm:$0xf] %vm3549, %v3228
      %3742 = vst.msk [vmem:[%s172 + $0x300] sm:$0xf] %vm3549, %v3229
      %3743 = vst.msk [vmem:[%s172 + $0x304] sm:$0xf] %vm3549, %v3230
      %3744 = vst.msk [vmem:[%s172 + $0x308] sm:$0xf] %vm3549, %v3231
      %3745 = vst.msk [vmem:[%s172 + $0x30c] sm:$0xf] %vm3549, %v3232
      %3746 = vst.msk [vmem:[%s172 + $0x310] sm:$0xf] %vm3549, %v3233
      %3747 = vst.msk [vmem:[%s172 + $0x314] sm:$0xf] %vm3549, %v3234
      %3748 = vst.msk [vmem:[%s172 + $0x318] sm:$0xf] %vm3549, %v3235
      %3749 = vst.msk [vmem:[%s172 + $0x31c] sm:$0xf] %vm3549, %v3236
      %3750 = vst.msk [vmem:[%s172 + $0x320] sm:$0xf] %vm3549, %v3237
      %3751 = vst.msk [vmem:[%s172 + $0x324] sm:$0xf] %vm3549, %v3238
      %3752 = vst.msk [vmem:[%s172 + $0x328] sm:$0xf] %vm3549, %v3239
      %3753 = vst.msk [vmem:[%s172 + $0x32c] sm:$0xf] %vm3549, %v3240
      %3754 = vst.msk [vmem:[%s172 + $0x330] sm:$0xf] %vm3549, %v3241
      %3755 = vst.msk [vmem:[%s172 + $0x334] sm:$0xf] %vm3549, %v3242
      %3756 = vst.msk [vmem:[%s172 + $0x338] sm:$0xf] %vm3549, %v3243
      %3757 = vst.msk [vmem:[%s172 + $0x33c] sm:$0xf] %vm3549, %v3244
      %3758 = vst.msk [vmem:[%s172 + $0x340] sm:$0xf] %vm3549, %v3245
      %3759 = vst.msk [vmem:[%s172 + $0x344] sm:$0xf] %vm3549, %v3246
      %3760 = vst.msk [vmem:[%s172 + $0x348] sm:$0xf] %vm3549, %v3247
      %3761 = vst.msk [vmem:[%s172 + $0x34c] sm:$0xf] %vm3549, %v3248
      %3762 = vst.msk [vmem:[%s172 + $0x350] sm:$0xf] %vm3549, %v3249
      %3763 = vst.msk [vmem:[%s172 + $0x354] sm:$0xf] %vm3549, %v3250
      %3764 = vst.msk [vmem:[%s172 + $0x358] sm:$0xf] %vm3549, %v3251
      %3765 = vst.msk [vmem:[%s172 + $0x35c] sm:$0xf] %vm3549, %v3252
      %3766 = vst.msk [vmem:[%s172 + $0x360] sm:$0xf] %vm3549, %v3253
      %3767 = vst.msk [vmem:[%s172 + $0x364] sm:$0xf] %vm3549, %v3254
      %3768 = vst.msk [vmem:[%s172 + $0x368] sm:$0xf] %vm3549, %v3255
      %3769 = vst.msk [vmem:[%s172 + $0x36c] sm:$0xf] %vm3549, %v3256
      %3770 = vst.msk [vmem:[%s172 + $0x370] sm:$0xf] %vm3549, %v3257
      %3771 = vst.msk [vmem:[%s172 + $0x374] sm:$0xf] %vm3549, %v3258
      %3772 = vst.msk [vmem:[%s172 + $0x378] sm:$0xf] %vm3549, %v3259
      %3773 = vst.msk [vmem:[%s172 + $0x37c] sm:$0xf] %vm3549, %v3260
      %3774 = vst.msk [vmem:[%s172 + $0x380] sm:$0xf] %vm3549, %v3261
      %3775 = vst.msk [vmem:[%s172 + $0x384] sm:$0xf] %vm3549, %v3262
      %3776 = vst.msk [vmem:[%s172 + $0x388] sm:$0xf] %vm3549, %v3263
      %3777 = vst.msk [vmem:[%s172 + $0x38c] sm:$0xf] %vm3549, %v3264
      %3778 = vst.msk [vmem:[%s172 + $0x390] sm:$0xf] %vm3549, %v3265
      %3779 = vst.msk [vmem:[%s172 + $0x394] sm:$0xf] %vm3549, %v3266
      %3780 = vst.msk [vmem:[%s172 + $0x398] sm:$0xf] %vm3549, %v3267
      %3781 = vst.msk [vmem:[%s172 + $0x39c] sm:$0xf] %vm3549, %v3268
      %3782 = vst.msk [vmem:[%s172 + $0x3a0] sm:$0xf] %vm3549, %v3269
      %3783 = vst.msk [vmem:[%s172 + $0x3a4] sm:$0xf] %vm3549, %v3270
      %3784 = vst.msk [vmem:[%s172 + $0x3a8] sm:$0xf] %vm3549, %v3271
      %3785 = vst.msk [vmem:[%s172 + $0x3ac] sm:$0xf] %vm3549, %v3272
      %3786 = vst.msk [vmem:[%s172 + $0x3b0] sm:$0xf] %vm3549, %v3273
      %3787 = vst.msk [vmem:[%s172 + $0x3b4] sm:$0xf] %vm3549, %v3274
      %3788 = vst.msk [vmem:[%s172 + $0x3b8] sm:$0xf] %vm3549, %v3275
      %3789 = vst.msk [vmem:[%s172 + $0x3bc] sm:$0xf] %vm3549, %v3276
      %3790 = vst.msk [vmem:[%s172 + $0x3c0] sm:$0xf] %vm3549, %v3277
      %3791 = vst.msk [vmem:[%s172 + $0x3c4] sm:$0xf] %vm3549, %v3278
      %3792 = vst.msk [vmem:[%s172 + $0x3c8] sm:$0xf] %vm3549, %v3279
      %3793 = vst.msk [vmem:[%s172 + $0x3cc] sm:$0xf] %vm3549, %v3280
      %3794 = vst.msk [vmem:[%s172 + $0x3d0] sm:$0xf] %vm3549, %v3281
      %3795 = vst.msk [vmem:[%s172 + $0x3d4] sm:$0xf] %vm3549, %v3282
      %3796 = vst.msk [vmem:[%s172 + $0x3d8] sm:$0xf] %vm3549, %v3283
      %3797 = vst.msk [vmem:[%s172 + $0x3dc] sm:$0xf] %vm3549, %v3284
      %3798 = vst.msk [vmem:[%s172 + $0x3e0] sm:$0xf] %vm3549, %v3285
      %3799 = vst.msk [vmem:[%s172 + $0x3e4] sm:$0xf] %vm3549, %v3286
      %3800 = vst.msk [vmem:[%s172 + $0x3e8] sm:$0xf] %vm3549, %v3287
      %3801 = vst.msk [vmem:[%s172 + $0x3ec] sm:$0xf] %vm3549, %v3288
      %3802 = vst.msk [vmem:[%s172 + $0x3f0] sm:$0xf] %vm3549, %v3289
      %3803 = vst.msk [vmem:[%s172 + $0x3f4] sm:$0xf] %vm3549, %v3290
      %3804 = vst.msk [vmem:[%s172 + $0x3f8] sm:$0xf] %vm3549, %v3291
      %3805 = vst.msk [vmem:[%s172 + $0x3fc] sm:$0xf] %vm3549, %v3292
      %s3806 = smul.u32 256, %s14
      %p3807 = scmp.lt.s32.totalorder %s3806, 511
      %s3808 = scalar_select %p3807, %s3806, 511
      %s3809 = smul.addr %s3808, 4
      %s3810 = scalar_lea.vmem %s3, %s3809
      // Predicated region
      $region33: #{tpu_custom_call.1} parent=31 // pred_check
        %p3811 = pneg %p100
      $region34: #{tpu_custom_call.1} parent=31 // pred_check_branch
        %3813 = sbr.rel (%p3811) target = $region36
      $region35: #{tpu_custom_call.1} parent=31 // pred_region
        %s3814 = smul.u32 256, %s14
      $region36: #{tpu_custom_call.1} parent=31 // pred_fallthru
        _
    $region32: #{tpu_custom_call.1} parent=5 // pred_fallthru
      _
    %p3815 = scmp.le.s32.totalorder 2, %s9
    // Predicated region
    $region37: #{tpu_custom_call.1} parent=5 // pred_check
      %p3816 = pneg %p3815
    $region38: #{tpu_custom_call.1} parent=5 // pred_check_branch
      %3818 = sbr.rel (%p3816) target = $region40
    $region39: #{tpu_custom_call.1} parent=5 // pred_region
      %s3819 = ssub.s32 %s9, 2
      // Predicated region
      $region41: #{tpu_custom_call.1} parent=39 // pred_check
        %p3820 = pneg %p106
      $region42: #{tpu_custom_call.1} parent=39 // pred_check_branch
        %3822 = sbr.rel (%p3820) target = $region44
      $region43: #{tpu_custom_call.1} parent=39 // pred_region
        %s3823 = smul.u32 256, %s15
        %p3824 = scmp.lt.s32.totalorder %s3823, 511
        %s3825 = scalar_select %p3824, %s3823, 511
        %s3826 = smul.addr %s3825, 4
        %s3827 = scalar_lea.vmem %s3, %s3826
      $region44: #{tpu_custom_call.1} parent=39 // pred_fallthru
        _
    $region40: #{tpu_custom_call.1} parent=5 // pred_fallthru
      _
  $region6: #{tpu_custom_call.1} parent=0 // loop_footer
    %s13 = sadd.s32 1, %s9
  $region7: #{tpu_custom_call.1} parent=0 // loop_footer_branch
    %8 = sbr.rel target = $region3
  $region8: #{tpu_custom_call.1} parent=0 // loop_exit
    _

</llo_original>
